<compile_context>
chip_gen: v7x
topology: tpu7x:2x2x1
jax: 0.10.0
libtpu: 0.0.40
codegen_flags: <defaults>
</compile_context>

<pallas_src>
import math

import jax
import jax.numpy as jnp
import numpy as np
from jax import lax
from jax.experimental import pallas as pl
from jax.experimental.pallas import tpu as pltpu

# ----------------------------- problem sizes --------------------------------
E_DIM = 48                     # encoder_dim
D_DIM = 32                     # decoder_dim == attention_dim (attention_dim=None)
S_LEN = 8                      # encoder rows (encoder_x is (S, E))
T_LEN = 8                      # decoder rows (decoder_x is (T, D))
N_BLOCKS = 4                   # Blocks per WiderBlock
N_WIDER = 2                    # WiderBlocks in the model
CAT_DIM = N_BLOCKS * D_DIM     # 128 -- width fed to the `narrow` Linear
VOCAB = 128                    # synthetic lm_head width (lane-dense)
LN_EPS = 1e-5
SCALE = 1.0 / math.sqrt(D_DIM)  # torch divides QK^T by sqrt(decoder_dim)


# ------------------------------ Pallas kernel --------------------------------
def wider_deeper_kernel(enc_ref, dec_ref, wqlm_ref, wkt_ref, wv_ref,
                        big_ref, aux_ref, out_ref):
    """Whole forward pass in one invocation (no grid, no scratch).

    enc_ref : (S, E)            encoder activations
    dec_ref : (T, D)            decoder activations
    wqlm_ref: (3, 32, 128)      [wq_wb0 * SCALE | wq_wb1 * SCALE | lm_head.T]
    wkt_ref : (256, 48)         transposed K weights of all 8 Blocks (rows = out features)
    wv_ref  : (48, 256)         V weights of all 8 Blocks (lane-concatenated)
    big_ref : (7, 128, 128)     [avg, FF1_wb0, FF2_wb0, narrow_wb0, FF1_wb1, FF2_wb1, narrow_wb1]
                                (FF* block-diagonal, narrow zero-padded to 128 out lanes,
                                 avg = block-diag 1/32 group-averaging matrix for fused LN)
    aux_ref : (2, 8, 128)       per WiderBlock rows: [g1,b1,g2,b2,bff1,bff2,bn(pad),0]
    out_ref : (T, VOCAB)
    """
    enc = enc_ref[...]                    # (S, 48)
    avg = big_ref[0]                      # (128, 128) group-averaging matrix

    # All K^T projections (both WiderBlocks, all 4 Blocks): single transposed contraction.
    #   kT_all[wb*128 + b*32 + a, s] = K_{wb,b}[s, a]
    kT_all = lax.dot_general(wkt_ref[...], enc, (((1,), (1,)), ((), ())),
                             preferred_element_type=jnp.float32)          # (256, S)
    # All V projections: (S, 48) @ (48, 256).
    v_all = jnp.dot(enc, wv_ref[...], preferred_element_type=jnp.float32)  # (S, 256)

    def group_ln(x, g, b):
        # Per-32-lane-group LayerNorm over the (T, 128) concat, reductions done on the MXU
        # via the block-diagonal averaging matrix (exact two-pass mean/var).
        mu = jnp.dot(x, avg, preferred_element_type=jnp.float32)
        xc = x - mu
        var = jnp.dot(xc * xc, avg, preferred_element_type=jnp.float32)
        return xc / jnp.sqrt(var + LN_EPS) * g + b

    x_dec = dec_ref[...]                  # (T, 32)
    for wb in range(N_WIDER):
        aux = aux_ref[wb]                 # (8, 128)
        g1, b1 = aux[0:1], aux[1:2]
        g2, b2 = aux[2:3], aux[3:4]
        bff1, bff2 = aux[4:5], aux[5:6]
        bn = aux[6:7, 0:D_DIM]            # (1, 32)

        # Lane-tile the decoder activations once; reused for both skip connections.
        dec_wide = jnp.concatenate([x_dec, x_dec, x_dec, x_dec], axis=-1)  # (T, 128)

        # Fused Q projection of the 4 parallel Blocks (scale pre-folded): (T,32)@(32,128).
        q_cat = jnp.dot(x_dec, wqlm_ref[wb], preferred_element_type=jnp.float32)

        # ---- per-Block attention (tiny (8,8) score math), results kept in registers ----
        parts = []
        for b in range(N_BLOCKS):
            lo, hi = b * D_DIM, (b + 1) * D_DIM
            qb = q_cat[:, lo:hi]                                   # (T, 32)
            kTb = kT_all[wb * CAT_DIM + lo: wb * CAT_DIM + hi, :]  # (32, S)
            vb = v_all[:, wb * CAT_DIM + lo: wb * CAT_DIM + hi]    # (S, 32)
            s = jnp.dot(qb, kTb, preferred_element_type=jnp.float32)   # (T, S)
            m = jnp.max(s, axis=-1, keepdims=True)
            p = jnp.exp(s - m)
            p = p / jnp.sum(p, axis=-1, keepdims=True)             # exact softmax
            parts.append(jnp.dot(p, vb, preferred_element_type=jnp.float32))  # (T, 32)
        ctx_cat = jnp.concatenate(parts, axis=-1)                  # (T, 128)

        # ---- attention skip + fused grouped LN1 ----
        x1 = group_ln(ctx_cat + dec_wide, g1, b1)

        # ---- fused FFN of all 4 Blocks: two block-diagonal (128,128) matmuls ----
        h = jnp.maximum(
            jnp.dot(x1, big_ref[1 + 3 * wb], preferred_element_type=jnp.float32) + bff1,
            0.0)
        y = jnp.dot(h, big_ref[2 + 3 * wb], preferred_element_type=jnp.float32) + bff2

        # ---- FF skip + fused grouped LN2 + final skip ----
        x2 = group_ln(y + x1, g2, b2)
        out_cat = x2 + dec_wide                                    # (T, 128)

        # ---- narrow: (T,128) @ (128,128 zero-padded), keep first 32 lanes ----
        x_dec = jnp.dot(out_cat, big_ref[3 + 3 * wb],
                        preferred_element_type=jnp.float32)[:, :D_DIM] + bn

    # ---- lm_head (bias-free), 128-lane-dense output store ----
    out_ref[...] = jnp.dot(x_dec, wqlm_ref[2],
                           preferred_element_type=jnp.float32).astype(out_ref.dtype)


# ------------------------- parameter initialization --------------------------
def init_params(key):
    ks = iter(jax.random.split(key, 128))

    def rnd(shape, scale):
        return jax.random.normal(next(ks), shape, jnp.float32) * scale

    P = {'wider': []}
    for _ in range(N_WIDER):
        blocks = []
        for _ in range(N_BLOCKS):
            blocks.append(dict(
                WQ=rnd((D_DIM, D_DIM), 0.25),      # torch: (d_dim, attention_dim), used as x @ WQ
                WK=rnd((E_DIM, D_DIM), 0.25),
                WV=rnd((E_DIM, D_DIM), 0.25),
                g1=1.0 + rnd((D_DIM,), 0.05), b1=rnd((D_DIM,), 0.05),
                Wf1=rnd((D_DIM, D_DIM), 0.15), bf1=rnd((D_DIM,), 0.05),   # nn.Linear (out, in)
                Wf2=rnd((D_DIM, D_DIM), 0.15), bf2=rnd((D_DIM,), 0.05),
                g2=1.0 + rnd((D_DIM,), 0.05), b2=rnd((D_DIM,), 0.05)))
        P['wider'].append(dict(
            blocks=blocks,
            Wn=rnd((D_DIM, CAT_DIM), 0.1),          # nn.Linear(128, 32) weight (out, in)
            bn=rnd((D_DIM,), 0.05)))
    P['Wlm'] = rnd((VOCAB, D_DIM), 0.1)             # lm_head weight (out, in), bias-free
    return P


def pack_params(P):
    """Torch-shaped params -> 5 pre-fused, kernel-friendly slabs (7 total operands)."""
    # Q weights (scale folded) + lm_head, stacked: (3, 32, 128)
    wq_lm = jnp.stack(
        [jnp.concatenate([blk['WQ'] for blk in wbp['blocks']], axis=1) * SCALE
         for wbp in P['wider']] + [P['Wlm'].T], axis=0)

    # Transposed K weights of all 8 Blocks: (256, 48)
    wkt = jnp.concatenate(
        [blk['WK'].T for wbp in P['wider'] for blk in wbp['blocks']], axis=0)

    # V weights of all 8 Blocks, lane-concatenated: (48, 256)
    wv = jnp.concatenate(
        [blk['WV'] for wbp in P['wider'] for blk in wbp['blocks']], axis=1)

    # Block-diagonal 1/32 averaging matrix for the fused grouped LayerNorm.
    grp = jnp.arange(CAT_DIM) // D_DIM
    avg = (grp[:, None] == grp[None, :]).astype(jnp.float32) / D_DIM       # (128, 128)

    # [avg, FF1_0, FF2_0, narrow_0, FF1_1, FF2_1, narrow_1]: (7, 128, 128)
    mats = [avg]
    for wbp in P['wider']:
        mats.append(jax.scipy.linalg.block_diag(*[blk['Wf1'].T for blk in wbp['blocks']]))
        mats.append(jax.scipy.linalg.block_diag(*[blk['Wf2'].T for blk in wbp['blocks']]))
        nar = jnp.zeros((CAT_DIM, CAT_DIM), jnp.float32).at[:, :D_DIM].set(wbp['Wn'].T)
        mats.append(nar)
    big = jnp.stack(mats, axis=0)

    # Lane-concatenated LN gains/biases + FF biases + narrow bias: (2, 8, 128)
    auxs = []
    for wbp in P['wider']:
        g1 = jnp.concatenate([blk['g1'] for blk in wbp['blocks']])
        b1 = jnp.concatenate([blk['b1'] for blk in wbp['blocks']])
        g2 = jnp.concatenate([blk['g2'] for blk in wbp['blocks']])
        b2 = jnp.concatenate([blk['b2'] for blk in wbp['blocks']])
        bf1 = jnp.concatenate([blk['bf1'] for blk in wbp['blocks']])
        bf2 = jnp.concatenate([blk['bf2'] for blk in wbp['blocks']])
        bn = jnp.zeros((CAT_DIM,), jnp.float32).at[:D_DIM].set(wbp['bn'])
        auxs.append(jnp.stack(
            [g1, b1, g2, b2, bf1, bf2, bn, jnp.zeros((CAT_DIM,), jnp.float32)], axis=0))
    aux = jnp.stack(auxs, axis=0)

    return (wq_lm, wkt, wv, big, aux)


# ------------------------------- wrapper --------------------------------------
@jax.jit
def forward_pallas(encoder_x, decoder_x, packed):
    wq_lm, wkt, wv, big, aux = packed
    vmem = pltpu.MemorySpace.VMEM
    return pl.pallas_call(
        wider_deeper_kernel,
        out_shape=jax.ShapeDtypeStruct((T_LEN, VOCAB), jnp.float32),
        in_specs=[pl.BlockSpec(memory_space=vmem) for _ in range(7)],
        out_specs=pl.BlockSpec(memory_space=vmem),
    )(encoder_x, decoder_x, wq_lm, wkt, wv, big, aux)


# --------------------------- pure-JAX reference --------------------------------
_HI = jax.lax.Precision.HIGHEST


def _ref_ln(x, g, b):
    mu = x.mean(-1, keepdims=True)
    var = ((x - mu) ** 2).mean(-1, keepdims=True)
    return (x - mu) / jnp.sqrt(var + LN_EPS) * g + b


def _ref_block(enc, dec, p):
    Q = jnp.dot(dec, p['WQ'], precision=_HI)
    K = jnp.dot(enc, p['WK'], precision=_HI)
    V = jnp.dot(enc, p['WV'], precision=_HI)
    scores = jnp.dot(Q, K.T, precision=_HI) / math.sqrt(D_DIM)
    probs = jax.nn.softmax(scores, axis=1)
    attn = jnp.dot(probs, V, precision=_HI)
    x = _ref_ln(attn + dec, p['g1'], p['b1'])
    h = jnp.maximum(jnp.dot(x, p['Wf1'].T, precision=_HI) + p['bf1'], 0.0)
    y = jnp.dot(h, p['Wf2'].T, precision=_HI) + p['bf2']
    x2 = _ref_ln(y + x, p['g2'], p['b2'])
    return x2 + dec


def _ref_wider(enc, dec, wbp):
    outs = [_ref_block(enc, dec, blk) for blk in wbp['blocks']]
    cat = jnp.concatenate(outs, axis=1)
    return jnp.dot(cat, wbp['Wn'].T, precision=_HI) + wbp['bn']


def ref_forward(enc, dec, P):
    o1 = _ref_wider(enc, dec, P['wider'][0])
    o2 = _ref_wider(enc, o1, P['wider'][1])
    return jnp.dot(o2, P['Wlm'].T, precision=_HI)


# --------------------------------- main ----------------------------------------
if __name__ == "__main__":
    key = jax.random.PRNGKey(0)
    k_enc, k_dec, k_par = jax.random.split(key, 3)

    encoder_x = jax.random.normal(k_enc, (S_LEN, E_DIM), jnp.float32)
    decoder_x = jax.random.normal(k_dec, (T_LEN, D_DIM), jnp.float32)

    P = init_params(k_par)
    packed = pack_params(P)

    out = jax.block_until_ready(forward_pallas(encoder_x, decoder_x, packed))
    ref = jax.block_until_ready(ref_forward(encoder_x, decoder_x, P))

    # 5e-3 tolerance: kernel uses TPU multi-pass f32 MXU matmuls, reference uses XLA
    # Precision.HIGHEST; typical deviation is well below 1e-3 now that the softmax uses
    # exact normalization (no approx reciprocal).
    np.testing.assert_allclose(np.asarray(out), np.asarray(ref), rtol=5e-3, atol=5e-3)
    assert out.shape == (T_LEN, VOCAB)
    print("KERNEL_OK")
</pallas_src>

<mosaic_0001>
module attributes {stable_mosaic.version = 11 : i64} {
  func.func @wider_deeper_kernel(%arg0: memref<8x48xf32, #tpu.memory_space<vmem>>, %arg1: memref<8x32xf32, #tpu.memory_space<vmem>>, %arg2: memref<3x32x128xf32, #tpu.memory_space<vmem>>, %arg3: memref<256x48xf32, #tpu.memory_space<vmem>>, %arg4: memref<48x256xf32, #tpu.memory_space<vmem>>, %arg5: memref<7x128x128xf32, #tpu.memory_space<vmem>>, %arg6: memref<2x8x128xf32, #tpu.memory_space<vmem>>, %arg7: memref<8x128xf32, #tpu.memory_space<vmem>>) attributes {dimension_semantics = [], scalar_prefetch = 0 : i64, scratch_operands = 0 : i64, tpu.core_type = #tpu.core_type<tc>} {
    %c0 = arith.constant 0 : index
    %c0_0 = arith.constant 0 : index
    %0 = vector.load %arg0[%c0, %c0_0] : memref<8x48xf32, #tpu.memory_space<vmem>>, vector<8x48xf32>
    %c0_1 = arith.constant 0 : index
    %c0_2 = arith.constant 0 : index
    %c0_3 = arith.constant 0 : index
    %1 = vector.load %arg5[%c0_1, %c0_2, %c0_3] : memref<7x128x128xf32, #tpu.memory_space<vmem>>, vector<1x128x128xf32>
    %2 = vector.shape_cast %1 : vector<1x128x128xf32> to vector<128x128xf32>
    %c0_4 = arith.constant 0 : index
    %c0_5 = arith.constant 0 : index
    %3 = vector.load %arg3[%c0_4, %c0_5] : memref<256x48xf32, #tpu.memory_space<vmem>>, vector<256x48xf32>
    %cst = arith.constant dense<0.000000e+00> : vector<256x8xf32>
    %4 = tpu.matmul %3, %0, %cst {dimension_numbers = #tpu.dot_dimension_numbers<[1], [1], [0], [0], [0, 0, 1, 0], [], []>} : vector<256x48xf32>, vector<8x48xf32>, vector<256x8xf32> -> vector<256x8xf32>
    %c0_6 = arith.constant 0 : index
    %c0_7 = arith.constant 0 : index
    %5 = vector.load %arg4[%c0_6, %c0_7] : memref<48x256xf32, #tpu.memory_space<vmem>>, vector<48x256xf32>
    %cst_8 = arith.constant dense<0.000000e+00> : vector<8x256xf32>
    %6 = tpu.matmul %0, %5, %cst_8 {dimension_numbers = #tpu.dot_dimension_numbers<[1], [0], [0], [1], [0, 0, 1, 1], [], []>} : vector<8x48xf32>, vector<48x256xf32>, vector<8x256xf32> -> vector<8x256xf32>
    %c0_9 = arith.constant 0 : index
    %c0_10 = arith.constant 0 : index
    %7 = vector.load %arg1[%c0_9, %c0_10] : memref<8x32xf32, #tpu.memory_space<vmem>>, vector<8x32xf32>
    %c0_11 = arith.constant 0 : index
    %c0_12 = arith.constant 0 : index
    %c0_13 = arith.constant 0 : index
    %8 = vector.load %arg6[%c0_11, %c0_12, %c0_13] : memref<2x8x128xf32, #tpu.memory_space<vmem>>, vector<1x8x128xf32>
    %9 = vector.shape_cast %8 : vector<1x8x128xf32> to vector<8x128xf32>
    %10 = vector.extract_strided_slice %9 {offsets = [0, 0], sizes = [1, 128], strides = [1, 1]} : vector<8x128xf32> to vector<1x128xf32>
    %11 = vector.extract_strided_slice %9 {offsets = [1, 0], sizes = [1, 128], strides = [1, 1]} : vector<8x128xf32> to vector<1x128xf32>
    %12 = vector.extract_strided_slice %9 {offsets = [2, 0], sizes = [1, 128], strides = [1, 1]} : vector<8x128xf32> to vector<1x128xf32>
    %13 = vector.extract_strided_slice %9 {offsets = [3, 0], sizes = [1, 128], strides = [1, 1]} : vector<8x128xf32> to vector<1x128xf32>
    %14 = vector.extract_strided_slice %9 {offsets = [4, 0], sizes = [1, 128], strides = [1, 1]} : vector<8x128xf32> to vector<1x128xf32>
    %15 = vector.extract_strided_slice %9 {offsets = [5, 0], sizes = [1, 128], strides = [1, 1]} : vector<8x128xf32> to vector<1x128xf32>
    %16 = vector.extract_strided_slice %9 {offsets = [6, 0], sizes = [1, 32], strides = [1, 1]} : vector<8x128xf32> to vector<1x32xf32>
    %17 = tpu.concatenate %7, %7, %7, %7 in 1 : vector<8x32xf32>, vector<8x32xf32>, vector<8x32xf32>, vector<8x32xf32> -> vector<8x128xf32>
    %c0_14 = arith.constant 0 : index
    %c0_15 = arith.constant 0 : index
    %c0_16 = arith.constant 0 : index
    %18 = vector.load %arg2[%c0_14, %c0_15, %c0_16] : memref<3x32x128xf32, #tpu.memory_space<vmem>>, vector<1x32x128xf32>
    %19 = vector.shape_cast %18 : vector<1x32x128xf32> to vector<32x128xf32>
    %cst_17 = arith.constant dense<0.000000e+00> : vector<8x128xf32>
    %20 = tpu.matmul %7, %19, %cst_17 {dimension_numbers = #tpu.dot_dimension_numbers<[1], [0], [0], [1], [0, 0, 1, 1], [], []>} : vector<8x32xf32>, vector<32x128xf32>, vector<8x128xf32> -> vector<8x128xf32>
    %21 = vector.extract_strided_slice %20 {offsets = [0, 0], sizes = [8, 32], strides = [1, 1]} : vector<8x128xf32> to vector<8x32xf32>
    %22 = vector.extract_strided_slice %4 {offsets = [0, 0], sizes = [32, 8], strides = [1, 1]} : vector<256x8xf32> to vector<32x8xf32>
    %23 = vector.extract_strided_slice %6 {offsets = [0, 0], sizes = [8, 32], strides = [1, 1]} : vector<8x256xf32> to vector<8x32xf32>
    %cst_18 = arith.constant dense<0.000000e+00> : vector<8x8xf32>
    %24 = tpu.matmul %21, %22, %cst_18 {dimension_numbers = #tpu.dot_dimension_numbers<[1], [0], [0], [1], [0, 0, 1, 1], [], []>} : vector<8x32xf32>, vector<32x8xf32>, vector<8x8xf32> -> vector<8x8xf32>
    %cst_19 = arith.constant dense<0xFF800000> : vector<8xf32>
    %25 = vector.multi_reduction <maximumf>, %24, %cst_19 [1] : vector<8x8xf32> to vector<8xf32>
    %26 = vector.shape_cast %25 : vector<8xf32> to vector<8x1xf32>
    %27 = vector.broadcast %26 : vector<8x1xf32> to vector<8x8xf32>
    %28 = arith.subf %24, %27 : vector<8x8xf32>
    %29 = math.exp %28 : vector<8x8xf32>
    %cst_20 = arith.constant dense<0.000000e+00> : vector<8xf32>
    %30 = vector.multi_reduction <add>, %29, %cst_20 [1] : vector<8x8xf32> to vector<8xf32>
    %31 = vector.shape_cast %30 : vector<8xf32> to vector<8x1xf32>
    %32 = vector.broadcast %31 : vector<8x1xf32> to vector<8x8xf32>
    %33 = arith.divf %29, %32 : vector<8x8xf32>
    %cst_21 = arith.constant dense<0.000000e+00> : vector<8x32xf32>
    %34 = tpu.matmul %33, %23, %cst_21 {dimension_numbers = #tpu.dot_dimension_numbers<[1], [0], [0], [1], [0, 0, 1, 1], [], []>} : vector<8x8xf32>, vector<8x32xf32>, vector<8x32xf32> -> vector<8x32xf32>
    %35 = vector.extract_strided_slice %20 {offsets = [0, 32], sizes = [8, 32], strides = [1, 1]} : vector<8x128xf32> to vector<8x32xf32>
    %36 = vector.extract_strided_slice %4 {offsets = [32, 0], sizes = [32, 8], strides = [1, 1]} : vector<256x8xf32> to vector<32x8xf32>
    %37 = vector.extract_strided_slice %6 {offsets = [0, 32], sizes = [8, 32], strides = [1, 1]} : vector<8x256xf32> to vector<8x32xf32>
    %cst_22 = arith.constant dense<0.000000e+00> : vector<8x8xf32>
    %38 = tpu.matmul %35, %36, %cst_22 {dimension_numbers = #tpu.dot_dimension_numbers<[1], [0], [0], [1], [0, 0, 1, 1], [], []>} : vector<8x32xf32>, vector<32x8xf32>, vector<8x8xf32> -> vector<8x8xf32>
    %cst_23 = arith.constant dense<0xFF800000> : vector<8xf32>
    %39 = vector.multi_reduction <maximumf>, %38, %cst_23 [1] : vector<8x8xf32> to vector<8xf32>
    %40 = vector.shape_cast %39 : vector<8xf32> to vector<8x1xf32>
    %41 = vector.broadcast %40 : vector<8x1xf32> to vector<8x8xf32>
    %42 = arith.subf %38, %41 : vector<8x8xf32>
    %43 = math.exp %42 : vector<8x8xf32>
    %cst_24 = arith.constant dense<0.000000e+00> : vector<8xf32>
    %44 = vector.multi_reduction <add>, %43, %cst_24 [1] : vector<8x8xf32> to vector<8xf32>
    %45 = vector.shape_cast %44 : vector<8xf32> to vector<8x1xf32>
    %46 = vector.broadcast %45 : vector<8x1xf32> to vector<8x8xf32>
    %47 = arith.divf %43, %46 : vector<8x8xf32>
    %cst_25 = arith.constant dense<0.000000e+00> : vector<8x32xf32>
    %48 = tpu.matmul %47, %37, %cst_25 {dimension_numbers = #tpu.dot_dimension_numbers<[1], [0], [0], [1], [0, 0, 1, 1], [], []>} : vector<8x8xf32>, vector<8x32xf32>, vector<8x32xf32> -> vector<8x32xf32>
    %49 = vector.extract_strided_slice %20 {offsets = [0, 64], sizes = [8, 32], strides = [1, 1]} : vector<8x128xf32> to vector<8x32xf32>
    %50 = vector.extract_strided_slice %4 {offsets = [64, 0], sizes = [32, 8], strides = [1, 1]} : vector<256x8xf32> to vector<32x8xf32>
    %51 = vector.extract_strided_slice %6 {offsets = [0, 64], sizes = [8, 32], strides = [1, 1]} : vector<8x256xf32> to vector<8x32xf32>
    %cst_26 = arith.constant dense<0.000000e+00> : vector<8x8xf32>
    %52 = tpu.matmul %49, %50, %cst_26 {dimension_numbers = #tpu.dot_dimension_numbers<[1], [0], [0], [1], [0, 0, 1, 1], [], []>} : vector<8x32xf32>, vector<32x8xf32>, vector<8x8xf32> -> vector<8x8xf32>
    %cst_27 = arith.constant dense<0xFF800000> : vector<8xf32>
    %53 = vector.multi_reduction <maximumf>, %52, %cst_27 [1] : vector<8x8xf32> to vector<8xf32>
    %54 = vector.shape_cast %53 : vector<8xf32> to vector<8x1xf32>
    %55 = vector.broadcast %54 : vector<8x1xf32> to vector<8x8xf32>
    %56 = arith.subf %52, %55 : vector<8x8xf32>
    %57 = math.exp %56 : vector<8x8xf32>
    %cst_28 = arith.constant dense<0.000000e+00> : vector<8xf32>
    %58 = vector.multi_reduction <add>, %57, %cst_28 [1] : vector<8x8xf32> to vector<8xf32>
    %59 = vector.shape_cast %58 : vector<8xf32> to vector<8x1xf32>
    %60 = vector.broadcast %59 : vector<8x1xf32> to vector<8x8xf32>
    %61 = arith.divf %57, %60 : vector<8x8xf32>
    %cst_29 = arith.constant dense<0.000000e+00> : vector<8x32xf32>
    %62 = tpu.matmul %61, %51, %cst_29 {dimension_numbers = #tpu.dot_dimension_numbers<[1], [0], [0], [1], [0, 0, 1, 1], [], []>} : vector<8x8xf32>, vector<8x32xf32>, vector<8x32xf32> -> vector<8x32xf32>
    %63 = vector.extract_strided_slice %20 {offsets = [0, 96], sizes = [8, 32], strides = [1, 1]} : vector<8x128xf32> to vector<8x32xf32>
    %64 = vector.extract_strided_slice %4 {offsets = [96, 0], sizes = [32, 8], strides = [1, 1]} : vector<256x8xf32> to vector<32x8xf32>
    %65 = vector.extract_strided_slice %6 {offsets = [0, 96], sizes = [8, 32], strides = [1, 1]} : vector<8x256xf32> to vector<8x32xf32>
    %cst_30 = arith.constant dense<0.000000e+00> : vector<8x8xf32>
    %66 = tpu.matmul %63, %64, %cst_30 {dimension_numbers = #tpu.dot_dimension_numbers<[1], [0], [0], [1], [0, 0, 1, 1], [], []>} : vector<8x32xf32>, vector<32x8xf32>, vector<8x8xf32> -> vector<8x8xf32>
    %cst_31 = arith.constant dense<0xFF800000> : vector<8xf32>
    %67 = vector.multi_reduction <maximumf>, %66, %cst_31 [1] : vector<8x8xf32> to vector<8xf32>
    %68 = vector.shape_cast %67 : vector<8xf32> to vector<8x1xf32>
    %69 = vector.broadcast %68 : vector<8x1xf32> to vector<8x8xf32>
    %70 = arith.subf %66, %69 : vector<8x8xf32>
    %71 = math.exp %70 : vector<8x8xf32>
    %cst_32 = arith.constant dense<0.000000e+00> : vector<8xf32>
    %72 = vector.multi_reduction <add>, %71, %cst_32 [1] : vector<8x8xf32> to vector<8xf32>
    %73 = vector.shape_cast %72 : vector<8xf32> to vector<8x1xf32>
    %74 = vector.broadcast %73 : vector<8x1xf32> to vector<8x8xf32>
    %75 = arith.divf %71, %74 : vector<8x8xf32>
    %cst_33 = arith.constant dense<0.000000e+00> : vector<8x32xf32>
    %76 = tpu.matmul %75, %65, %cst_33 {dimension_numbers = #tpu.dot_dimension_numbers<[1], [0], [0], [1], [0, 0, 1, 1], [], []>} : vector<8x8xf32>, vector<8x32xf32>, vector<8x32xf32> -> vector<8x32xf32>
    %77 = tpu.concatenate %34, %48, %62, %76 in 1 : vector<8x32xf32>, vector<8x32xf32>, vector<8x32xf32>, vector<8x32xf32> -> vector<8x128xf32>
    %78 = arith.addf %77, %17 : vector<8x128xf32>
    %cst_34 = arith.constant dense<0.000000e+00> : vector<8x128xf32>
    %79 = tpu.matmul %78, %2, %cst_34 {dimension_numbers = #tpu.dot_dimension_numbers<[1], [0], [0], [1], [0, 0, 1, 1], [], []>} : vector<8x128xf32>, vector<128x128xf32>, vector<8x128xf32> -> vector<8x128xf32>
    %80 = arith.subf %78, %79 : vector<8x128xf32>
    %81 = arith.mulf %80, %80 : vector<8x128xf32>
    %cst_35 = arith.constant dense<0.000000e+00> : vector<8x128xf32>
    %82 = tpu.matmul %81, %2, %cst_35 {dimension_numbers = #tpu.dot_dimension_numbers<[1], [0], [0], [1], [0, 0, 1, 1], [], []>} : vector<8x128xf32>, vector<128x128xf32>, vector<8x128xf32> -> vector<8x128xf32>
    %cst_36 = arith.constant 9.99999974E-6 : f32
    %83 = vector.broadcast %cst_36 : f32 to vector<8x128xf32>
    %84 = arith.addf %82, %83 : vector<8x128xf32>
    %85 = math.sqrt %84 : vector<8x128xf32>
    %86 = arith.divf %80, %85 : vector<8x128xf32>
    %87 = vector.broadcast %10 : vector<1x128xf32> to vector<8x128xf32>
    %88 = arith.mulf %86, %87 : vector<8x128xf32>
    %89 = vector.broadcast %11 : vector<1x128xf32> to vector<8x128xf32>
    %90 = arith.addf %88, %89 : vector<8x128xf32>
    %c1 = arith.constant 1 : index
    %c0_37 = arith.constant 0 : index
    %c0_38 = arith.constant 0 : index
    %91 = vector.load %arg5[%c1, %c0_37, %c0_38] : memref<7x128x128xf32, #tpu.memory_space<vmem>>, vector<1x128x128xf32>
    %92 = vector.shape_cast %91 : vector<1x128x128xf32> to vector<128x128xf32>
    %cst_39 = arith.constant dense<0.000000e+00> : vector<8x128xf32>
    %93 = tpu.matmul %90, %92, %cst_39 {dimension_numbers = #tpu.dot_dimension_numbers<[1], [0], [0], [1], [0, 0, 1, 1], [], []>} : vector<8x128xf32>, vector<128x128xf32>, vector<8x128xf32> -> vector<8x128xf32>
    %94 = vector.broadcast %14 : vector<1x128xf32> to vector<8x128xf32>
    %95 = arith.addf %93, %94 : vector<8x128xf32>
    %cst_40 = arith.constant 0.000000e+00 : f32
    %96 = vector.broadcast %cst_40 : f32 to vector<8x128xf32>
    %97 = arith.maximumf %95, %96 : vector<8x128xf32>
    %c2 = arith.constant 2 : index
    %c0_41 = arith.constant 0 : index
    %c0_42 = arith.constant 0 : index
    %98 = vector.load %arg5[%c2, %c0_41, %c0_42] : memref<7x128x128xf32, #tpu.memory_space<vmem>>, vector<1x128x128xf32>
    %99 = vector.shape_cast %98 : vector<1x128x128xf32> to vector<128x128xf32>
    %cst_43 = arith.constant dense<0.000000e+00> : vector<8x128xf32>
    %100 = tpu.matmul %97, %99, %cst_43 {dimension_numbers = #tpu.dot_dimension_numbers<[1], [0], [0], [1], [0, 0, 1, 1], [], []>} : vector<8x128xf32>, vector<128x128xf32>, vector<8x128xf32> -> vector<8x128xf32>
    %101 = vector.broadcast %15 : vector<1x128xf32> to vector<8x128xf32>
    %102 = arith.addf %100, %101 : vector<8x128xf32>
    %103 = arith.addf %102, %90 : vector<8x128xf32>
    %cst_44 = arith.constant dense<0.000000e+00> : vector<8x128xf32>
    %104 = tpu.matmul %103, %2, %cst_44 {dimension_numbers = #tpu.dot_dimension_numbers<[1], [0], [0], [1], [0, 0, 1, 1], [], []>} : vector<8x128xf32>, vector<128x128xf32>, vector<8x128xf32> -> vector<8x128xf32>
    %105 = arith.subf %103, %104 : vector<8x128xf32>
    %106 = arith.mulf %105, %105 : vector<8x128xf32>
    %cst_45 = arith.constant dense<0.000000e+00> : vector<8x128xf32>
    %107 = tpu.matmul %106, %2, %cst_45 {dimension_numbers = #tpu.dot_dimension_numbers<[1], [0], [0], [1], [0, 0, 1, 1], [], []>} : vector<8x128xf32>, vector<128x128xf32>, vector<8x128xf32> -> vector<8x128xf32>
    %cst_46 = arith.constant 9.99999974E-6 : f32
    %108 = vector.broadcast %cst_46 : f32 to vector<8x128xf32>
    %109 = arith.addf %107, %108 : vector<8x128xf32>
    %110 = math.sqrt %109 : vector<8x128xf32>
    %111 = arith.divf %105, %110 : vector<8x128xf32>
    %112 = vector.broadcast %12 : vector<1x128xf32> to vector<8x128xf32>
    %113 = arith.mulf %111, %112 : vector<8x128xf32>
    %114 = vector.broadcast %13 : vector<1x128xf32> to vector<8x128xf32>
    %115 = arith.addf %113, %114 : vector<8x128xf32>
    %116 = arith.addf %115, %17 : vector<8x128xf32>
    %c3 = arith.constant 3 : index
    %c0_47 = arith.constant 0 : index
    %c0_48 = arith.constant 0 : index
    %117 = vector.load %arg5[%c3, %c0_47, %c0_48] : memref<7x128x128xf32, #tpu.memory_space<vmem>>, vector<1x128x128xf32>
    %118 = vector.shape_cast %117 : vector<1x128x128xf32> to vector<128x128xf32>
    %cst_49 = arith.constant dense<0.000000e+00> : vector<8x128xf32>
    %119 = tpu.matmul %116, %118, %cst_49 {dimension_numbers = #tpu.dot_dimension_numbers<[1], [0], [0], [1], [0, 0, 1, 1], [], []>} : vector<8x128xf32>, vector<128x128xf32>, vector<8x128xf32> -> vector<8x128xf32>
    %120 = vector.extract_strided_slice %119 {offsets = [0, 0], sizes = [8, 32], strides = [1, 1]} : vector<8x128xf32> to vector<8x32xf32>
    %121 = vector.broadcast %16 : vector<1x32xf32> to vector<8x32xf32>
    %122 = arith.addf %120, %121 : vector<8x32xf32>
    %c1_50 = arith.constant 1 : index
    %c0_51 = arith.constant 0 : index
    %c0_52 = arith.constant 0 : index
    %123 = vector.load %arg6[%c1_50, %c0_51, %c0_52] : memref<2x8x128xf32, #tpu.memory_space<vmem>>, vector<1x8x128xf32>
    %124 = vector.shape_cast %123 : vector<1x8x128xf32> to vector<8x128xf32>
    %125 = vector.extract_strided_slice %124 {offsets = [0, 0], sizes = [1, 128], strides = [1, 1]} : vector<8x128xf32> to vector<1x128xf32>
    %126 = vector.extract_strided_slice %124 {offsets = [1, 0], sizes = [1, 128], strides = [1, 1]} : vector<8x128xf32> to vector<1x128xf32>
    %127 = vector.extract_strided_slice %124 {offsets = [2, 0], sizes = [1, 128], strides = [1, 1]} : vector<8x128xf32> to vector<1x128xf32>
    %128 = vector.extract_strided_slice %124 {offsets = [3, 0], sizes = [1, 128], strides = [1, 1]} : vector<8x128xf32> to vector<1x128xf32>
    %129 = vector.extract_strided_slice %124 {offsets = [4, 0], sizes = [1, 128], strides = [1, 1]} : vector<8x128xf32> to vector<1x128xf32>
    %130 = vector.extract_strided_slice %124 {offsets = [5, 0], sizes = [1, 128], strides = [1, 1]} : vector<8x128xf32> to vector<1x128xf32>
    %131 = vector.extract_strided_slice %124 {offsets = [6, 0], sizes = [1, 32], strides = [1, 1]} : vector<8x128xf32> to vector<1x32xf32>
    %132 = tpu.concatenate %122, %122, %122, %122 in 1 : vector<8x32xf32>, vector<8x32xf32>, vector<8x32xf32>, vector<8x32xf32> -> vector<8x128xf32>
    %c1_53 = arith.constant 1 : index
    %c0_54 = arith.constant 0 : index
    %c0_55 = arith.constant 0 : index
    %133 = vector.load %arg2[%c1_53, %c0_54, %c0_55] : memref<3x32x128xf32, #tpu.memory_space<vmem>>, vector<1x32x128xf32>
    %134 = vector.shape_cast %133 : vector<1x32x128xf32> to vector<32x128xf32>
    %cst_56 = arith.constant dense<0.000000e+00> : vector<8x128xf32>
    %135 = tpu.matmul %122, %134, %cst_56 {dimension_numbers = #tpu.dot_dimension_numbers<[1], [0], [0], [1], [0, 0, 1, 1], [], []>} : vector<8x32xf32>, vector<32x128xf32>, vector<8x128xf32> -> vector<8x128xf32>
    %136 = vector.extract_strided_slice %135 {offsets = [0, 0], sizes = [8, 32], strides = [1, 1]} : vector<8x128xf32> to vector<8x32xf32>
    %137 = vector.extract_strided_slice %4 {offsets = [128, 0], sizes = [32, 8], strides = [1, 1]} : vector<256x8xf32> to vector<32x8xf32>
    %138 = vector.extract_strided_slice %6 {offsets = [0, 128], sizes = [8, 32], strides = [1, 1]} : vector<8x256xf32> to vector<8x32xf32>
    %cst_57 = arith.constant dense<0.000000e+00> : vector<8x8xf32>
    %139 = tpu.matmul %136, %137, %cst_57 {dimension_numbers = #tpu.dot_dimension_numbers<[1], [0], [0], [1], [0, 0, 1, 1], [], []>} : vector<8x32xf32>, vector<32x8xf32>, vector<8x8xf32> -> vector<8x8xf32>
    %cst_58 = arith.constant dense<0xFF800000> : vector<8xf32>
    %140 = vector.multi_reduction <maximumf>, %139, %cst_58 [1] : vector<8x8xf32> to vector<8xf32>
    %141 = vector.shape_cast %140 : vector<8xf32> to vector<8x1xf32>
    %142 = vector.broadcast %141 : vector<8x1xf32> to vector<8x8xf32>
    %143 = arith.subf %139, %142 : vector<8x8xf32>
    %144 = math.exp %143 : vector<8x8xf32>
    %cst_59 = arith.constant dense<0.000000e+00> : vector<8xf32>
    %145 = vector.multi_reduction <add>, %144, %cst_59 [1] : vector<8x8xf32> to vector<8xf32>
    %146 = vector.shape_cast %145 : vector<8xf32> to vector<8x1xf32>
    %147 = vector.broadcast %146 : vector<8x1xf32> to vector<8x8xf32>
    %148 = arith.divf %144, %147 : vector<8x8xf32>
    %cst_60 = arith.constant dense<0.000000e+00> : vector<8x32xf32>
    %149 = tpu.matmul %148, %138, %cst_60 {dimension_numbers = #tpu.dot_dimension_numbers<[1], [0], [0], [1], [0, 0, 1, 1], [], []>} : vector<8x8xf32>, vector<8x32xf32>, vector<8x32xf32> -> vector<8x32xf32>
    %150 = vector.extract_strided_slice %135 {offsets = [0, 32], sizes = [8, 32], strides = [1, 1]} : vector<8x128xf32> to vector<8x32xf32>
    %151 = vector.extract_strided_slice %4 {offsets = [160, 0], sizes = [32, 8], strides = [1, 1]} : vector<256x8xf32> to vector<32x8xf32>
    %152 = vector.extract_strided_slice %6 {offsets = [0, 160], sizes = [8, 32], strides = [1, 1]} : vector<8x256xf32> to vector<8x32xf32>
    %cst_61 = arith.constant dense<0.000000e+00> : vector<8x8xf32>
    %153 = tpu.matmul %150, %151, %cst_61 {dimension_numbers = #tpu.dot_dimension_numbers<[1], [0], [0], [1], [0, 0, 1, 1], [], []>} : vector<8x32xf32>, vector<32x8xf32>, vector<8x8xf32> -> vector<8x8xf32>
    %cst_62 = arith.constant dense<0xFF800000> : vector<8xf32>
    %154 = vector.multi_reduction <maximumf>, %153, %cst_62 [1] : vector<8x8xf32> to vector<8xf32>
    %155 = vector.shape_cast %154 : vector<8xf32> to vector<8x1xf32>
    %156 = vector.broadcast %155 : vector<8x1xf32> to vector<8x8xf32>
    %157 = arith.subf %153, %156 : vector<8x8xf32>
    %158 = math.exp %157 : vector<8x8xf32>
    %cst_63 = arith.constant dense<0.000000e+00> : vector<8xf32>
    %159 = vector.multi_reduction <add>, %158, %cst_63 [1] : vector<8x8xf32> to vector<8xf32>
    %160 = vector.shape_cast %159 : vector<8xf32> to vector<8x1xf32>
    %161 = vector.broadcast %160 : vector<8x1xf32> to vector<8x8xf32>
    %162 = arith.divf %158, %161 : vector<8x8xf32>
    %cst_64 = arith.constant dense<0.000000e+00> : vector<8x32xf32>
    %163 = tpu.matmul %162, %152, %cst_64 {dimension_numbers = #tpu.dot_dimension_numbers<[1], [0], [0], [1], [0, 0, 1, 1], [], []>} : vector<8x8xf32>, vector<8x32xf32>, vector<8x32xf32> -> vector<8x32xf32>
    %164 = vector.extract_strided_slice %135 {offsets = [0, 64], sizes = [8, 32], strides = [1, 1]} : vector<8x128xf32> to vector<8x32xf32>
    %165 = vector.extract_strided_slice %4 {offsets = [192, 0], sizes = [32, 8], strides = [1, 1]} : vector<256x8xf32> to vector<32x8xf32>
    %166 = vector.extract_strided_slice %6 {offsets = [0, 192], sizes = [8, 32], strides = [1, 1]} : vector<8x256xf32> to vector<8x32xf32>
    %cst_65 = arith.constant dense<0.000000e+00> : vector<8x8xf32>
    %167 = tpu.matmul %164, %165, %cst_65 {dimension_numbers = #tpu.dot_dimension_numbers<[1], [0], [0], [1], [0, 0, 1, 1], [], []>} : vector<8x32xf32>, vector<32x8xf32>, vector<8x8xf32> -> vector<8x8xf32>
    %cst_66 = arith.constant dense<0xFF800000> : vector<8xf32>
    %168 = vector.multi_reduction <maximumf>, %167, %cst_66 [1] : vector<8x8xf32> to vector<8xf32>
    %169 = vector.shape_cast %168 : vector<8xf32> to vector<8x1xf32>
    %170 = vector.broadcast %169 : vector<8x1xf32> to vector<8x8xf32>
    %171 = arith.subf %167, %170 : vector<8x8xf32>
    %172 = math.exp %171 : vector<8x8xf32>
    %cst_67 = arith.constant dense<0.000000e+00> : vector<8xf32>
    %173 = vector.multi_reduction <add>, %172, %cst_67 [1] : vector<8x8xf32> to vector<8xf32>
    %174 = vector.shape_cast %173 : vector<8xf32> to vector<8x1xf32>
    %175 = vector.broadcast %174 : vector<8x1xf32> to vector<8x8xf32>
    %176 = arith.divf %172, %175 : vector<8x8xf32>
    %cst_68 = arith.constant dense<0.000000e+00> : vector<8x32xf32>
    %177 = tpu.matmul %176, %166, %cst_68 {dimension_numbers = #tpu.dot_dimension_numbers<[1], [0], [0], [1], [0, 0, 1, 1], [], []>} : vector<8x8xf32>, vector<8x32xf32>, vector<8x32xf32> -> vector<8x32xf32>
    %178 = vector.extract_strided_slice %135 {offsets = [0, 96], sizes = [8, 32], strides = [1, 1]} : vector<8x128xf32> to vector<8x32xf32>
    %179 = vector.extract_strided_slice %4 {offsets = [224, 0], sizes = [32, 8], strides = [1, 1]} : vector<256x8xf32> to vector<32x8xf32>
    %180 = vector.extract_strided_slice %6 {offsets = [0, 224], sizes = [8, 32], strides = [1, 1]} : vector<8x256xf32> to vector<8x32xf32>
    %cst_69 = arith.constant dense<0.000000e+00> : vector<8x8xf32>
    %181 = tpu.matmul %178, %179, %cst_69 {dimension_numbers = #tpu.dot_dimension_numbers<[1], [0], [0], [1], [0, 0, 1, 1], [], []>} : vector<8x32xf32>, vector<32x8xf32>, vector<8x8xf32> -> vector<8x8xf32>
    %cst_70 = arith.constant dense<0xFF800000> : vector<8xf32>
    %182 = vector.multi_reduction <maximumf>, %181, %cst_70 [1] : vector<8x8xf32> to vector<8xf32>
    %183 = vector.shape_cast %182 : vector<8xf32> to vector<8x1xf32>
    %184 = vector.broadcast %183 : vector<8x1xf32> to vector<8x8xf32>
    %185 = arith.subf %181, %184 : vector<8x8xf32>
    %186 = math.exp %185 : vector<8x8xf32>
    %cst_71 = arith.constant dense<0.000000e+00> : vector<8xf32>
    %187 = vector.multi_reduction <add>, %186, %cst_71 [1] : vector<8x8xf32> to vector<8xf32>
    %188 = vector.shape_cast %187 : vector<8xf32> to vector<8x1xf32>
    %189 = vector.broadcast %188 : vector<8x1xf32> to vector<8x8xf32>
    %190 = arith.divf %186, %189 : vector<8x8xf32>
    %cst_72 = arith.constant dense<0.000000e+00> : vector<8x32xf32>
    %191 = tpu.matmul %190, %180, %cst_72 {dimension_numbers = #tpu.dot_dimension_numbers<[1], [0], [0], [1], [0, 0, 1, 1], [], []>} : vector<8x8xf32>, vector<8x32xf32>, vector<8x32xf32> -> vector<8x32xf32>
    %192 = tpu.concatenate %149, %163, %177, %191 in 1 : vector<8x32xf32>, vector<8x32xf32>, vector<8x32xf32>, vector<8x32xf32> -> vector<8x128xf32>
    %193 = arith.addf %192, %132 : vector<8x128xf32>
    %cst_73 = arith.constant dense<0.000000e+00> : vector<8x128xf32>
    %194 = tpu.matmul %193, %2, %cst_73 {dimension_numbers = #tpu.dot_dimension_numbers<[1], [0], [0], [1], [0, 0, 1, 1], [], []>} : vector<8x128xf32>, vector<128x128xf32>, vector<8x128xf32> -> vector<8x128xf32>
    %195 = arith.subf %193, %194 : vector<8x128xf32>
    %196 = arith.mulf %195, %195 : vector<8x128xf32>
    %cst_74 = arith.constant dense<0.000000e+00> : vector<8x128xf32>
    %197 = tpu.matmul %196, %2, %cst_74 {dimension_numbers = #tpu.dot_dimension_numbers<[1], [0], [0], [1], [0, 0, 1, 1], [], []>} : vector<8x128xf32>, vector<128x128xf32>, vector<8x128xf32> -> vector<8x128xf32>
    %cst_75 = arith.constant 9.99999974E-6 : f32
    %198 = vector.broadcast %cst_75 : f32 to vector<8x128xf32>
    %199 = arith.addf %197, %198 : vector<8x128xf32>
    %200 = math.sqrt %199 : vector<8x128xf32>
    %201 = arith.divf %195, %200 : vector<8x128xf32>
    %202 = vector.broadcast %125 : vector<1x128xf32> to vector<8x128xf32>
    %203 = arith.mulf %201, %202 : vector<8x128xf32>
    %204 = vector.broadcast %126 : vector<1x128xf32> to vector<8x128xf32>
    %205 = arith.addf %203, %204 : vector<8x128xf32>
    %c4 = arith.constant 4 : index
    %c0_76 = arith.constant 0 : index
    %c0_77 = arith.constant 0 : index
    %206 = vector.load %arg5[%c4, %c0_76, %c0_77] : memref<7x128x128xf32, #tpu.memory_space<vmem>>, vector<1x128x128xf32>
    %207 = vector.shape_cast %206 : vector<1x128x128xf32> to vector<128x128xf32>
    %cst_78 = arith.constant dense<0.000000e+00> : vector<8x128xf32>
    %208 = tpu.matmul %205, %207, %cst_78 {dimension_numbers = #tpu.dot_dimension_numbers<[1], [0], [0], [1], [0, 0, 1, 1], [], []>} : vector<8x128xf32>, vector<128x128xf32>, vector<8x128xf32> -> vector<8x128xf32>
    %209 = vector.broadcast %129 : vector<1x128xf32> to vector<8x128xf32>
    %210 = arith.addf %208, %209 : vector<8x128xf32>
    %cst_79 = arith.constant 0.000000e+00 : f32
    %211 = vector.broadcast %cst_79 : f32 to vector<8x128xf32>
    %212 = arith.maximumf %210, %211 : vector<8x128xf32>
    %c5 = arith.constant 5 : index
    %c0_80 = arith.constant 0 : index
    %c0_81 = arith.constant 0 : index
    %213 = vector.load %arg5[%c5, %c0_80, %c0_81] : memref<7x128x128xf32, #tpu.memory_space<vmem>>, vector<1x128x128xf32>
    %214 = vector.shape_cast %213 : vector<1x128x128xf32> to vector<128x128xf32>
    %cst_82 = arith.constant dense<0.000000e+00> : vector<8x128xf32>
    %215 = tpu.matmul %212, %214, %cst_82 {dimension_numbers = #tpu.dot_dimension_numbers<[1], [0], [0], [1], [0, 0, 1, 1], [], []>} : vector<8x128xf32>, vector<128x128xf32>, vector<8x128xf32> -> vector<8x128xf32>
    %216 = vector.broadcast %130 : vector<1x128xf32> to vector<8x128xf32>
    %217 = arith.addf %215, %216 : vector<8x128xf32>
    %218 = arith.addf %217, %205 : vector<8x128xf32>
    %cst_83 = arith.constant dense<0.000000e+00> : vector<8x128xf32>
    %219 = tpu.matmul %218, %2, %cst_83 {dimension_numbers = #tpu.dot_dimension_numbers<[1], [0], [0], [1], [0, 0, 1, 1], [], []>} : vector<8x128xf32>, vector<128x128xf32>, vector<8x128xf32> -> vector<8x128xf32>
    %220 = arith.subf %218, %219 : vector<8x128xf32>
    %221 = arith.mulf %220, %220 : vector<8x128xf32>
    %cst_84 = arith.constant dense<0.000000e+00> : vector<8x128xf32>
    %222 = tpu.matmul %221, %2, %cst_84 {dimension_numbers = #tpu.dot_dimension_numbers<[1], [0], [0], [1], [0, 0, 1, 1], [], []>} : vector<8x128xf32>, vector<128x128xf32>, vector<8x128xf32> -> vector<8x128xf32>
    %cst_85 = arith.constant 9.99999974E-6 : f32
    %223 = vector.broadcast %cst_85 : f32 to vector<8x128xf32>
    %224 = arith.addf %222, %223 : vector<8x128xf32>
    %225 = math.sqrt %224 : vector<8x128xf32>
    %226 = arith.divf %220, %225 : vector<8x128xf32>
    %227 = vector.broadcast %127 : vector<1x128xf32> to vector<8x128xf32>
    %228 = arith.mulf %226, %227 : vector<8x128xf32>
    %229 = vector.broadcast %128 : vector<1x128xf32> to vector<8x128xf32>
    %230 = arith.addf %228, %229 : vector<8x128xf32>
    %231 = arith.addf %230, %132 : vector<8x128xf32>
    %c6 = arith.constant 6 : index
    %c0_86 = arith.constant 0 : index
    %c0_87 = arith.constant 0 : index
    %232 = vector.load %arg5[%c6, %c0_86, %c0_87] : memref<7x128x128xf32, #tpu.memory_space<vmem>>, vector<1x128x128xf32>
    %233 = vector.shape_cast %232 : vector<1x128x128xf32> to vector<128x128xf32>
    %cst_88 = arith.constant dense<0.000000e+00> : vector<8x128xf32>
    %234 = tpu.matmul %231, %233, %cst_88 {dimension_numbers = #tpu.dot_dimension_numbers<[1], [0], [0], [1], [0, 0, 1, 1], [], []>} : vector<8x128xf32>, vector<128x128xf32>, vector<8x128xf32> -> vector<8x128xf32>
    %235 = vector.extract_strided_slice %234 {offsets = [0, 0], sizes = [8, 32], strides = [1, 1]} : vector<8x128xf32> to vector<8x32xf32>
    %236 = vector.broadcast %131 : vector<1x32xf32> to vector<8x32xf32>
    %237 = arith.addf %235, %236 : vector<8x32xf32>
    %c2_89 = arith.constant 2 : index
    %c0_90 = arith.constant 0 : index
    %c0_91 = arith.constant 0 : index
    %238 = vector.load %arg2[%c2_89, %c0_90, %c0_91] : memref<3x32x128xf32, #tpu.memory_space<vmem>>, vector<1x32x128xf32>
    %239 = vector.shape_cast %238 : vector<1x32x128xf32> to vector<32x128xf32>
    %cst_92 = arith.constant dense<0.000000e+00> : vector<8x128xf32>
    %240 = tpu.matmul %237, %239, %cst_92 {dimension_numbers = #tpu.dot_dimension_numbers<[1], [0], [0], [1], [0, 0, 1, 1], [], []>} : vector<8x32xf32>, vector<32x128xf32>, vector<8x128xf32> -> vector<8x128xf32>
    %c0_93 = arith.constant 0 : index
    %c0_94 = arith.constant 0 : index
    %241 = vector.load %arg7[%c0_93, %c0_94] : memref<8x128xf32, #tpu.memory_space<vmem>>, vector<8x128xf32>
    tpu.vector_store %arg7[%c0_93, %c0_94], %240 {strides = array<i32>} : memref<8x128xf32, #tpu.memory_space<vmem>>, vector<8x128xf32>,
    return
  }
}

</mosaic_0001>

<llo_original>
// kernel: forward_pallas.1
$region0: #{forward_pallas.1}
  #allocation0 [shape = 'u32[]', space=smem, size = 0x4, offset = 0x4, fixed_abs, tag = 'smem constant byte address 0x4 - core index']
  #allocation1 [shape = 'u32[144,128]{1,0:T(1,128)}', space=vmem, size = 0x12000, scoped, tag = 'internal scratch']
  %s0 = inlined_call_operand.vmem [shape: f32[8,48], index: 0, kind: input, shape index: {}]
  %s1 = inlined_call_operand.vmem [shape: f32[8,32], index: 1, kind: input, shape index: {}]
  %s2 = inlined_call_operand.vmem [shape: f32[3,32,128], index: 2, kind: input, shape index: {}]
  %s3 = inlined_call_operand.vmem [shape: f32[256,48], index: 3, kind: input, shape index: {}]
  %s4 = inlined_call_operand.vmem [shape: f32[48,256], index: 4, kind: input, shape index: {}]
  %s5 = inlined_call_operand.hbm [shape: f32[7,128,128], index: 5, kind: input, shape index: {}]
  %s6 = inlined_call_operand.vmem [shape: f32[2,8,128], index: 6, kind: input, shape index: {}]
  %s7 = inlined_call_operand.hbm [shape: f32[8,128], index: 7, kind: output, shape index: {}]
  %s8 = sld [smem:[#allocation0]]
  $region42: #{forward_pallas.1} parent=0
    _
  %s10 = ssub.s32 1, %s8
  %s11 = scalar_select 0, %s10, %s8
  $region1: #{forward_pallas.1} parent=0
    #allocation2 [shape = 'u8[458752]{0}', space=vmem, size = 0x70000, scoped, tag = 'input window, operand 5, single buffered']
    #allocation3 [shape = 's32[1]{0}', space=sflag, size = 0x4, scoped, tag = 'scoped memory for forward_pallas.1']
    #allocation4 [shape = 's32[1]{0}', space=sflag, size = 0x4, scoped, tag = 'scoped memory for forward_pallas.1']
    #allocation5 [shape = 'u8[4096]{0}', space=vmem, size = 0x1000, scoped, tag = 'output window, operand 0, single buffered']
    %12 = vsyncpa [#allocation3], 0
    %13 = vsyncpa [#allocation4], 0
    // Predicated region
    $region2: #{forward_pallas.1} parent=1 // pred_check
      _
    $region3: #{forward_pallas.1} parent=1 // pred_check_branch
      %15 = sbr.rel (0) target = $region5
    $region4: #{forward_pallas.1} parent=1 // pred_region
      _
    $region5: #{forward_pallas.1} parent=1 // pred_fallthru
      _
    // Predicated region
    $region6: #{forward_pallas.1} parent=1 // pred_check
      _
    $region7: #{forward_pallas.1} parent=1 // pred_check_branch
      %17 = sbr.rel (0) target = $region9
    $region8: #{forward_pallas.1} parent=1 // pred_region
      _
    $region9: #{forward_pallas.1} parent=1 // pred_fallthru
      _
    // Predicated region
    $region10: #{forward_pallas.1} parent=1 // pred_check
      _
    $region11: #{forward_pallas.1} parent=1 // pred_check_branch
      %19 = sbr.rel (0) target = $region13
    $region12: #{forward_pallas.1} parent=1 // pred_region
      _
    $region13: #{forward_pallas.1} parent=1 // pred_fallthru
      _
    // Predicated region
    $region14: #{forward_pallas.1} parent=1 // pred_check
      _
    $region15: #{forward_pallas.1} parent=1 // pred_check_branch
      %21 = sbr.rel (0) target = $region17
    $region16: #{forward_pallas.1} parent=1 // pred_region
      _
    $region17: #{forward_pallas.1} parent=1 // pred_fallthru
      _
    // Predicated region
    $region18: #{forward_pallas.1} parent=1 // pred_check
      _
    $region19: #{forward_pallas.1} parent=1 // pred_check_branch
      %23 = sbr.rel (0) target = $region21
    $region20: #{forward_pallas.1} parent=1 // pred_region
      _
    $region21: #{forward_pallas.1} parent=1 // pred_fallthru
      _
    // Predicated region
    $region22: #{forward_pallas.1} parent=1 // pred_check
      _
    $region23: #{forward_pallas.1} parent=1 // pred_check_branch
      %25 = sbr.rel (0) target = $region25
    $region24: #{forward_pallas.1} parent=1 // pred_region
      %s27 = ssub.s32 14336, 14336
      %28 = vsyncadd [#allocation3], %s27
      %s29 = sshll.u32 [#allocation2], 4
      %s30 = int_to_ptr.vmem [resolvable:$true] %s29
      %35 = dma.hbm_to_vmem [thread:$0]  %s5, 14336, %s30, [#allocation3], 128, 128, 8
    $region25: #{forward_pallas.1} parent=1 // pred_fallthru
      _
    // Predicated region
    $region26: #{forward_pallas.1} parent=1 // pred_check
      _
    $region27: #{forward_pallas.1} parent=1 // pred_check_branch
      %37 = sbr.rel (0) target = $region29
    $region28: #{forward_pallas.1} parent=1 // pred_region
      _
    $region29: #{forward_pallas.1} parent=1 // pred_fallthru
      _
    // Predicated region
    $region30: #{forward_pallas.1} parent=1 // pred_check
      _
    $region31: #{forward_pallas.1} parent=1 // pred_check_branch
      %39 = sbr.rel (0) target = $region33
    $region32: #{forward_pallas.1} parent=1 // pred_region
      %40 = dma.done [#allocation3], 14336
    $region33: #{forward_pallas.1} parent=1 // pred_fallthru
      _
    %v41 = vld [vmem:[%s0] sm:$0xff]
    %v42 = vld [vmem:[#allocation2] sm:$0xff]
    %v43 = vld [vmem:[#allocation2 + $0x8] sm:$0xff]
    %v44 = vld [vmem:[#allocation2 + $0x10] sm:$0xff]
    %v45 = vld [vmem:[#allocation2 + $0x18] sm:$0xff]
    %v46 = vld [vmem:[#allocation2 + $0x20] sm:$0xff]
    %v47 = vld [vmem:[#allocation2 + $0x28] sm:$0xff]
    %v48 = vld [vmem:[#allocation2 + $0x30] sm:$0xff]
    %v49 = vld [vmem:[#allocation2 + $0x38] sm:$0xff]
    %v50 = vld [vmem:[#allocation2 + $0x40] sm:$0xff]
    %v51 = vld [vmem:[#allocation2 + $0x48] sm:$0xff]
    %v52 = vld [vmem:[#allocation2 + $0x50] sm:$0xff]
    %v53 = vld [vmem:[#allocation2 + $0x58] sm:$0xff]
    %v54 = vld [vmem:[#allocation2 + $0x60] sm:$0xff]
    %v55 = vld [vmem:[#allocation2 + $0x68] sm:$0xff]
    %v56 = vld [vmem:[#allocation2 + $0x70] sm:$0xff]
    %v57 = vld [vmem:[#allocation2 + $0x78] sm:$0xff]
    %v58 = vld [vmem:[%s3] sm:$0xff]
    %v59 = vld [vmem:[%s3 + $0x8] sm:$0xff]
    %v60 = vld [vmem:[%s3 + $0x10] sm:$0xff]
    %v61 = vld [vmem:[%s3 + $0x18] sm:$0xff]
    %v62 = vld [vmem:[%s3 + $0x20] sm:$0xff]
    %v63 = vld [vmem:[%s3 + $0x28] sm:$0xff]
    %v64 = vld [vmem:[%s3 + $0x30] sm:$0xff]
    %v65 = vld [vmem:[%s3 + $0x38] sm:$0xff]
    %v66 = vld [vmem:[%s3 + $0x40] sm:$0xff]
    %v67 = vld [vmem:[%s3 + $0x48] sm:$0xff]
    %v68 = vld [vmem:[%s3 + $0x50] sm:$0xff]
    %v69 = vld [vmem:[%s3 + $0x58] sm:$0xff]
    %v70 = vld [vmem:[%s3 + $0x60] sm:$0xff]
    %v71 = vld [vmem:[%s3 + $0x68] sm:$0xff]
    %v72 = vld [vmem:[%s3 + $0x70] sm:$0xff]
    %v73 = vld [vmem:[%s3 + $0x78] sm:$0xff]
    %v74 = vld [vmem:[%s3 + $0x80] sm:$0xff]
    %v75 = vld [vmem:[%s3 + $0x88] sm:$0xff]
    %v76 = vld [vmem:[%s3 + $0x90] sm:$0xff]
    %v77 = vld [vmem:[%s3 + $0x98] sm:$0xff]
    %v78 = vld [vmem:[%s3 + $0xa0] sm:$0xff]
    %v79 = vld [vmem:[%s3 + $0xa8] sm:$0xff]
    %v80 = vld [vmem:[%s3 + $0xb0] sm:$0xff]
    %v81 = vld [vmem:[%s3 + $0xb8] sm:$0xff]
    %v82 = vld [vmem:[%s3 + $0xc0] sm:$0xff]
    %v83 = vld [vmem:[%s3 + $0xc8] sm:$0xff]
    %v84 = vld [vmem:[%s3 + $0xd0] sm:$0xff]
    %v85 = vld [vmem:[%s3 + $0xd8] sm:$0xff]
    %v86 = vld [vmem:[%s3 + $0xe0] sm:$0xff]
    %v87 = vld [vmem:[%s3 + $0xe8] sm:$0xff]
    %v88 = vld [vmem:[%s3 + $0xf0] sm:$0xff]
    %v89 = vld [vmem:[%s3 + $0xf8] sm:$0xff]
    %vm90 = vcmask 392192
    %v92 = vsel %vm90, %v58, 0
    %v95 = vsel %vm90, %v59, 0
    %v98 = vsel %vm90, %v60, 0
    %v101 = vsel %vm90, %v61, 0
    %v104 = vsel %vm90, %v62, 0
    %v107 = vsel %vm90, %v63, 0
    %v110 = vsel %vm90, %v64, 0
    %v113 = vsel %vm90, %v65, 0
    %v116 = vsel %vm90, %v66, 0
    %v119 = vsel %vm90, %v67, 0
    %v122 = vsel %vm90, %v68, 0
    %v125 = vsel %vm90, %v69, 0
    %v128 = vsel %vm90, %v70, 0
    %v131 = vsel %vm90, %v71, 0
    %v134 = vsel %vm90, %v72, 0
    %v137 = vsel %vm90, %v73, 0
    %v140 = vsel %vm90, %v74, 0
    %v143 = vsel %vm90, %v75, 0
    %v146 = vsel %vm90, %v76, 0
    %v149 = vsel %vm90, %v77, 0
    %v152 = vsel %vm90, %v78, 0
    %v155 = vsel %vm90, %v79, 0
    %v158 = vsel %vm90, %v80, 0
    %v161 = vsel %vm90, %v81, 0
    %v164 = vsel %vm90, %v82, 0
    %v167 = vsel %vm90, %v83, 0
    %v170 = vsel %vm90, %v84, 0
    %v173 = vsel %vm90, %v85, 0
    %v176 = vsel %vm90, %v86, 0
    %v179 = vsel %vm90, %v87, 0
    %v182 = vsel %vm90, %v88, 0
    %v185 = vsel %vm90, %v89, 0
    %v188 = vsel %vm90, %v41, 0
    %190 = vmatprep.subr.mxu0 0.0
    %191 = vmatpush1.xpose.msra.mxu0 %v188
    %192 = vmatprep.subr.mxu0 0.0
    %193 = vmatpush1.xpose.msra.mxu0 0.0
    %194 = vmatprep.subr.mxu0 0.0
    %195 = vmatpush1.xpose.msra.mxu0 0.0
    %196 = vmatprep.subr.mxu0 0.0
    %197 = vmatpush1.xpose.msra.mxu0 0.0
    %198 = vmatprep.subr.mxu0 0.0
    %199 = vmatpush1.xpose.msra.mxu0 0.0
    %200 = vmatprep.subr.mxu0 0.0
    %201 = vmatpush1.xpose.msra.mxu0 0.0
    %202 = vmatprep.subr.mxu0 0.0
    %203 = vmatpush1.xpose.msra.mxu0 0.0
    %204 = vmatprep.subr.mxu0 0.0
    %205 = vmatpush1.xpose.msra.mxu0 0.0
    %206 = vmatprep.subr.mxu0 0.0
    %207 = vmatpush1.xpose.msra.mxu0 0.0
    %208 = vmatprep.subr.mxu0 0.0
    %209 = vmatpush1.xpose.msra.mxu0 0.0
    %210 = vmatprep.subr.mxu0 0.0
    %211 = vmatpush1.xpose.msra.mxu0 0.0
    %212 = vmatprep.subr.mxu0 0.0
    %213 = vmatpush1.xpose.msra.mxu0 0.0
    %214 = vmatprep.subr.mxu0 0.0
    %215 = vmatpush1.xpose.msra.mxu0 0.0
    %216 = vmatprep.subr.mxu0 0.0
    %217 = vmatpush1.xpose.msra.mxu0 0.0
    %218 = vmatprep.subr.mxu0 0.0
    %219 = vmatpush1.xpose.msra.mxu0 0.0
    %220 = vmatprep.subr.mxu0 0.0
    %221 = vmatpush1.xpose.msra.mxu0 0.0
    %222 = vmatprep.subr.mxu0 0.0
    %223 = vmatpush1.xpose.msra.mxu0 0.0
    %224 = vmatprep.subr.mxu0 0.0
    %225 = vmatpush1.xpose.msra.mxu0 0.0
    %226 = vmatprep.subr.mxu0 0.0
    %227 = vmatpush1.xpose.msra.mxu0 0.0
    %228 = vmatprep.subr.mxu0 0.0
    %229 = vmatpush1.xpose.msra.mxu0 0.0
    %230 = vmatprep.subr.mxu0 0.0
    %231 = vmatpush1.xpose.msra.mxu0 0.0
    %232 = vmatprep.subr.mxu0 0.0
    %233 = vmatpush1.xpose.msra.mxu0 0.0
    %234 = vmatprep.subr.mxu0 0.0
    %235 = vmatpush1.xpose.msra.mxu0 0.0
    %236 = vmatprep.subr.mxu0 0.0
    %237 = vmatpush1.xpose.msra.mxu0 0.0
    %238 = vmatprep.subr.mxu0 0.0
    %239 = vmatpush1.xpose.msra.mxu0 0.0
    %240 = vmatprep.subr.mxu0 0.0
    %241 = vmatpush1.xpose.msra.mxu0 0.0
    %242 = vmatprep.subr.mxu0 0.0
    %243 = vmatpush1.xpose.msra.mxu0 0.0
    %244 = vmatprep.subr.mxu0 0.0
    %245 = vmatpush1.xpose.msra.mxu0 0.0
    %246 = vmatprep.subr.mxu0 0.0
    %247 = vmatpush1.xpose.msra.mxu0 0.0
    %248 = vmatprep.subr.mxu0 0.0
    %249 = vmatpush1.xpose.msra.mxu0 0.0
    %250 = vmatprep.subr.mxu0 0.0
    %251 = vmatpush1.xpose.msra.mxu0 0.0
    %252 = vmatprep.subr.mxu0 0.0
    %253 = vmatpush1.xpose.msra.mxu0 0.0
    %254 = vmatprep.mubr.f32.mxu0 0.0
    %255 = vmatmul.mubr.f32.gmra.mrb[0].mxu0 %v92
    %v256 = vpop.f32.mrb[0].mxu0
    %v257 = vadd.f32 0.0, %v256
    %v258 = vpop.f32.mrb[0].mxu0
    %259 = vmatprep.mubr.f32.mxu0 0.0
    %260 = vmatmul.mubr.f32.gmra.mrb[0].mxu0 %v95
    %v261 = vpop.f32.mrb[0].mxu0
    %v262 = vadd.f32 0.0, %v261
    %v263 = vpop.f32.mrb[0].mxu0
    %264 = vmatprep.mubr.f32.mxu0 0.0
    %265 = vmatmul.mubr.f32.gmra.mrb[0].mxu0 %v98
    %v266 = vpop.f32.mrb[0].mxu0
    %v267 = vadd.f32 0.0, %v266
    %v268 = vpop.f32.mrb[0].mxu0
    %269 = vmatprep.mubr.f32.mxu0 0.0
    %270 = vmatmul.mubr.f32.gmra.mrb[0].mxu0 %v101
    %v271 = vpop.f32.mrb[0].mxu0
    %v272 = vadd.f32 0.0, %v271
    %v273 = vpop.f32.mrb[0].mxu0
    %274 = vmatprep.mubr.f32.mxu0 0.0
    %275 = vmatmul.mubr.f32.gmra.mrb[0].mxu0 %v104
    %v276 = vpop.f32.mrb[0].mxu0
    %v277 = vadd.f32 0.0, %v276
    %v278 = vpop.f32.mrb[0].mxu0
    %279 = vmatprep.mubr.f32.mxu0 0.0
    %280 = vmatmul.mubr.f32.gmra.mrb[0].mxu0 %v107
    %v281 = vpop.f32.mrb[0].mxu0
    %v282 = vadd.f32 0.0, %v281
    %v283 = vpop.f32.mrb[0].mxu0
    %284 = vmatprep.mubr.f32.mxu0 0.0
    %285 = vmatmul.mubr.f32.gmra.mrb[0].mxu0 %v110
    %v286 = vpop.f32.mrb[0].mxu0
    %v287 = vadd.f32 0.0, %v286
    %v288 = vpop.f32.mrb[0].mxu0
    %289 = vmatprep.mubr.f32.mxu0 0.0
    %290 = vmatmul.mubr.f32.gmra.mrb[0].mxu0 %v113
    %v291 = vpop.f32.mrb[0].mxu0
    %v292 = vadd.f32 0.0, %v291
    %v293 = vpop.f32.mrb[0].mxu0
    %294 = vmatprep.mubr.f32.mxu0 0.0
    %295 = vmatmul.mubr.f32.gmra.mrb[0].mxu0 %v116
    %v296 = vpop.f32.mrb[0].mxu0
    %v297 = vadd.f32 0.0, %v296
    %v298 = vpop.f32.mrb[0].mxu0
    %299 = vmatprep.mubr.f32.mxu0 0.0
    %300 = vmatmul.mubr.f32.gmra.mrb[0].mxu0 %v119
    %v301 = vpop.f32.mrb[0].mxu0
    %v302 = vadd.f32 0.0, %v301
    %v303 = vpop.f32.mrb[0].mxu0
    %304 = vmatprep.mubr.f32.mxu0 0.0
    %305 = vmatmul.mubr.f32.gmra.mrb[0].mxu0 %v122
    %v306 = vpop.f32.mrb[0].mxu0
    %v307 = vadd.f32 0.0, %v306
    %v308 = vpop.f32.mrb[0].mxu0
    %309 = vmatprep.mubr.f32.mxu0 0.0
    %310 = vmatmul.mubr.f32.gmra.mrb[0].mxu0 %v125
    %v311 = vpop.f32.mrb[0].mxu0
    %v312 = vadd.f32 0.0, %v311
    %v313 = vpop.f32.mrb[0].mxu0
    %314 = vmatprep.mubr.f32.mxu0 0.0
    %315 = vmatmul.mubr.f32.gmra.mrb[0].mxu0 %v128
    %v316 = vpop.f32.mrb[0].mxu0
    %v317 = vadd.f32 0.0, %v316
    %v318 = vpop.f32.mrb[0].mxu0
    %319 = vmatprep.mubr.f32.mxu0 0.0
    %320 = vmatmul.mubr.f32.gmra.mrb[0].mxu0 %v131
    %v321 = vpop.f32.mrb[0].mxu0
    %v322 = vadd.f32 0.0, %v321
    %v323 = vpop.f32.mrb[0].mxu0
    %324 = vmatprep.mubr.f32.mxu0 0.0
    %325 = vmatmul.mubr.f32.gmra.mrb[0].mxu0 %v134
    %v326 = vpop.f32.mrb[0].mxu0
    %v327 = vadd.f32 0.0, %v326
    %v328 = vpop.f32.mrb[0].mxu0
    %329 = vmatprep.mubr.f32.mxu0 0.0
    %330 = vmatmul.mubr.f32.gmra.mrb[0].mxu0 %v137
    %v331 = vpop.f32.mrb[0].mxu0
    %v332 = vadd.f32 0.0, %v331
    %v333 = vpop.f32.mrb[0].mxu0
    %334 = vmatprep.mubr.f32.mxu0 0.0
    %335 = vmatmul.mubr.f32.gmra.mrb[0].mxu0 %v140
    %v336 = vpop.f32.mrb[0].mxu0
    %v337 = vadd.f32 0.0, %v336
    %v338 = vpop.f32.mrb[0].mxu0
    %339 = vmatprep.mubr.f32.mxu0 0.0
    %340 = vmatmul.mubr.f32.gmra.mrb[0].mxu0 %v143
    %v341 = vpop.f32.mrb[0].mxu0
    %v342 = vadd.f32 0.0, %v341
    %v343 = vpop.f32.mrb[0].mxu0
    %344 = vmatprep.mubr.f32.mxu0 0.0
    %345 = vmatmul.mubr.f32.gmra.mrb[0].mxu0 %v146
    %v346 = vpop.f32.mrb[0].mxu0
    %v347 = vadd.f32 0.0, %v346
    %v348 = vpop.f32.mrb[0].mxu0
    %349 = vmatprep.mubr.f32.mxu0 0.0
    %350 = vmatmul.mubr.f32.gmra.mrb[0].mxu0 %v149
    %v351 = vpop.f32.mrb[0].mxu0
    %v352 = vadd.f32 0.0, %v351
    %v353 = vpop.f32.mrb[0].mxu0
    %354 = vmatprep.mubr.f32.mxu0 0.0
    %355 = vmatmul.mubr.f32.gmra.mrb[0].mxu0 %v152
    %v356 = vpop.f32.mrb[0].mxu0
    %v357 = vadd.f32 0.0, %v356
    %v358 = vpop.f32.mrb[0].mxu0
    %359 = vmatprep.mubr.f32.mxu0 0.0
    %360 = vmatmul.mubr.f32.gmra.mrb[0].mxu0 %v155
    %v361 = vpop.f32.mrb[0].mxu0
    %v362 = vadd.f32 0.0, %v361
    %v363 = vpop.f32.mrb[0].mxu0
    %364 = vmatprep.mubr.f32.mxu0 0.0
    %365 = vmatmul.mubr.f32.gmra.mrb[0].mxu0 %v158
    %v366 = vpop.f32.mrb[0].mxu0
    %v367 = vadd.f32 0.0, %v366
    %v368 = vpop.f32.mrb[0].mxu0
    %369 = vmatprep.mubr.f32.mxu0 0.0
    %370 = vmatmul.mubr.f32.gmra.mrb[0].mxu0 %v161
    %v371 = vpop.f32.mrb[0].mxu0
    %v372 = vadd.f32 0.0, %v371
    %v373 = vpop.f32.mrb[0].mxu0
    %374 = vmatprep.mubr.f32.mxu0 0.0
    %375 = vmatmul.mubr.f32.gmra.mrb[0].mxu0 %v164
    %v376 = vpop.f32.mrb[0].mxu0
    %v377 = vadd.f32 0.0, %v376
    %v378 = vpop.f32.mrb[0].mxu0
    %379 = vmatprep.mubr.f32.mxu0 0.0
    %380 = vmatmul.mubr.f32.gmra.mrb[0].mxu0 %v167
    %v381 = vpop.f32.mrb[0].mxu0
    %v382 = vadd.f32 0.0, %v381
    %v383 = vpop.f32.mrb[0].mxu0
    %384 = vmatprep.mubr.f32.mxu0 0.0
    %385 = vmatmul.mubr.f32.gmra.mrb[0].mxu0 %v170
    %v386 = vpop.f32.mrb[0].mxu0
    %v387 = vadd.f32 0.0, %v386
    %v388 = vpop.f32.mrb[0].mxu0
    %389 = vmatprep.mubr.f32.mxu0 0.0
    %390 = vmatmul.mubr.f32.gmra.mrb[0].mxu0 %v173
    %v391 = vpop.f32.mrb[0].mxu0
    %v392 = vadd.f32 0.0, %v391
    %v393 = vpop.f32.mrb[0].mxu0
    %394 = vmatprep.mubr.f32.mxu0 0.0
    %395 = vmatmul.mubr.f32.gmra.mrb[0].mxu0 %v176
    %v396 = vpop.f32.mrb[0].mxu0
    %v397 = vadd.f32 0.0, %v396
    %v398 = vpop.f32.mrb[0].mxu0
    %399 = vmatprep.mubr.f32.mxu0 0.0
    %400 = vmatmul.mubr.f32.gmra.mrb[0].mxu0 %v179
    %v401 = vpop.f32.mrb[0].mxu0
    %v402 = vadd.f32 0.0, %v401
    %v403 = vpop.f32.mrb[0].mxu0
    %404 = vmatprep.mubr.f32.mxu0 0.0
    %405 = vmatmul.mubr.f32.gmra.mrb[0].mxu0 %v182
    %v406 = vpop.f32.mrb[0].mxu0
    %v407 = vadd.f32 0.0, %v406
    %v408 = vpop.f32.mrb[0].mxu0
    %409 = vmatprep.mubr.f32.mxu0 0.0
    %410 = vmatmul.mubr.f32.gmra.mrb[0].mxu0 %v185
    %v411 = vpop.f32.mrb[0].mxu0
    %v412 = vadd.f32 0.0, %v411
    %v413 = vpop.f32.mrb[0].mxu0
    %414 = vdwg.mxu0
    %v415 = vld [vmem:[%s4] sm:$0xff]
    %v416 = vld [vmem:[%s4 + $0x8] sm:$0xff]
    %v417 = vld [vmem:[%s4 + $0x10] sm:$0xff]
    %v418 = vld [vmem:[%s4 + $0x18] sm:$0xff]
    %v419 = vld [vmem:[%s4 + $0x20] sm:$0xff]
    %v420 = vld [vmem:[%s4 + $0x28] sm:$0xff]
    %v421 = vld [vmem:[%s4 + $0x30] sm:$0xff]
    %v422 = vld [vmem:[%s4 + $0x38] sm:$0xff]
    %v423 = vld [vmem:[%s4 + $0x40] sm:$0xff]
    %v424 = vld [vmem:[%s4 + $0x48] sm:$0xff]
    %v425 = vld [vmem:[%s4 + $0x50] sm:$0xff]
    %v426 = vld [vmem:[%s4 + $0x58] sm:$0xff]
    %427 = vmatprep.subr.mxu0 %v416
    %428 = vmatpush1.msra.mxu0 %v415
    %429 = vmatprep.subr.mxu0 %v418
    %430 = vmatpush1.msra.mxu0 %v417
    %431 = vmatprep.subr.mxu0 %v420
    %432 = vmatpush1.msra.mxu0 %v419
    %433 = vmatprep.subr.mxu0 %v422
    %434 = vmatpush1.msra.mxu0 %v421
    %435 = vmatprep.subr.mxu0 %v424
    %436 = vmatpush1.msra.mxu0 %v423
    %437 = vmatprep.subr.mxu0 %v426
    %438 = vmatpush1.msra.mxu0 %v425
    %439 = vmatprep.subr.mxu0 0.0
    %440 = vmatpush1.msra.mxu0 0.0
    %441 = vmatprep.subr.mxu0 0.0
    %442 = vmatpush1.msra.mxu0 0.0
    %443 = vmatprep.subr.mxu0 0.0
    %444 = vmatpush1.msra.mxu0 0.0
    %445 = vmatprep.subr.mxu0 0.0
    %446 = vmatpush1.msra.mxu0 0.0
    %447 = vmatprep.subr.mxu0 0.0
    %448 = vmatpush1.msra.mxu0 0.0
    %449 = vmatprep.subr.mxu0 0.0
    %450 = vmatpush1.msra.mxu0 0.0
    %451 = vmatprep.subr.mxu0 0.0
    %452 = vmatpush1.msra.mxu0 0.0
    %453 = vmatprep.subr.mxu0 0.0
    %454 = vmatpush1.msra.mxu0 0.0
    %455 = vmatprep.subr.mxu0 0.0
    %456 = vmatpush1.msra.mxu0 0.0
    %457 = vmatprep.subr.mxu0 0.0
    %458 = vmatpush1.msra.mxu0 0.0
    %459 = vmatprep.subr.mxu0 0.0
    %460 = vmatpush1.msra.mxu0 0.0
    %461 = vmatprep.subr.mxu0 0.0
    %462 = vmatpush1.msra.mxu0 0.0
    %463 = vmatprep.subr.mxu0 0.0
    %464 = vmatpush1.msra.mxu0 0.0
    %465 = vmatprep.subr.mxu0 0.0
    %466 = vmatpush1.msra.mxu0 0.0
    %467 = vmatprep.subr.mxu0 0.0
    %468 = vmatpush1.msra.mxu0 0.0
    %469 = vmatprep.subr.mxu0 0.0
    %470 = vmatpush1.msra.mxu0 0.0
    %471 = vmatprep.subr.mxu0 0.0
    %472 = vmatpush1.msra.mxu0 0.0
    %473 = vmatprep.subr.mxu0 0.0
    %474 = vmatpush1.msra.mxu0 0.0
    %475 = vmatprep.subr.mxu0 0.0
    %476 = vmatpush1.msra.mxu0 0.0
    %477 = vmatprep.subr.mxu0 0.0
    %478 = vmatpush1.msra.mxu0 0.0
    %479 = vmatprep.subr.mxu0 0.0
    %480 = vmatpush1.msra.mxu0 0.0
    %481 = vmatprep.subr.mxu0 0.0
    %482 = vmatpush1.msra.mxu0 0.0
    %483 = vmatprep.subr.mxu0 0.0
    %484 = vmatpush1.msra.mxu0 0.0
    %485 = vmatprep.subr.mxu0 0.0
    %486 = vmatpush1.msra.mxu0 0.0
    %487 = vmatprep.subr.mxu0 0.0
    %488 = vmatpush1.msra.mxu0 0.0
    %489 = vmatprep.subr.mxu0 0.0
    %490 = vmatpush1.msra.mxu0 0.0
    %491 = vmatprep.mubr.f32.mxu0 0.0
    %492 = vmatmul.mubr.f32.gmra.mrb[0].mxu0 %v188
    %v493 = vpop.f32.mrb[0].mxu0
    %v494 = vadd.f32 0.0, %v493
    %v495 = vpop.f32.mrb[0].mxu0
    %v496 = vadd.f32 0.0, %v495
    %497 = vdwg.mxu0
    %v498 = vld [vmem:[%s1] sm:$0xff]
    %v499 = vld [vmem:[%s6] sm:$0xff]
    %501 = vrot.lane.b32.xlu0 %v498, 32
    %v502 = vpop.permute.xlu0 %501
    %504 = vrot.lane.b32.xlu0 %v498, 64
    %v505 = vpop.permute.xlu0 %504
    %507 = vrot.lane.b32.xlu0 %v498, 96
    %v508 = vpop.permute.xlu0 %507
    %vm510 = vcmask 261120
    %v511 = vsel %vm510, %v498, %v502
    %vm512 = vcmask 523264
    %v513 = vsel %vm512, %v511, %v505
    %vm514 = vcmask 785408
    %v515 = vsel %vm514, %v513, %v508
    %v516 = vld [vmem:[%s2] sm:$0xff]
    %v517 = vld [vmem:[%s2 + $0x8] sm:$0xff]
    %v518 = vld [vmem:[%s2 + $0x10] sm:$0xff]
    %v519 = vld [vmem:[%s2 + $0x18] sm:$0xff]
    %v520 = vsel %vm510, %v498, 0
    %522 = vmatprep.subr.mxu0 0.0
    %523 = vmatpush1.msra.mxu0 %v516
    %524 = vmatprep.subr.mxu0 0.0
    %525 = vmatpush1.msra.mxu0 %v517
    %526 = vmatprep.subr.mxu0 0.0
    %527 = vmatpush1.msra.mxu0 %v518
    %528 = vmatprep.subr.mxu0 0.0
    %529 = vmatpush1.msra.mxu0 %v519
    %530 = vmatprep.subr.mxu0 0.0
    %531 = vmatpush1.msra.mxu0 0.0
    %532 = vmatprep.subr.mxu0 0.0
    %533 = vmatpush1.msra.mxu0 0.0
    %534 = vmatprep.subr.mxu0 0.0
    %535 = vmatpush1.msra.mxu0 0.0
    %536 = vmatprep.subr.mxu0 0.0
    %537 = vmatpush1.msra.mxu0 0.0
    %538 = vmatprep.subr.mxu0 0.0
    %539 = vmatpush1.msra.mxu0 0.0
    %540 = vmatprep.subr.mxu0 0.0
    %541 = vmatpush1.msra.mxu0 0.0
    %542 = vmatprep.subr.mxu0 0.0
    %543 = vmatpush1.msra.mxu0 0.0
    %544 = vmatprep.subr.mxu0 0.0
    %545 = vmatpush1.msra.mxu0 0.0
    %546 = vmatprep.subr.mxu0 0.0
    %547 = vmatpush1.msra.mxu0 0.0
    %548 = vmatprep.subr.mxu0 0.0
    %549 = vmatpush1.msra.mxu0 0.0
    %550 = vmatprep.subr.mxu0 0.0
    %551 = vmatpush1.msra.mxu0 0.0
    %552 = vmatprep.subr.mxu0 0.0
    %553 = vmatpush1.msra.mxu0 0.0
    %554 = vmatprep.subr.mxu0 0.0
    %555 = vmatpush1.msra.mxu0 0.0
    %556 = vmatprep.subr.mxu0 0.0
    %557 = vmatpush1.msra.mxu0 0.0
    %558 = vmatprep.subr.mxu0 0.0
    %559 = vmatpush1.msra.mxu0 0.0
    %560 = vmatprep.subr.mxu0 0.0
    %561 = vmatpush1.msra.mxu0 0.0
    %562 = vmatprep.subr.mxu0 0.0
    %563 = vmatpush1.msra.mxu0 0.0
    %564 = vmatprep.subr.mxu0 0.0
    %565 = vmatpush1.msra.mxu0 0.0
    %566 = vmatprep.subr.mxu0 0.0
    %567 = vmatpush1.msra.mxu0 0.0
    %568 = vmatprep.subr.mxu0 0.0
    %569 = vmatpush1.msra.mxu0 0.0
    %570 = vmatprep.subr.mxu0 0.0
    %571 = vmatpush1.msra.mxu0 0.0
    %572 = vmatprep.subr.mxu0 0.0
    %573 = vmatpush1.msra.mxu0 0.0
    %574 = vmatprep.subr.mxu0 0.0
    %575 = vmatpush1.msra.mxu0 0.0
    %576 = vmatprep.subr.mxu0 0.0
    %577 = vmatpush1.msra.mxu0 0.0
    %578 = vmatprep.subr.mxu0 0.0
    %579 = vmatpush1.msra.mxu0 0.0
    %580 = vmatprep.subr.mxu0 0.0
    %581 = vmatpush1.msra.mxu0 0.0
    %582 = vmatprep.subr.mxu0 0.0
    %583 = vmatpush1.msra.mxu0 0.0
    %584 = vmatprep.subr.mxu0 0.0
    %585 = vmatpush1.msra.mxu0 0.0
    %586 = vmatprep.mubr.f32.mxu0 0.0
    %587 = vmatmul.mubr.f32.gmra.mrb[0].mxu0 %v520
    %v588 = vpop.f32.mrb[0].mxu0
    %v589 = vadd.f32 0.0, %v588
    %v590 = vpop.f32.mrb[0].mxu0
    %591 = vdwg.mxu0
    %v593 = vsel %vm510, %v589, 0
    %595 = vmatprep.subr.mxu0 0.0
    %596 = vmatpush1.msra.mxu0 %v257
    %597 = vmatprep.subr.mxu0 0.0
    %598 = vmatpush1.msra.mxu0 %v262
    %599 = vmatprep.subr.mxu0 0.0
    %600 = vmatpush1.msra.mxu0 %v267
    %601 = vmatprep.subr.mxu0 0.0
    %602 = vmatpush1.msra.mxu0 %v272
    %603 = vmatprep.subr.mxu0 0.0
    %604 = vmatpush1.msra.mxu0 0.0
    %605 = vmatprep.subr.mxu0 0.0
    %606 = vmatpush1.msra.mxu0 0.0
    %607 = vmatprep.subr.mxu0 0.0
    %608 = vmatpush1.msra.mxu0 0.0
    %609 = vmatprep.subr.mxu0 0.0
    %610 = vmatpush1.msra.mxu0 0.0
    %611 = vmatprep.subr.mxu0 0.0
    %612 = vmatpush1.msra.mxu0 0.0
    %613 = vmatprep.subr.mxu0 0.0
    %614 = vmatpush1.msra.mxu0 0.0
    %615 = vmatprep.subr.mxu0 0.0
    %616 = vmatpush1.msra.mxu0 0.0
    %617 = vmatprep.subr.mxu0 0.0
    %618 = vmatpush1.msra.mxu0 0.0
    %619 = vmatprep.subr.mxu0 0.0
    %620 = vmatpush1.msra.mxu0 0.0
    %621 = vmatprep.subr.mxu0 0.0
    %622 = vmatpush1.msra.mxu0 0.0
    %623 = vmatprep.subr.mxu0 0.0
    %624 = vmatpush1.msra.mxu0 0.0
    %625 = vmatprep.subr.mxu0 0.0
    %626 = vmatpush1.msra.mxu0 0.0
    %627 = vmatprep.subr.mxu0 0.0
    %628 = vmatpush1.msra.mxu0 0.0
    %629 = vmatprep.subr.mxu0 0.0
    %630 = vmatpush1.msra.mxu0 0.0
    %631 = vmatprep.subr.mxu0 0.0
    %632 = vmatpush1.msra.mxu0 0.0
    %633 = vmatprep.subr.mxu0 0.0
    %634 = vmatpush1.msra.mxu0 0.0
    %635 = vmatprep.subr.mxu0 0.0
    %636 = vmatpush1.msra.mxu0 0.0
    %637 = vmatprep.subr.mxu0 0.0
    %638 = vmatpush1.msra.mxu0 0.0
    %639 = vmatprep.subr.mxu0 0.0
    %640 = vmatpush1.msra.mxu0 0.0
    %641 = vmatprep.subr.mxu0 0.0
    %642 = vmatpush1.msra.mxu0 0.0
    %643 = vmatprep.subr.mxu0 0.0
    %644 = vmatpush1.msra.mxu0 0.0
    %645 = vmatprep.subr.mxu0 0.0
    %646 = vmatpush1.msra.mxu0 0.0
    %647 = vmatprep.subr.mxu0 0.0
    %648 = vmatpush1.msra.mxu0 0.0
    %649 = vmatprep.subr.mxu0 0.0
    %650 = vmatpush1.msra.mxu0 0.0
    %651 = vmatprep.subr.mxu0 0.0
    %652 = vmatpush1.msra.mxu0 0.0
    %653 = vmatprep.subr.mxu0 0.0
    %654 = vmatpush1.msra.mxu0 0.0
    %655 = vmatprep.subr.mxu0 0.0
    %656 = vmatpush1.msra.mxu0 0.0
    %657 = vmatprep.subr.mxu0 0.0
    %658 = vmatpush1.msra.mxu0 0.0
    %659 = vmatprep.mubr.f32.mxu0 0.0
    %660 = vmatmul.mubr.f32.gmra.mrb[0].mxu0 %v593
    %v661 = vpop.f32.mrb[0].mxu0
    %v662 = vadd.f32 0.0, %v661
    %v663 = vpop.f32.mrb[0].mxu0
    %664 = vdwg.mxu0
    %vm665 = vcmask 64512
    %v666 = vsel %vm665, %v662, -inf
    %667 = vmax.xlane.f32.xlu0 %v666
    %v668 = vpop.xlane.xlu0 %667
    %v669 = vsub.f32 %v662, %v668
    %v670 = vmul.f32 %v669, 1.442695
    %v671 = vpow.pop %v670
    %v672 = vsel %vm665, %v671, 0.0
    %673 = vadd.xlane.f32.xlu0 %v672
    %v674 = vpop.xlane.xlu0 %673
    %v675 = vrcp.pop %v674
    %v676 = vmul.f32 %v671, %v675
    %v678 = vsel %vm665, %v676, 0
    %680 = vmatprep.subr.mxu0 0.0
    %681 = vmatpush1.msra.mxu0 %v494
    %682 = vmatprep.subr.mxu0 0.0
    %683 = vmatpush1.msra.mxu0 0.0
    %684 = vmatprep.subr.mxu0 0.0
    %685 = vmatpush1.msra.mxu0 0.0
    %686 = vmatprep.subr.mxu0 0.0
    %687 = vmatpush1.msra.mxu0 0.0
    %688 = vmatprep.subr.mxu0 0.0
    %689 = vmatpush1.msra.mxu0 0.0
    %690 = vmatprep.subr.mxu0 0.0
    %691 = vmatpush1.msra.mxu0 0.0
    %692 = vmatprep.subr.mxu0 0.0
    %693 = vmatpush1.msra.mxu0 0.0
    %694 = vmatprep.subr.mxu0 0.0
    %695 = vmatpush1.msra.mxu0 0.0
    %696 = vmatprep.subr.mxu0 0.0
    %697 = vmatpush1.msra.mxu0 0.0
    %698 = vmatprep.subr.mxu0 0.0
    %699 = vmatpush1.msra.mxu0 0.0
    %700 = vmatprep.subr.mxu0 0.0
    %701 = vmatpush1.msra.mxu0 0.0
    %702 = vmatprep.subr.mxu0 0.0
    %703 = vmatpush1.msra.mxu0 0.0
    %704 = vmatprep.subr.mxu0 0.0
    %705 = vmatpush1.msra.mxu0 0.0
    %706 = vmatprep.subr.mxu0 0.0
    %707 = vmatpush1.msra.mxu0 0.0
    %708 = vmatprep.subr.mxu0 0.0
    %709 = vmatpush1.msra.mxu0 0.0
    %710 = vmatprep.subr.mxu0 0.0
    %711 = vmatpush1.msra.mxu0 0.0
    %712 = vmatprep.subr.mxu0 0.0
    %713 = vmatpush1.msra.mxu0 0.0
    %714 = vmatprep.subr.mxu0 0.0
    %715 = vmatpush1.msra.mxu0 0.0
    %716 = vmatprep.subr.mxu0 0.0
    %717 = vmatpush1.msra.mxu0 0.0
    %718 = vmatprep.subr.mxu0 0.0
    %719 = vmatpush1.msra.mxu0 0.0
    %720 = vmatprep.subr.mxu0 0.0
    %721 = vmatpush1.msra.mxu0 0.0
    %722 = vmatprep.subr.mxu0 0.0
    %723 = vmatpush1.msra.mxu0 0.0
    %724 = vmatprep.subr.mxu0 0.0
    %725 = vmatpush1.msra.mxu0 0.0
    %726 = vmatprep.subr.mxu0 0.0
    %727 = vmatpush1.msra.mxu0 0.0
    %728 = vmatprep.subr.mxu0 0.0
    %729 = vmatpush1.msra.mxu0 0.0
    %730 = vmatprep.subr.mxu0 0.0
    %731 = vmatpush1.msra.mxu0 0.0
    %732 = vmatprep.subr.mxu0 0.0
    %733 = vmatpush1.msra.mxu0 0.0
    %734 = vmatprep.subr.mxu0 0.0
    %735 = vmatpush1.msra.mxu0 0.0
    %736 = vmatprep.subr.mxu0 0.0
    %737 = vmatpush1.msra.mxu0 0.0
    %738 = vmatprep.subr.mxu0 0.0
    %739 = vmatpush1.msra.mxu0 0.0
    %740 = vmatprep.subr.mxu0 0.0
    %741 = vmatpush1.msra.mxu0 0.0
    %742 = vmatprep.subr.mxu0 0.0
    %743 = vmatpush1.msra.mxu0 0.0
    %744 = vmatprep.mubr.f32.mxu0 0.0
    %745 = vmatmul.mubr.f32.gmra.mrb[0].mxu0 %v678
    %v746 = vpop.f32.mrb[0].mxu0
    %v747 = vadd.f32 0.0, %v746
    %v748 = vpop.f32.mrb[0].mxu0
    %749 = vdwg.mxu0
    %750 = vrot.lane.b32.xlu0 %v589, 96
    %v751 = vpop.permute.xlu0 %750
    %v752 = vsel %vm510, %v751, 0
    %754 = vmatprep.subr.mxu0 0.0
    %755 = vmatpush1.msra.mxu0 %v277
    %756 = vmatprep.subr.mxu0 0.0
    %757 = vmatpush1.msra.mxu0 %v282
    %758 = vmatprep.subr.mxu0 0.0
    %759 = vmatpush1.msra.mxu0 %v287
    %760 = vmatprep.subr.mxu0 0.0
    %761 = vmatpush1.msra.mxu0 %v292
    %762 = vmatprep.subr.mxu0 0.0
    %763 = vmatpush1.msra.mxu0 0.0
    %764 = vmatprep.subr.mxu0 0.0
    %765 = vmatpush1.msra.mxu0 0.0
    %766 = vmatprep.subr.mxu0 0.0
    %767 = vmatpush1.msra.mxu0 0.0
    %768 = vmatprep.subr.mxu0 0.0
    %769 = vmatpush1.msra.mxu0 0.0
    %770 = vmatprep.subr.mxu0 0.0
    %771 = vmatpush1.msra.mxu0 0.0
    %772 = vmatprep.subr.mxu0 0.0
    %773 = vmatpush1.msra.mxu0 0.0
    %774 = vmatprep.subr.mxu0 0.0
    %775 = vmatpush1.msra.mxu0 0.0
    %776 = vmatprep.subr.mxu0 0.0
    %777 = vmatpush1.msra.mxu0 0.0
    %778 = vmatprep.subr.mxu0 0.0
    %779 = vmatpush1.msra.mxu0 0.0
    %780 = vmatprep.subr.mxu0 0.0
    %781 = vmatpush1.msra.mxu0 0.0
    %782 = vmatprep.subr.mxu0 0.0
    %783 = vmatpush1.msra.mxu0 0.0
    %784 = vmatprep.subr.mxu0 0.0
    %785 = vmatpush1.msra.mxu0 0.0
    %786 = vmatprep.subr.mxu0 0.0
    %787 = vmatpush1.msra.mxu0 0.0
    %788 = vmatprep.subr.mxu0 0.0
    %789 = vmatpush1.msra.mxu0 0.0
    %790 = vmatprep.subr.mxu0 0.0
    %791 = vmatpush1.msra.mxu0 0.0
    %792 = vmatprep.subr.mxu0 0.0
    %793 = vmatpush1.msra.mxu0 0.0
    %794 = vmatprep.subr.mxu0 0.0
    %795 = vmatpush1.msra.mxu0 0.0
    %796 = vmatprep.subr.mxu0 0.0
    %797 = vmatpush1.msra.mxu0 0.0
    %798 = vmatprep.subr.mxu0 0.0
    %799 = vmatpush1.msra.mxu0 0.0
    %800 = vmatprep.subr.mxu0 0.0
    %801 = vmatpush1.msra.mxu0 0.0
    %802 = vmatprep.subr.mxu0 0.0
    %803 = vmatpush1.msra.mxu0 0.0
    %804 = vmatprep.subr.mxu0 0.0
    %805 = vmatpush1.msra.mxu0 0.0
    %806 = vmatprep.subr.mxu0 0.0
    %807 = vmatpush1.msra.mxu0 0.0
    %808 = vmatprep.subr.mxu0 0.0
    %809 = vmatpush1.msra.mxu0 0.0
    %810 = vmatprep.subr.mxu0 0.0
    %811 = vmatpush1.msra.mxu0 0.0
    %812 = vmatprep.subr.mxu0 0.0
    %813 = vmatpush1.msra.mxu0 0.0
    %814 = vmatprep.subr.mxu0 0.0
    %815 = vmatpush1.msra.mxu0 0.0
    %816 = vmatprep.subr.mxu0 0.0
    %817 = vmatpush1.msra.mxu0 0.0
    %818 = vmatprep.mubr.f32.mxu0 0.0
    %819 = vmatmul.mubr.f32.gmra.mrb[0].mxu0 %v752
    %v820 = vpop.f32.mrb[0].mxu0
    %v821 = vadd.f32 0.0, %v820
    %v822 = vpop.f32.mrb[0].mxu0
    %823 = vdwg.mxu0
    %v824 = vsel %vm665, %v821, -inf
    %825 = vmax.xlane.f32.xlu0 %v824
    %v826 = vpop.xlane.xlu0 %825
    %v827 = vsub.f32 %v821, %v826
    %v828 = vmul.f32 %v827, 1.442695
    %v829 = vpow.pop %v828
    %v830 = vsel %vm665, %v829, 0.0
    %831 = vadd.xlane.f32.xlu0 %v830
    %v832 = vpop.xlane.xlu0 %831
    %v833 = vrcp.pop %v832
    %v834 = vmul.f32 %v829, %v833
    %836 = vrot.lane.b32.xlu0 %v494, 96
    %v837 = vpop.permute.xlu0 %836
    %v840 = vsel %vm665, %v834, 0
    %842 = vmatprep.subr.mxu0 0.0
    %843 = vmatpush1.msra.mxu0 %v837
    %844 = vmatprep.subr.mxu0 0.0
    %845 = vmatpush1.msra.mxu0 0.0
    %846 = vmatprep.subr.mxu0 0.0
    %847 = vmatpush1.msra.mxu0 0.0
    %848 = vmatprep.subr.mxu0 0.0
    %849 = vmatpush1.msra.mxu0 0.0
    %850 = vmatprep.subr.mxu0 0.0
    %851 = vmatpush1.msra.mxu0 0.0
    %852 = vmatprep.subr.mxu0 0.0
    %853 = vmatpush1.msra.mxu0 0.0
    %854 = vmatprep.subr.mxu0 0.0
    %855 = vmatpush1.msra.mxu0 0.0
    %856 = vmatprep.subr.mxu0 0.0
    %857 = vmatpush1.msra.mxu0 0.0
    %858 = vmatprep.subr.mxu0 0.0
    %859 = vmatpush1.msra.mxu0 0.0
    %860 = vmatprep.subr.mxu0 0.0
    %861 = vmatpush1.msra.mxu0 0.0
    %862 = vmatprep.subr.mxu0 0.0
    %863 = vmatpush1.msra.mxu0 0.0
    %864 = vmatprep.subr.mxu0 0.0
    %865 = vmatpush1.msra.mxu0 0.0
    %866 = vmatprep.subr.mxu0 0.0
    %867 = vmatpush1.msra.mxu0 0.0
    %868 = vmatprep.subr.mxu0 0.0
    %869 = vmatpush1.msra.mxu0 0.0
    %870 = vmatprep.subr.mxu0 0.0
    %871 = vmatpush1.msra.mxu0 0.0
    %872 = vmatprep.subr.mxu0 0.0
    %873 = vmatpush1.msra.mxu0 0.0
    %874 = vmatprep.subr.mxu0 0.0
    %875 = vmatpush1.msra.mxu0 0.0
    %876 = vmatprep.subr.mxu0 0.0
    %877 = vmatpush1.msra.mxu0 0.0
    %878 = vmatprep.subr.mxu0 0.0
    %879 = vmatpush1.msra.mxu0 0.0
    %880 = vmatprep.subr.mxu0 0.0
    %881 = vmatpush1.msra.mxu0 0.0
    %882 = vmatprep.subr.mxu0 0.0
    %883 = vmatpush1.msra.mxu0 0.0
    %884 = vmatprep.subr.mxu0 0.0
    %885 = vmatpush1.msra.mxu0 0.0
    %886 = vmatprep.subr.mxu0 0.0
    %887 = vmatpush1.msra.mxu0 0.0
    %888 = vmatprep.subr.mxu0 0.0
    %889 = vmatpush1.msra.mxu0 0.0
    %890 = vmatprep.subr.mxu0 0.0
    %891 = vmatpush1.msra.mxu0 0.0
    %892 = vmatprep.subr.mxu0 0.0
    %893 = vmatpush1.msra.mxu0 0.0
    %894 = vmatprep.subr.mxu0 0.0
    %895 = vmatpush1.msra.mxu0 0.0
    %896 = vmatprep.subr.mxu0 0.0
    %897 = vmatpush1.msra.mxu0 0.0
    %898 = vmatprep.subr.mxu0 0.0
    %899 = vmatpush1.msra.mxu0 0.0
    %900 = vmatprep.subr.mxu0 0.0
    %901 = vmatpush1.msra.mxu0 0.0
    %902 = vmatprep.subr.mxu0 0.0
    %903 = vmatpush1.msra.mxu0 0.0
    %904 = vmatprep.subr.mxu0 0.0
    %905 = vmatpush1.msra.mxu0 0.0
    %906 = vmatprep.mubr.f32.mxu0 0.0
    %907 = vmatmul.mubr.f32.gmra.mrb[0].mxu0 %v840
    %v908 = vpop.f32.mrb[0].mxu0
    %v909 = vadd.f32 0.0, %v908
    %v910 = vpop.f32.mrb[0].mxu0
    %911 = vdwg.mxu0
    %912 = vrot.lane.b32.xlu0 %v589, 64
    %v913 = vpop.permute.xlu0 %912
    %v914 = vsel %vm510, %v913, 0
    %916 = vmatprep.subr.mxu0 0.0
    %917 = vmatpush1.msra.mxu0 %v297
    %918 = vmatprep.subr.mxu0 0.0
    %919 = vmatpush1.msra.mxu0 %v302
    %920 = vmatprep.subr.mxu0 0.0
    %921 = vmatpush1.msra.mxu0 %v307
    %922 = vmatprep.subr.mxu0 0.0
    %923 = vmatpush1.msra.mxu0 %v312
    %924 = vmatprep.subr.mxu0 0.0
    %925 = vmatpush1.msra.mxu0 0.0
    %926 = vmatprep.subr.mxu0 0.0
    %927 = vmatpush1.msra.mxu0 0.0
    %928 = vmatprep.subr.mxu0 0.0
    %929 = vmatpush1.msra.mxu0 0.0
    %930 = vmatprep.subr.mxu0 0.0
    %931 = vmatpush1.msra.mxu0 0.0
    %932 = vmatprep.subr.mxu0 0.0
    %933 = vmatpush1.msra.mxu0 0.0
    %934 = vmatprep.subr.mxu0 0.0
    %935 = vmatpush1.msra.mxu0 0.0
    %936 = vmatprep.subr.mxu0 0.0
    %937 = vmatpush1.msra.mxu0 0.0
    %938 = vmatprep.subr.mxu0 0.0
    %939 = vmatpush1.msra.mxu0 0.0
    %940 = vmatprep.subr.mxu0 0.0
    %941 = vmatpush1.msra.mxu0 0.0
    %942 = vmatprep.subr.mxu0 0.0
    %943 = vmatpush1.msra.mxu0 0.0
    %944 = vmatprep.subr.mxu0 0.0
    %945 = vmatpush1.msra.mxu0 0.0
    %946 = vmatprep.subr.mxu0 0.0
    %947 = vmatpush1.msra.mxu0 0.0
    %948 = vmatprep.subr.mxu0 0.0
    %949 = vmatpush1.msra.mxu0 0.0
    %950 = vmatprep.subr.mxu0 0.0
    %951 = vmatpush1.msra.mxu0 0.0
    %952 = vmatprep.subr.mxu0 0.0
    %953 = vmatpush1.msra.mxu0 0.0
    %954 = vmatprep.subr.mxu0 0.0
    %955 = vmatpush1.msra.mxu0 0.0
    %956 = vmatprep.subr.mxu0 0.0
    %957 = vmatpush1.msra.mxu0 0.0
    %958 = vmatprep.subr.mxu0 0.0
    %959 = vmatpush1.msra.mxu0 0.0
    %960 = vmatprep.subr.mxu0 0.0
    %961 = vmatpush1.msra.mxu0 0.0
    %962 = vmatprep.subr.mxu0 0.0
    %963 = vmatpush1.msra.mxu0 0.0
    %964 = vmatprep.subr.mxu0 0.0
    %965 = vmatpush1.msra.mxu0 0.0
    %966 = vmatprep.subr.mxu0 0.0
    %967 = vmatpush1.msra.mxu0 0.0
    %968 = vmatprep.subr.mxu0 0.0
    %969 = vmatpush1.msra.mxu0 0.0
    %970 = vmatprep.subr.mxu0 0.0
    %971 = vmatpush1.msra.mxu0 0.0
    %972 = vmatprep.subr.mxu0 0.0
    %973 = vmatpush1.msra.mxu0 0.0
    %974 = vmatprep.subr.mxu0 0.0
    %975 = vmatpush1.msra.mxu0 0.0
    %976 = vmatprep.subr.mxu0 0.0
    %977 = vmatpush1.msra.mxu0 0.0
    %978 = vmatprep.subr.mxu0 0.0
    %979 = vmatpush1.msra.mxu0 0.0
    %980 = vmatprep.mubr.f32.mxu0 0.0
    %981 = vmatmul.mubr.f32.gmra.mrb[0].mxu0 %v914
    %v982 = vpop.f32.mrb[0].mxu0
    %v983 = vadd.f32 0.0, %v982
    %v984 = vpop.f32.mrb[0].mxu0
    %985 = vdwg.mxu0
    %v986 = vsel %vm665, %v983, -inf
    %987 = vmax.xlane.f32.xlu0 %v986
    %v988 = vpop.xlane.xlu0 %987
    %v989 = vsub.f32 %v983, %v988
    %v990 = vmul.f32 %v989, 1.442695
    %v991 = vpow.pop %v990
    %v992 = vsel %vm665, %v991, 0.0
    %993 = vadd.xlane.f32.xlu0 %v992
    %v994 = vpop.xlane.xlu0 %993
    %v995 = vrcp.pop %v994
    %v996 = vmul.f32 %v991, %v995
    %997 = vrot.lane.b32.xlu0 %v494, 64
    %v998 = vpop.permute.xlu0 %997
    %v1001 = vsel %vm665, %v996, 0
    %1003 = vmatprep.subr.mxu0 0.0
    %1004 = vmatpush1.msra.mxu0 %v998
    %1005 = vmatprep.subr.mxu0 0.0
    %1006 = vmatpush1.msra.mxu0 0.0
    %1007 = vmatprep.subr.mxu0 0.0
    %1008 = vmatpush1.msra.mxu0 0.0
    %1009 = vmatprep.subr.mxu0 0.0
    %1010 = vmatpush1.msra.mxu0 0.0
    %1011 = vmatprep.subr.mxu0 0.0
    %1012 = vmatpush1.msra.mxu0 0.0
    %1013 = vmatprep.subr.mxu0 0.0
    %1014 = vmatpush1.msra.mxu0 0.0
    %1015 = vmatprep.subr.mxu0 0.0
    %1016 = vmatpush1.msra.mxu0 0.0
    %1017 = vmatprep.subr.mxu0 0.0
    %1018 = vmatpush1.msra.mxu0 0.0
    %1019 = vmatprep.subr.mxu0 0.0
    %1020 = vmatpush1.msra.mxu0 0.0
    %1021 = vmatprep.subr.mxu0 0.0
    %1022 = vmatpush1.msra.mxu0 0.0
    %1023 = vmatprep.subr.mxu0 0.0
    %1024 = vmatpush1.msra.mxu0 0.0
    %1025 = vmatprep.subr.mxu0 0.0
    %1026 = vmatpush1.msra.mxu0 0.0
    %1027 = vmatprep.subr.mxu0 0.0
    %1028 = vmatpush1.msra.mxu0 0.0
    %1029 = vmatprep.subr.mxu0 0.0
    %1030 = vmatpush1.msra.mxu0 0.0
    %1031 = vmatprep.subr.mxu0 0.0
    %1032 = vmatpush1.msra.mxu0 0.0
    %1033 = vmatprep.subr.mxu0 0.0
    %1034 = vmatpush1.msra.mxu0 0.0
    %1035 = vmatprep.subr.mxu0 0.0
    %1036 = vmatpush1.msra.mxu0 0.0
    %1037 = vmatprep.subr.mxu0 0.0
    %1038 = vmatpush1.msra.mxu0 0.0
    %1039 = vmatprep.subr.mxu0 0.0
    %1040 = vmatpush1.msra.mxu0 0.0
    %1041 = vmatprep.subr.mxu0 0.0
    %1042 = vmatpush1.msra.mxu0 0.0
    %1043 = vmatprep.subr.mxu0 0.0
    %1044 = vmatpush1.msra.mxu0 0.0
    %1045 = vmatprep.subr.mxu0 0.0
    %1046 = vmatpush1.msra.mxu0 0.0
    %1047 = vmatprep.subr.mxu0 0.0
    %1048 = vmatpush1.msra.mxu0 0.0
    %1049 = vmatprep.subr.mxu0 0.0
    %1050 = vmatpush1.msra.mxu0 0.0
    %1051 = vmatprep.subr.mxu0 0.0
    %1052 = vmatpush1.msra.mxu0 0.0
    %1053 = vmatprep.subr.mxu0 0.0
    %1054 = vmatpush1.msra.mxu0 0.0
    %1055 = vmatprep.subr.mxu0 0.0
    %1056 = vmatpush1.msra.mxu0 0.0
    %1057 = vmatprep.subr.mxu0 0.0
    %1058 = vmatpush1.msra.mxu0 0.0
    %1059 = vmatprep.subr.mxu0 0.0
    %1060 = vmatpush1.msra.mxu0 0.0
    %1061 = vmatprep.subr.mxu0 0.0
    %1062 = vmatpush1.msra.mxu0 0.0
    %1063 = vmatprep.subr.mxu0 0.0
    %1064 = vmatpush1.msra.mxu0 0.0
    %1065 = vmatprep.subr.mxu0 0.0
    %1066 = vmatpush1.msra.mxu0 0.0
    %1067 = vmatprep.mubr.f32.mxu0 0.0
    %1068 = vmatmul.mubr.f32.gmra.mrb[0].mxu0 %v1001
    %v1069 = vpop.f32.mrb[0].mxu0
    %v1070 = vadd.f32 0.0, %v1069
    %v1071 = vpop.f32.mrb[0].mxu0
    %1072 = vdwg.mxu0
    %1073 = vrot.lane.b32.xlu0 %v589, 32
    %v1074 = vpop.permute.xlu0 %1073
    %v1075 = vsel %vm510, %v1074, 0
    %1077 = vmatprep.subr.mxu0 0.0
    %1078 = vmatpush1.msra.mxu0 %v317
    %1079 = vmatprep.subr.mxu0 0.0
    %1080 = vmatpush1.msra.mxu0 %v322
    %1081 = vmatprep.subr.mxu0 0.0
    %1082 = vmatpush1.msra.mxu0 %v327
    %1083 = vmatprep.subr.mxu0 0.0
    %1084 = vmatpush1.msra.mxu0 %v332
    %1085 = vmatprep.subr.mxu0 0.0
    %1086 = vmatpush1.msra.mxu0 0.0
    %1087 = vmatprep.subr.mxu0 0.0
    %1088 = vmatpush1.msra.mxu0 0.0
    %1089 = vmatprep.subr.mxu0 0.0
    %1090 = vmatpush1.msra.mxu0 0.0
    %1091 = vmatprep.subr.mxu0 0.0
    %1092 = vmatpush1.msra.mxu0 0.0
    %1093 = vmatprep.subr.mxu0 0.0
    %1094 = vmatpush1.msra.mxu0 0.0
    %1095 = vmatprep.subr.mxu0 0.0
    %1096 = vmatpush1.msra.mxu0 0.0
    %1097 = vmatprep.subr.mxu0 0.0
    %1098 = vmatpush1.msra.mxu0 0.0
    %1099 = vmatprep.subr.mxu0 0.0
    %1100 = vmatpush1.msra.mxu0 0.0
    %1101 = vmatprep.subr.mxu0 0.0
    %1102 = vmatpush1.msra.mxu0 0.0
    %1103 = vmatprep.subr.mxu0 0.0
    %1104 = vmatpush1.msra.mxu0 0.0
    %1105 = vmatprep.subr.mxu0 0.0
    %1106 = vmatpush1.msra.mxu0 0.0
    %1107 = vmatprep.subr.mxu0 0.0
    %1108 = vmatpush1.msra.mxu0 0.0
    %1109 = vmatprep.subr.mxu0 0.0
    %1110 = vmatpush1.msra.mxu0 0.0
    %1111 = vmatprep.subr.mxu0 0.0
    %1112 = vmatpush1.msra.mxu0 0.0
    %1113 = vmatprep.subr.mxu0 0.0
    %1114 = vmatpush1.msra.mxu0 0.0
    %1115 = vmatprep.subr.mxu0 0.0
    %1116 = vmatpush1.msra.mxu0 0.0
    %1117 = vmatprep.subr.mxu0 0.0
    %1118 = vmatpush1.msra.mxu0 0.0
    %1119 = vmatprep.subr.mxu0 0.0
    %1120 = vmatpush1.msra.mxu0 0.0
    %1121 = vmatprep.subr.mxu0 0.0
    %1122 = vmatpush1.msra.mxu0 0.0
    %1123 = vmatprep.subr.mxu0 0.0
    %1124 = vmatpush1.msra.mxu0 0.0
    %1125 = vmatprep.subr.mxu0 0.0
    %1126 = vmatpush1.msra.mxu0 0.0
    %1127 = vmatprep.subr.mxu0 0.0
    %1128 = vmatpush1.msra.mxu0 0.0
    %1129 = vmatprep.subr.mxu0 0.0
    %1130 = vmatpush1.msra.mxu0 0.0
    %1131 = vmatprep.subr.mxu0 0.0
    %1132 = vmatpush1.msra.mxu0 0.0
    %1133 = vmatprep.subr.mxu0 0.0
    %1134 = vmatpush1.msra.mxu0 0.0
    %1135 = vmatprep.subr.mxu0 0.0
    %1136 = vmatpush1.msra.mxu0 0.0
    %1137 = vmatprep.subr.mxu0 0.0
    %1138 = vmatpush1.msra.mxu0 0.0
    %1139 = vmatprep.subr.mxu0 0.0
    %1140 = vmatpush1.msra.mxu0 0.0
    %1141 = vmatprep.mubr.f32.mxu0 0.0
    %1142 = vmatmul.mubr.f32.gmra.mrb[0].mxu0 %v1075
    %v1143 = vpop.f32.mrb[0].mxu0
    %v1144 = vadd.f32 0.0, %v1143
    %v1145 = vpop.f32.mrb[0].mxu0
    %1146 = vdwg.mxu0
    %v1147 = vsel %vm665, %v1144, -inf
    %1148 = vmax.xlane.f32.xlu0 %v1147
    %v1149 = vpop.xlane.xlu0 %1148
    %v1150 = vsub.f32 %v1144, %v1149
    %v1151 = vmul.f32 %v1150, 1.442695
    %v1152 = vpow.pop %v1151
    %v1153 = vsel %vm665, %v1152, 0.0
    %1154 = vadd.xlane.f32.xlu0 %v1153
    %v1155 = vpop.xlane.xlu0 %1154
    %v1156 = vrcp.pop %v1155
    %v1157 = vmul.f32 %v1152, %v1156
    %1158 = vrot.lane.b32.xlu0 %v494, 32
    %v1159 = vpop.permute.xlu0 %1158
    %v1162 = vsel %vm665, %v1157, 0
    %1164 = vmatprep.subr.mxu0 0.0
    %1165 = vmatpush1.msra.mxu0 %v1159
    %1166 = vmatprep.subr.mxu0 0.0
    %1167 = vmatpush1.msra.mxu0 0.0
    %1168 = vmatprep.subr.mxu0 0.0
    %1169 = vmatpush1.msra.mxu0 0.0
    %1170 = vmatprep.subr.mxu0 0.0
    %1171 = vmatpush1.msra.mxu0 0.0
    %1172 = vmatprep.subr.mxu0 0.0
    %1173 = vmatpush1.msra.mxu0 0.0
    %1174 = vmatprep.subr.mxu0 0.0
    %1175 = vmatpush1.msra.mxu0 0.0
    %1176 = vmatprep.subr.mxu0 0.0
    %1177 = vmatpush1.msra.mxu0 0.0
    %1178 = vmatprep.subr.mxu0 0.0
    %1179 = vmatpush1.msra.mxu0 0.0
    %1180 = vmatprep.subr.mxu0 0.0
    %1181 = vmatpush1.msra.mxu0 0.0
    %1182 = vmatprep.subr.mxu0 0.0
    %1183 = vmatpush1.msra.mxu0 0.0
    %1184 = vmatprep.subr.mxu0 0.0
    %1185 = vmatpush1.msra.mxu0 0.0
    %1186 = vmatprep.subr.mxu0 0.0
    %1187 = vmatpush1.msra.mxu0 0.0
    %1188 = vmatprep.subr.mxu0 0.0
    %1189 = vmatpush1.msra.mxu0 0.0
    %1190 = vmatprep.subr.mxu0 0.0
    %1191 = vmatpush1.msra.mxu0 0.0
    %1192 = vmatprep.subr.mxu0 0.0
    %1193 = vmatpush1.msra.mxu0 0.0
    %1194 = vmatprep.subr.mxu0 0.0
    %1195 = vmatpush1.msra.mxu0 0.0
    %1196 = vmatprep.subr.mxu0 0.0
    %1197 = vmatpush1.msra.mxu0 0.0
    %1198 = vmatprep.subr.mxu0 0.0
    %1199 = vmatpush1.msra.mxu0 0.0
    %1200 = vmatprep.subr.mxu0 0.0
    %1201 = vmatpush1.msra.mxu0 0.0
    %1202 = vmatprep.subr.mxu0 0.0
    %1203 = vmatpush1.msra.mxu0 0.0
    %1204 = vmatprep.subr.mxu0 0.0
    %1205 = vmatpush1.msra.mxu0 0.0
    %1206 = vmatprep.subr.mxu0 0.0
    %1207 = vmatpush1.msra.mxu0 0.0
    %1208 = vmatprep.subr.mxu0 0.0
    %1209 = vmatpush1.msra.mxu0 0.0
    %1210 = vmatprep.subr.mxu0 0.0
    %1211 = vmatpush1.msra.mxu0 0.0
    %1212 = vmatprep.subr.mxu0 0.0
    %1213 = vmatpush1.msra.mxu0 0.0
    %1214 = vmatprep.subr.mxu0 0.0
    %1215 = vmatpush1.msra.mxu0 0.0
    %1216 = vmatprep.subr.mxu0 0.0
    %1217 = vmatpush1.msra.mxu0 0.0
    %1218 = vmatprep.subr.mxu0 0.0
    %1219 = vmatpush1.msra.mxu0 0.0
    %1220 = vmatprep.subr.mxu0 0.0
    %1221 = vmatpush1.msra.mxu0 0.0
    %1222 = vmatprep.subr.mxu0 0.0
    %1223 = vmatpush1.msra.mxu0 0.0
    %1224 = vmatprep.subr.mxu0 0.0
    %1225 = vmatpush1.msra.mxu0 0.0
    %1226 = vmatprep.subr.mxu0 0.0
    %1227 = vmatpush1.msra.mxu0 0.0
    %1228 = vmatprep.mubr.f32.mxu0 0.0
    %1229 = vmatmul.mubr.f32.gmra.mrb[0].mxu0 %v1162
    %v1230 = vpop.f32.mrb[0].mxu0
    %v1231 = vadd.f32 0.0, %v1230
    %v1232 = vpop.f32.mrb[0].mxu0
    %1233 = vdwg.mxu0
    %1235 = vrot.lane.b32.xlu0 %v909, 32
    %v1236 = vpop.permute.xlu0 %1235
    %1239 = vrot.lane.b32.xlu0 %v1070, 64
    %v1240 = vpop.permute.xlu0 %1239
    %1243 = vrot.lane.b32.xlu0 %v1231, 96
    %v1244 = vpop.permute.xlu0 %1243
    %v1246 = vsel %vm510, %v747, %v1236
    %v1247 = vsel %vm512, %v1246, %v1240
    %v1248 = vsel %vm514, %v1247, %v1244
    %v1249 = vadd.f32 %v1248, %v515
    %1250 = vmatprep.subr.mxu0 0.0
    %1251 = vmatpush1.msra.mxu0 %v42
    %1252 = vmatprep.subr.mxu0 0.0
    %1253 = vmatpush1.msra.mxu0 %v43
    %1254 = vmatprep.subr.mxu0 0.0
    %1255 = vmatpush1.msra.mxu0 %v44
    %1256 = vmatprep.subr.mxu0 0.0
    %1257 = vmatpush1.msra.mxu0 %v45
    %1258 = vmatprep.subr.mxu0 0.0
    %1259 = vmatpush1.msra.mxu0 %v46
    %1260 = vmatprep.subr.mxu0 0.0
    %1261 = vmatpush1.msra.mxu0 %v47
    %1262 = vmatprep.subr.mxu0 0.0
    %1263 = vmatpush1.msra.mxu0 %v48
    %1264 = vmatprep.subr.mxu0 0.0
    %1265 = vmatpush1.msra.mxu0 %v49
    %1266 = vmatprep.subr.mxu0 0.0
    %1267 = vmatpush1.msra.mxu0 %v50
    %1268 = vmatprep.subr.mxu0 0.0
    %1269 = vmatpush1.msra.mxu0 %v51
    %1270 = vmatprep.subr.mxu0 0.0
    %1271 = vmatpush1.msra.mxu0 %v52
    %1272 = vmatprep.subr.mxu0 0.0
    %1273 = vmatpush1.msra.mxu0 %v53
    %1274 = vmatprep.subr.mxu0 0.0
    %1275 = vmatpush1.msra.mxu0 %v54
    %1276 = vmatprep.subr.mxu0 0.0
    %1277 = vmatpush1.msra.mxu0 %v55
    %1278 = vmatprep.subr.mxu0 0.0
    %1279 = vmatpush1.msra.mxu0 %v56
    %1280 = vmatprep.subr.mxu0 0.0
    %1281 = vmatpush1.msra.mxu0 %v57
    %1282 = vmatprep.subr.mxu0 0.0
    %1283 = vmatpush1.msra.mxu0 0.0
    %1284 = vmatprep.subr.mxu0 0.0
    %1285 = vmatpush1.msra.mxu0 0.0
    %1286 = vmatprep.subr.mxu0 0.0
    %1287 = vmatpush1.msra.mxu0 0.0
    %1288 = vmatprep.subr.mxu0 0.0
    %1289 = vmatpush1.msra.mxu0 0.0
    %1290 = vmatprep.subr.mxu0 0.0
    %1291 = vmatpush1.msra.mxu0 0.0
    %1292 = vmatprep.subr.mxu0 0.0
    %1293 = vmatpush1.msra.mxu0 0.0
    %1294 = vmatprep.subr.mxu0 0.0
    %1295 = vmatpush1.msra.mxu0 0.0
    %1296 = vmatprep.subr.mxu0 0.0
    %1297 = vmatpush1.msra.mxu0 0.0
    %1298 = vmatprep.subr.mxu0 0.0
    %1299 = vmatpush1.msra.mxu0 0.0
    %1300 = vmatprep.subr.mxu0 0.0
    %1301 = vmatpush1.msra.mxu0 0.0
    %1302 = vmatprep.subr.mxu0 0.0
    %1303 = vmatpush1.msra.mxu0 0.0
    %1304 = vmatprep.subr.mxu0 0.0
    %1305 = vmatpush1.msra.mxu0 0.0
    %1306 = vmatprep.subr.mxu0 0.0
    %1307 = vmatpush1.msra.mxu0 0.0
    %1308 = vmatprep.subr.mxu0 0.0
    %1309 = vmatpush1.msra.mxu0 0.0
    %1310 = vmatprep.subr.mxu0 0.0
    %1311 = vmatpush1.msra.mxu0 0.0
    %1312 = vmatprep.subr.mxu0 0.0
    %1313 = vmatpush1.msra.mxu0 0.0
    %1314 = vmatprep.mubr.f32.mxu0 0.0
    %1315 = vmatmul.mubr.f32.gmra.mrb[0].mxu0 %v1249
    %v1316 = vpop.f32.mrb[0].mxu0
    %v1317 = vadd.f32 0.0, %v1316
    %v1318 = vpop.f32.mrb[0].mxu0
    %1319 = vdwg.mxu0
    %v1320 = vsub.f32 %v1249, %v1317
    %v1321 = vmul.f32 %v1320, %v1320
    %1322 = vmatprep.subr.mxu0 0.0
    %1323 = vmatpush1.msra.mxu0 %v42
    %1324 = vmatprep.subr.mxu0 0.0
    %1325 = vmatpush1.msra.mxu0 %v43
    %1326 = vmatprep.subr.mxu0 0.0
    %1327 = vmatpush1.msra.mxu0 %v44
    %1328 = vmatprep.subr.mxu0 0.0
    %1329 = vmatpush1.msra.mxu0 %v45
    %1330 = vmatprep.subr.mxu0 0.0
    %1331 = vmatpush1.msra.mxu0 %v46
    %1332 = vmatprep.subr.mxu0 0.0
    %1333 = vmatpush1.msra.mxu0 %v47
    %1334 = vmatprep.subr.mxu0 0.0
    %1335 = vmatpush1.msra.mxu0 %v48
    %1336 = vmatprep.subr.mxu0 0.0
    %1337 = vmatpush1.msra.mxu0 %v49
    %1338 = vmatprep.subr.mxu0 0.0
    %1339 = vmatpush1.msra.mxu0 %v50
    %1340 = vmatprep.subr.mxu0 0.0
    %1341 = vmatpush1.msra.mxu0 %v51
    %1342 = vmatprep.subr.mxu0 0.0
    %1343 = vmatpush1.msra.mxu0 %v52
    %1344 = vmatprep.subr.mxu0 0.0
    %1345 = vmatpush1.msra.mxu0 %v53
    %1346 = vmatprep.subr.mxu0 0.0
    %1347 = vmatpush1.msra.mxu0 %v54
    %1348 = vmatprep.subr.mxu0 0.0
    %1349 = vmatpush1.msra.mxu0 %v55
    %1350 = vmatprep.subr.mxu0 0.0
    %1351 = vmatpush1.msra.mxu0 %v56
    %1352 = vmatprep.subr.mxu0 0.0
    %1353 = vmatpush1.msra.mxu0 %v57
    %1354 = vmatprep.subr.mxu0 0.0
    %1355 = vmatpush1.msra.mxu0 0.0
    %1356 = vmatprep.subr.mxu0 0.0
    %1357 = vmatpush1.msra.mxu0 0.0
    %1358 = vmatprep.subr.mxu0 0.0
    %1359 = vmatpush1.msra.mxu0 0.0
    %1360 = vmatprep.subr.mxu0 0.0
    %1361 = vmatpush1.msra.mxu0 0.0
    %1362 = vmatprep.subr.mxu0 0.0
    %1363 = vmatpush1.msra.mxu0 0.0
    %1364 = vmatprep.subr.mxu0 0.0
    %1365 = vmatpush1.msra.mxu0 0.0
    %1366 = vmatprep.subr.mxu0 0.0
    %1367 = vmatpush1.msra.mxu0 0.0
    %1368 = vmatprep.subr.mxu0 0.0
    %1369 = vmatpush1.msra.mxu0 0.0
    %1370 = vmatprep.subr.mxu0 0.0
    %1371 = vmatpush1.msra.mxu0 0.0
    %1372 = vmatprep.subr.mxu0 0.0
    %1373 = vmatpush1.msra.mxu0 0.0
    %1374 = vmatprep.subr.mxu0 0.0
    %1375 = vmatpush1.msra.mxu0 0.0
    %1376 = vmatprep.subr.mxu0 0.0
    %1377 = vmatpush1.msra.mxu0 0.0
    %1378 = vmatprep.subr.mxu0 0.0
    %1379 = vmatpush1.msra.mxu0 0.0
    %1380 = vmatprep.subr.mxu0 0.0
    %1381 = vmatpush1.msra.mxu0 0.0
    %1382 = vmatprep.subr.mxu0 0.0
    %1383 = vmatpush1.msra.mxu0 0.0
    %1384 = vmatprep.subr.mxu0 0.0
    %1385 = vmatpush1.msra.mxu0 0.0
    %1386 = vmatprep.mubr.f32.mxu0 0.0
    %1387 = vmatmul.mubr.f32.gmra.mrb[0].mxu0 %v1321
    %v1388 = vpop.f32.mrb[0].mxu0
    %v1389 = vadd.f32 1e-05, %v1388
    %v1390 = vpop.f32.mrb[0].mxu0
    %1391 = vdwg.mxu0
    %v1392 = vrsqrt.pop %v1389
    %v1393 = vmul.f32 %v1389, %v1392
    %vm1394 = vcmp.eq.f32.partialorder %v1389, inf
    %v1395 = vsel %vm1394, %v1389, %v1393
    %vm1396 = vcmp.eq.f32.partialorder %v1389, 0.0
    %v1397 = vand.u32 %v1389, 2147483648
    %v1398 = vsel %vm1396, %v1397, %v1395
    %v1399 = vrcp.pop %v1398
    %v1400 = vmul.f32 %v1320, %v1399
    %v1401 = vlaneseq
    %v1402 = vshrl.u32 %v1401, 7
    %v1403 = vsub.s32 0, %v1402
    %v1404 = vrot.slane %v499, %v1403
    %v1405 = vmul.f32 %v1400, %v1404
    %v1406 = vlaneseq
    %v1407 = vshrl.u32 %v1406, 7
    %v1408 = vsub.s32 1, %v1407
    %v1409 = vrot.slane %v499, %v1408
    %v1410 = vadd.f32 %v1405, %v1409
    %s1411 = scalar_lea.vmem [#allocation2], 128
    %v1412 = vld [vmem:[%s1411] sm:$0xff]
    %v1413 = vld [vmem:[%s1411 + $0x8] sm:$0xff]
    %v1414 = vld [vmem:[%s1411 + $0x10] sm:$0xff]
    %v1415 = vld [vmem:[%s1411 + $0x18] sm:$0xff]
    %v1416 = vld [vmem:[%s1411 + $0x20] sm:$0xff]
    %v1417 = vld [vmem:[%s1411 + $0x28] sm:$0xff]
    %v1418 = vld [vmem:[%s1411 + $0x30] sm:$0xff]
    %v1419 = vld [vmem:[%s1411 + $0x38] sm:$0xff]
    %v1420 = vld [vmem:[%s1411 + $0x40] sm:$0xff]
    %v1421 = vld [vmem:[%s1411 + $0x48] sm:$0xff]
    %v1422 = vld [vmem:[%s1411 + $0x50] sm:$0xff]
    %v1423 = vld [vmem:[%s1411 + $0x58] sm:$0xff]
    %v1424 = vld [vmem:[%s1411 + $0x60] sm:$0xff]
    %v1425 = vld [vmem:[%s1411 + $0x68] sm:$0xff]
    %v1426 = vld [vmem:[%s1411 + $0x70] sm:$0xff]
    %v1427 = vld [vmem:[%s1411 + $0x78] sm:$0xff]
    %v1428 = vlaneseq
    %v1429 = vshrl.u32 %v1428, 7
    %v1430 = vsub.s32 4, %v1429
    %v1431 = vrot.slane %v499, %v1430
    %1432 = vmatprep.subr.mxu0 0.0
    %1433 = vmatpush1.msra.mxu0 %v1412
    %1434 = vmatprep.subr.mxu0 0.0
    %1435 = vmatpush1.msra.mxu0 %v1413
    %1436 = vmatprep.subr.mxu0 0.0
    %1437 = vmatpush1.msra.mxu0 %v1414
    %1438 = vmatprep.subr.mxu0 0.0
    %1439 = vmatpush1.msra.mxu0 %v1415
    %1440 = vmatprep.subr.mxu0 0.0
    %1441 = vmatpush1.msra.mxu0 %v1416
    %1442 = vmatprep.subr.mxu0 0.0
    %1443 = vmatpush1.msra.mxu0 %v1417
    %1444 = vmatprep.subr.mxu0 0.0
    %1445 = vmatpush1.msra.mxu0 %v1418
    %1446 = vmatprep.subr.mxu0 0.0
    %1447 = vmatpush1.msra.mxu0 %v1419
    %1448 = vmatprep.subr.mxu0 0.0
    %1449 = vmatpush1.msra.mxu0 %v1420
    %1450 = vmatprep.subr.mxu0 0.0
    %1451 = vmatpush1.msra.mxu0 %v1421
    %1452 = vmatprep.subr.mxu0 0.0
    %1453 = vmatpush1.msra.mxu0 %v1422
    %1454 = vmatprep.subr.mxu0 0.0
    %1455 = vmatpush1.msra.mxu0 %v1423
    %1456 = vmatprep.subr.mxu0 0.0
    %1457 = vmatpush1.msra.mxu0 %v1424
    %1458 = vmatprep.subr.mxu0 0.0
    %1459 = vmatpush1.msra.mxu0 %v1425
    %1460 = vmatprep.subr.mxu0 0.0
    %1461 = vmatpush1.msra.mxu0 %v1426
    %1462 = vmatprep.subr.mxu0 0.0
    %1463 = vmatpush1.msra.mxu0 %v1427
    %1464 = vmatprep.subr.mxu0 0.0
    %1465 = vmatpush1.msra.mxu0 0.0
    %1466 = vmatprep.subr.mxu0 0.0
    %1467 = vmatpush1.msra.mxu0 0.0
    %1468 = vmatprep.subr.mxu0 0.0
    %1469 = vmatpush1.msra.mxu0 0.0
    %1470 = vmatprep.subr.mxu0 0.0
    %1471 = vmatpush1.msra.mxu0 0.0
    %1472 = vmatprep.subr.mxu0 0.0
    %1473 = vmatpush1.msra.mxu0 0.0
    %1474 = vmatprep.subr.mxu0 0.0
    %1475 = vmatpush1.msra.mxu0 0.0
    %1476 = vmatprep.subr.mxu0 0.0
    %1477 = vmatpush1.msra.mxu0 0.0
    %1478 = vmatprep.subr.mxu0 0.0
    %1479 = vmatpush1.msra.mxu0 0.0
    %1480 = vmatprep.subr.mxu0 0.0
    %1481 = vmatpush1.msra.mxu0 0.0
    %1482 = vmatprep.subr.mxu0 0.0
    %1483 = vmatpush1.msra.mxu0 0.0
    %1484 = vmatprep.subr.mxu0 0.0
    %1485 = vmatpush1.msra.mxu0 0.0
    %1486 = vmatprep.subr.mxu0 0.0
    %1487 = vmatpush1.msra.mxu0 0.0
    %1488 = vmatprep.subr.mxu0 0.0
    %1489 = vmatpush1.msra.mxu0 0.0
    %1490 = vmatprep.subr.mxu0 0.0
    %1491 = vmatpush1.msra.mxu0 0.0
    %1492 = vmatprep.subr.mxu0 0.0
    %1493 = vmatpush1.msra.mxu0 0.0
    %1494 = vmatprep.subr.mxu0 0.0
    %1495 = vmatpush1.msra.mxu0 0.0
    %1496 = vmatprep.mubr.f32.mxu0 0.0
    %1497 = vmatmul.mubr.f32.gmra.mrb[0].mxu0 %v1410
    %v1498 = vpop.f32.mrb[0].mxu0
    %v1499 = vadd.f32 %v1431, %v1498
    %v1500 = vpop.f32.mrb[0].mxu0
    %1501 = vdwg.mxu0
    %v1502 = vmax.f32 %v1499, 0.0
    %s1503 = scalar_lea.vmem [#allocation2], 256
    %v1504 = vld [vmem:[%s1503] sm:$0xff]
    %v1505 = vld [vmem:[%s1503 + $0x8] sm:$0xff]
    %v1506 = vld [vmem:[%s1503 + $0x10] sm:$0xff]
    %v1507 = vld [vmem:[%s1503 + $0x18] sm:$0xff]
    %v1508 = vld [vmem:[%s1503 + $0x20] sm:$0xff]
    %v1509 = vld [vmem:[%s1503 + $0x28] sm:$0xff]
    %v1510 = vld [vmem:[%s1503 + $0x30] sm:$0xff]
    %v1511 = vld [vmem:[%s1503 + $0x38] sm:$0xff]
    %v1512 = vld [vmem:[%s1503 + $0x40] sm:$0xff]
    %v1513 = vld [vmem:[%s1503 + $0x48] sm:$0xff]
    %v1514 = vld [vmem:[%s1503 + $0x50] sm:$0xff]
    %v1515 = vld [vmem:[%s1503 + $0x58] sm:$0xff]
    %v1516 = vld [vmem:[%s1503 + $0x60] sm:$0xff]
    %v1517 = vld [vmem:[%s1503 + $0x68] sm:$0xff]
    %v1518 = vld [vmem:[%s1503 + $0x70] sm:$0xff]
    %v1519 = vld [vmem:[%s1503 + $0x78] sm:$0xff]
    %v1520 = vlaneseq
    %v1521 = vshrl.u32 %v1520, 7
    %v1522 = vsub.s32 5, %v1521
    %v1523 = vrot.slane %v499, %v1522
    %1524 = vmatprep.subr.mxu0 0.0
    %1525 = vmatpush1.msra.mxu0 %v1504
    %1526 = vmatprep.subr.mxu0 0.0
    %1527 = vmatpush1.msra.mxu0 %v1505
    %1528 = vmatprep.subr.mxu0 0.0
    %1529 = vmatpush1.msra.mxu0 %v1506
    %1530 = vmatprep.subr.mxu0 0.0
    %1531 = vmatpush1.msra.mxu0 %v1507
    %1532 = vmatprep.subr.mxu0 0.0
    %1533 = vmatpush1.msra.mxu0 %v1508
    %1534 = vmatprep.subr.mxu0 0.0
    %1535 = vmatpush1.msra.mxu0 %v1509
    %1536 = vmatprep.subr.mxu0 0.0
    %1537 = vmatpush1.msra.mxu0 %v1510
    %1538 = vmatprep.subr.mxu0 0.0
    %1539 = vmatpush1.msra.mxu0 %v1511
    %1540 = vmatprep.subr.mxu0 0.0
    %1541 = vmatpush1.msra.mxu0 %v1512
    %1542 = vmatprep.subr.mxu0 0.0
    %1543 = vmatpush1.msra.mxu0 %v1513
    %1544 = vmatprep.subr.mxu0 0.0
    %1545 = vmatpush1.msra.mxu0 %v1514
    %1546 = vmatprep.subr.mxu0 0.0
    %1547 = vmatpush1.msra.mxu0 %v1515
    %1548 = vmatprep.subr.mxu0 0.0
    %1549 = vmatpush1.msra.mxu0 %v1516
    %1550 = vmatprep.subr.mxu0 0.0
    %1551 = vmatpush1.msra.mxu0 %v1517
    %1552 = vmatprep.subr.mxu0 0.0
    %1553 = vmatpush1.msra.mxu0 %v1518
    %1554 = vmatprep.subr.mxu0 0.0
    %1555 = vmatpush1.msra.mxu0 %v1519
    %1556 = vmatprep.subr.mxu0 0.0
    %1557 = vmatpush1.msra.mxu0 0.0
    %1558 = vmatprep.subr.mxu0 0.0
    %1559 = vmatpush1.msra.mxu0 0.0
    %1560 = vmatprep.subr.mxu0 0.0
    %1561 = vmatpush1.msra.mxu0 0.0
    %1562 = vmatprep.subr.mxu0 0.0
    %1563 = vmatpush1.msra.mxu0 0.0
    %1564 = vmatprep.subr.mxu0 0.0
    %1565 = vmatpush1.msra.mxu0 0.0
    %1566 = vmatprep.subr.mxu0 0.0
    %1567 = vmatpush1.msra.mxu0 0.0
    %1568 = vmatprep.subr.mxu0 0.0
    %1569 = vmatpush1.msra.mxu0 0.0
    %1570 = vmatprep.subr.mxu0 0.0
    %1571 = vmatpush1.msra.mxu0 0.0
    %1572 = vmatprep.subr.mxu0 0.0
    %1573 = vmatpush1.msra.mxu0 0.0
    %1574 = vmatprep.subr.mxu0 0.0
    %1575 = vmatpush1.msra.mxu0 0.0
    %1576 = vmatprep.subr.mxu0 0.0
    %1577 = vmatpush1.msra.mxu0 0.0
    %1578 = vmatprep.subr.mxu0 0.0
    %1579 = vmatpush1.msra.mxu0 0.0
    %1580 = vmatprep.subr.mxu0 0.0
    %1581 = vmatpush1.msra.mxu0 0.0
    %1582 = vmatprep.subr.mxu0 0.0
    %1583 = vmatpush1.msra.mxu0 0.0
    %1584 = vmatprep.subr.mxu0 0.0
    %1585 = vmatpush1.msra.mxu0 0.0
    %1586 = vmatprep.subr.mxu0 0.0
    %1587 = vmatpush1.msra.mxu0 0.0
    %1588 = vmatprep.mubr.f32.mxu0 0.0
    %1589 = vmatmul.mubr.f32.gmra.mrb[0].mxu0 %v1502
    %v1590 = vpop.f32.mrb[0].mxu0
    %v1591 = vadd.f32 %v1523, %v1590
    %v1592 = vpop.f32.mrb[0].mxu0
    %1593 = vdwg.mxu0
    %v1594 = vadd.f32 %v1591, %v1410
    %1595 = vmatprep.subr.mxu0 0.0
    %1596 = vmatpush1.msra.mxu0 %v42
    %1597 = vmatprep.subr.mxu0 0.0
    %1598 = vmatpush1.msra.mxu0 %v43
    %1599 = vmatprep.subr.mxu0 0.0
    %1600 = vmatpush1.msra.mxu0 %v44
    %1601 = vmatprep.subr.mxu0 0.0
    %1602 = vmatpush1.msra.mxu0 %v45
    %1603 = vmatprep.subr.mxu0 0.0
    %1604 = vmatpush1.msra.mxu0 %v46
    %1605 = vmatprep.subr.mxu0 0.0
    %1606 = vmatpush1.msra.mxu0 %v47
    %1607 = vmatprep.subr.mxu0 0.0
    %1608 = vmatpush1.msra.mxu0 %v48
    %1609 = vmatprep.subr.mxu0 0.0
    %1610 = vmatpush1.msra.mxu0 %v49
    %1611 = vmatprep.subr.mxu0 0.0
    %1612 = vmatpush1.msra.mxu0 %v50
    %1613 = vmatprep.subr.mxu0 0.0
    %1614 = vmatpush1.msra.mxu0 %v51
    %1615 = vmatprep.subr.mxu0 0.0
    %1616 = vmatpush1.msra.mxu0 %v52
    %1617 = vmatprep.subr.mxu0 0.0
    %1618 = vmatpush1.msra.mxu0 %v53
    %1619 = vmatprep.subr.mxu0 0.0
    %1620 = vmatpush1.msra.mxu0 %v54
    %1621 = vmatprep.subr.mxu0 0.0
    %1622 = vmatpush1.msra.mxu0 %v55
    %1623 = vmatprep.subr.mxu0 0.0
    %1624 = vmatpush1.msra.mxu0 %v56
    %1625 = vmatprep.subr.mxu0 0.0
    %1626 = vmatpush1.msra.mxu0 %v57
    %1627 = vmatprep.subr.mxu0 0.0
    %1628 = vmatpush1.msra.mxu0 0.0
    %1629 = vmatprep.subr.mxu0 0.0
    %1630 = vmatpush1.msra.mxu0 0.0
    %1631 = vmatprep.subr.mxu0 0.0
    %1632 = vmatpush1.msra.mxu0 0.0
    %1633 = vmatprep.subr.mxu0 0.0
    %1634 = vmatpush1.msra.mxu0 0.0
    %1635 = vmatprep.subr.mxu0 0.0
    %1636 = vmatpush1.msra.mxu0 0.0
    %1637 = vmatprep.subr.mxu0 0.0
    %1638 = vmatpush1.msra.mxu0 0.0
    %1639 = vmatprep.subr.mxu0 0.0
    %1640 = vmatpush1.msra.mxu0 0.0
    %1641 = vmatprep.subr.mxu0 0.0
    %1642 = vmatpush1.msra.mxu0 0.0
    %1643 = vmatprep.subr.mxu0 0.0
    %1644 = vmatpush1.msra.mxu0 0.0
    %1645 = vmatprep.subr.mxu0 0.0
    %1646 = vmatpush1.msra.mxu0 0.0
    %1647 = vmatprep.subr.mxu0 0.0
    %1648 = vmatpush1.msra.mxu0 0.0
    %1649 = vmatprep.subr.mxu0 0.0
    %1650 = vmatpush1.msra.mxu0 0.0
    %1651 = vmatprep.subr.mxu0 0.0
    %1652 = vmatpush1.msra.mxu0 0.0
    %1653 = vmatprep.subr.mxu0 0.0
    %1654 = vmatpush1.msra.mxu0 0.0
    %1655 = vmatprep.subr.mxu0 0.0
    %1656 = vmatpush1.msra.mxu0 0.0
    %1657 = vmatprep.subr.mxu0 0.0
    %1658 = vmatpush1.msra.mxu0 0.0
    %1659 = vmatprep.mubr.f32.mxu0 0.0
    %1660 = vmatmul.mubr.f32.gmra.mrb[0].mxu0 %v1594
    %v1661 = vpop.f32.mrb[0].mxu0
    %v1662 = vadd.f32 0.0, %v1661
    %v1663 = vpop.f32.mrb[0].mxu0
    %1664 = vdwg.mxu0
    %v1665 = vsub.f32 %v1594, %v1662
    %v1666 = vmul.f32 %v1665, %v1665
    %1667 = vmatprep.subr.mxu0 0.0
    %1668 = vmatpush1.msra.mxu0 %v42
    %1669 = vmatprep.subr.mxu0 0.0
    %1670 = vmatpush1.msra.mxu0 %v43
    %1671 = vmatprep.subr.mxu0 0.0
    %1672 = vmatpush1.msra.mxu0 %v44
    %1673 = vmatprep.subr.mxu0 0.0
    %1674 = vmatpush1.msra.mxu0 %v45
    %1675 = vmatprep.subr.mxu0 0.0
    %1676 = vmatpush1.msra.mxu0 %v46
    %1677 = vmatprep.subr.mxu0 0.0
    %1678 = vmatpush1.msra.mxu0 %v47
    %1679 = vmatprep.subr.mxu0 0.0
    %1680 = vmatpush1.msra.mxu0 %v48
    %1681 = vmatprep.subr.mxu0 0.0
    %1682 = vmatpush1.msra.mxu0 %v49
    %1683 = vmatprep.subr.mxu0 0.0
    %1684 = vmatpush1.msra.mxu0 %v50
    %1685 = vmatprep.subr.mxu0 0.0
    %1686 = vmatpush1.msra.mxu0 %v51
    %1687 = vmatprep.subr.mxu0 0.0
    %1688 = vmatpush1.msra.mxu0 %v52
    %1689 = vmatprep.subr.mxu0 0.0
    %1690 = vmatpush1.msra.mxu0 %v53
    %1691 = vmatprep.subr.mxu0 0.0
    %1692 = vmatpush1.msra.mxu0 %v54
    %1693 = vmatprep.subr.mxu0 0.0
    %1694 = vmatpush1.msra.mxu0 %v55
    %1695 = vmatprep.subr.mxu0 0.0
    %1696 = vmatpush1.msra.mxu0 %v56
    %1697 = vmatprep.subr.mxu0 0.0
    %1698 = vmatpush1.msra.mxu0 %v57
    %1699 = vmatprep.subr.mxu0 0.0
    %1700 = vmatpush1.msra.mxu0 0.0
    %1701 = vmatprep.subr.mxu0 0.0
    %1702 = vmatpush1.msra.mxu0 0.0
    %1703 = vmatprep.subr.mxu0 0.0
    %1704 = vmatpush1.msra.mxu0 0.0
    %1705 = vmatprep.subr.mxu0 0.0
    %1706 = vmatpush1.msra.mxu0 0.0
    %1707 = vmatprep.subr.mxu0 0.0
    %1708 = vmatpush1.msra.mxu0 0.0
    %1709 = vmatprep.subr.mxu0 0.0
    %1710 = vmatpush1.msra.mxu0 0.0
    %1711 = vmatprep.subr.mxu0 0.0
    %1712 = vmatpush1.msra.mxu0 0.0
    %1713 = vmatprep.subr.mxu0 0.0
    %1714 = vmatpush1.msra.mxu0 0.0
    %1715 = vmatprep.subr.mxu0 0.0
    %1716 = vmatpush1.msra.mxu0 0.0
    %1717 = vmatprep.subr.mxu0 0.0
    %1718 = vmatpush1.msra.mxu0 0.0
    %1719 = vmatprep.subr.mxu0 0.0
    %1720 = vmatpush1.msra.mxu0 0.0
    %1721 = vmatprep.subr.mxu0 0.0
    %1722 = vmatpush1.msra.mxu0 0.0
    %1723 = vmatprep.subr.mxu0 0.0
    %1724 = vmatpush1.msra.mxu0 0.0
    %1725 = vmatprep.subr.mxu0 0.0
    %1726 = vmatpush1.msra.mxu0 0.0
    %1727 = vmatprep.subr.mxu0 0.0
    %1728 = vmatpush1.msra.mxu0 0.0
    %1729 = vmatprep.subr.mxu0 0.0
    %1730 = vmatpush1.msra.mxu0 0.0
    %1731 = vmatprep.mubr.f32.mxu0 0.0
    %1732 = vmatmul.mubr.f32.gmra.mrb[0].mxu0 %v1666
    %v1733 = vpop.f32.mrb[0].mxu0
    %v1734 = vadd.f32 1e-05, %v1733
    %v1735 = vpop.f32.mrb[0].mxu0
    %1736 = vdwg.mxu0
    %v1737 = vrsqrt.pop %v1734
    %v1738 = vmul.f32 %v1734, %v1737
    %vm1739 = vcmp.eq.f32.partialorder %v1734, inf
    %v1740 = vsel %vm1739, %v1734, %v1738
    %vm1741 = vcmp.eq.f32.partialorder %v1734, 0.0
    %v1742 = vand.u32 %v1734, 2147483648
    %v1743 = vsel %vm1741, %v1742, %v1740
    %v1744 = vrcp.pop %v1743
    %v1745 = vmul.f32 %v1665, %v1744
    %v1746 = vlaneseq
    %v1747 = vshrl.u32 %v1746, 7
    %v1748 = vsub.s32 2, %v1747
    %v1749 = vrot.slane %v499, %v1748
    %v1750 = vmul.f32 %v1745, %v1749
    %v1751 = vlaneseq
    %v1752 = vshrl.u32 %v1751, 7
    %v1753 = vsub.s32 3, %v1752
    %v1754 = vrot.slane %v499, %v1753
    %v1755 = vadd.f32 %v1750, %v1754
    %v1756 = vadd.f32 %v1755, %v515
    %s1757 = scalar_lea.vmem [#allocation2], 384
    %v1758 = vld [vmem:[%s1757] sm:$0xff]
    %v1759 = vld [vmem:[%s1757 + $0x8] sm:$0xff]
    %v1760 = vld [vmem:[%s1757 + $0x10] sm:$0xff]
    %v1761 = vld [vmem:[%s1757 + $0x18] sm:$0xff]
    %v1762 = vld [vmem:[%s1757 + $0x20] sm:$0xff]
    %v1763 = vld [vmem:[%s1757 + $0x28] sm:$0xff]
    %v1764 = vld [vmem:[%s1757 + $0x30] sm:$0xff]
    %v1765 = vld [vmem:[%s1757 + $0x38] sm:$0xff]
    %v1766 = vld [vmem:[%s1757 + $0x40] sm:$0xff]
    %v1767 = vld [vmem:[%s1757 + $0x48] sm:$0xff]
    %v1768 = vld [vmem:[%s1757 + $0x50] sm:$0xff]
    %v1769 = vld [vmem:[%s1757 + $0x58] sm:$0xff]
    %v1770 = vld [vmem:[%s1757 + $0x60] sm:$0xff]
    %v1771 = vld [vmem:[%s1757 + $0x68] sm:$0xff]
    %v1772 = vld [vmem:[%s1757 + $0x70] sm:$0xff]
    %v1773 = vld [vmem:[%s1757 + $0x78] sm:$0xff]
    %1774 = vmatprep.subr.mxu0 0.0
    %1775 = vmatpush1.msra.mxu0 %v1758
    %1776 = vmatprep.subr.mxu0 0.0
    %1777 = vmatpush1.msra.mxu0 %v1759
    %1778 = vmatprep.subr.mxu0 0.0
    %1779 = vmatpush1.msra.mxu0 %v1760
    %1780 = vmatprep.subr.mxu0 0.0
    %1781 = vmatpush1.msra.mxu0 %v1761
    %1782 = vmatprep.subr.mxu0 0.0
    %1783 = vmatpush1.msra.mxu0 %v1762
    %1784 = vmatprep.subr.mxu0 0.0
    %1785 = vmatpush1.msra.mxu0 %v1763
    %1786 = vmatprep.subr.mxu0 0.0
    %1787 = vmatpush1.msra.mxu0 %v1764
    %1788 = vmatprep.subr.mxu0 0.0
    %1789 = vmatpush1.msra.mxu0 %v1765
    %1790 = vmatprep.subr.mxu0 0.0
    %1791 = vmatpush1.msra.mxu0 %v1766
    %1792 = vmatprep.subr.mxu0 0.0
    %1793 = vmatpush1.msra.mxu0 %v1767
    %1794 = vmatprep.subr.mxu0 0.0
    %1795 = vmatpush1.msra.mxu0 %v1768
    %1796 = vmatprep.subr.mxu0 0.0
    %1797 = vmatpush1.msra.mxu0 %v1769
    %1798 = vmatprep.subr.mxu0 0.0
    %1799 = vmatpush1.msra.mxu0 %v1770
    %1800 = vmatprep.subr.mxu0 0.0
    %1801 = vmatpush1.msra.mxu0 %v1771
    %1802 = vmatprep.subr.mxu0 0.0
    %1803 = vmatpush1.msra.mxu0 %v1772
    %1804 = vmatprep.subr.mxu0 0.0
    %1805 = vmatpush1.msra.mxu0 %v1773
    %1806 = vmatprep.subr.mxu0 0.0
    %1807 = vmatpush1.msra.mxu0 0.0
    %1808 = vmatprep.subr.mxu0 0.0
    %1809 = vmatpush1.msra.mxu0 0.0
    %1810 = vmatprep.subr.mxu0 0.0
    %1811 = vmatpush1.msra.mxu0 0.0
    %1812 = vmatprep.subr.mxu0 0.0
    %1813 = vmatpush1.msra.mxu0 0.0
    %1814 = vmatprep.subr.mxu0 0.0
    %1815 = vmatpush1.msra.mxu0 0.0
    %1816 = vmatprep.subr.mxu0 0.0
    %1817 = vmatpush1.msra.mxu0 0.0
    %1818 = vmatprep.subr.mxu0 0.0
    %1819 = vmatpush1.msra.mxu0 0.0
    %1820 = vmatprep.subr.mxu0 0.0
    %1821 = vmatpush1.msra.mxu0 0.0
    %1822 = vmatprep.subr.mxu0 0.0
    %1823 = vmatpush1.msra.mxu0 0.0
    %1824 = vmatprep.subr.mxu0 0.0
    %1825 = vmatpush1.msra.mxu0 0.0
    %1826 = vmatprep.subr.mxu0 0.0
    %1827 = vmatpush1.msra.mxu0 0.0
    %1828 = vmatprep.subr.mxu0 0.0
    %1829 = vmatpush1.msra.mxu0 0.0
    %1830 = vmatprep.subr.mxu0 0.0
    %1831 = vmatpush1.msra.mxu0 0.0
    %1832 = vmatprep.subr.mxu0 0.0
    %1833 = vmatpush1.msra.mxu0 0.0
    %1834 = vmatprep.subr.mxu0 0.0
    %1835 = vmatpush1.msra.mxu0 0.0
    %1836 = vmatprep.subr.mxu0 0.0
    %1837 = vmatpush1.msra.mxu0 0.0
    %1838 = vmatprep.mubr.f32.mxu0 0.0
    %1839 = vmatmul.mubr.f32.gmra.mrb[0].mxu0 %v1756
    %v1840 = vpop.f32.mrb[0].mxu0
    %v1841 = vadd.f32 0.0, %v1840
    %v1842 = vpop.f32.mrb[0].mxu0
    %1843 = vdwg.mxu0
    %v1844 = vlaneseq
    %v1845 = vshrl.u32 %v1844, 7
    %v1846 = vsub.s32 6, %v1845
    %v1847 = vrot.slane %v499, %v1846
    %v1848 = vadd.f32 %v1841, %v1847
    %s1849 = scalar_lea.vmem %s6, 8
    %v1850 = vld [vmem:[%s1849] sm:$0xff]
    %1852 = vrot.lane.b32.xlu0 %v1848, 32
    %v1853 = vpop.permute.xlu0 %1852
    %1855 = vrot.lane.b32.xlu0 %v1848, 64
    %v1856 = vpop.permute.xlu0 %1855
    %1858 = vrot.lane.b32.xlu0 %v1848, 96
    %v1859 = vpop.permute.xlu0 %1858
    %v1861 = vsel %vm510, %v1848, %v1853
    %v1862 = vsel %vm512, %v1861, %v1856
    %v1863 = vsel %vm514, %v1862, %v1859
    %s1864 = scalar_lea.vmem %s2, 32
    %v1865 = vld [vmem:[%s1864] sm:$0xff]
    %v1866 = vld [vmem:[%s1864 + $0x8] sm:$0xff]
    %v1867 = vld [vmem:[%s1864 + $0x10] sm:$0xff]
    %v1868 = vld [vmem:[%s1864 + $0x18] sm:$0xff]
    %v1869 = vsel %vm510, %v1848, 0
    %1871 = vmatprep.subr.mxu0 0.0
    %1872 = vmatpush1.msra.mxu0 %v1865
    %1873 = vmatprep.subr.mxu0 0.0
    %1874 = vmatpush1.msra.mxu0 %v1866
    %1875 = vmatprep.subr.mxu0 0.0
    %1876 = vmatpush1.msra.mxu0 %v1867
    %1877 = vmatprep.subr.mxu0 0.0
    %1878 = vmatpush1.msra.mxu0 %v1868
    %1879 = vmatprep.subr.mxu0 0.0
    %1880 = vmatpush1.msra.mxu0 0.0
    %1881 = vmatprep.subr.mxu0 0.0
    %1882 = vmatpush1.msra.mxu0 0.0
    %1883 = vmatprep.subr.mxu0 0.0
    %1884 = vmatpush1.msra.mxu0 0.0
    %1885 = vmatprep.subr.mxu0 0.0
    %1886 = vmatpush1.msra.mxu0 0.0
    %1887 = vmatprep.subr.mxu0 0.0
    %1888 = vmatpush1.msra.mxu0 0.0
    %1889 = vmatprep.subr.mxu0 0.0
    %1890 = vmatpush1.msra.mxu0 0.0
    %1891 = vmatprep.subr.mxu0 0.0
    %1892 = vmatpush1.msra.mxu0 0.0
    %1893 = vmatprep.subr.mxu0 0.0
    %1894 = vmatpush1.msra.mxu0 0.0
    %1895 = vmatprep.subr.mxu0 0.0
    %1896 = vmatpush1.msra.mxu0 0.0
    %1897 = vmatprep.subr.mxu0 0.0
    %1898 = vmatpush1.msra.mxu0 0.0
    %1899 = vmatprep.subr.mxu0 0.0
    %1900 = vmatpush1.msra.mxu0 0.0
    %1901 = vmatprep.subr.mxu0 0.0
    %1902 = vmatpush1.msra.mxu0 0.0
    %1903 = vmatprep.subr.mxu0 0.0
    %1904 = vmatpush1.msra.mxu0 0.0
    %1905 = vmatprep.subr.mxu0 0.0
    %1906 = vmatpush1.msra.mxu0 0.0
    %1907 = vmatprep.subr.mxu0 0.0
    %1908 = vmatpush1.msra.mxu0 0.0
    %1909 = vmatprep.subr.mxu0 0.0
    %1910 = vmatpush1.msra.mxu0 0.0
    %1911 = vmatprep.subr.mxu0 0.0
    %1912 = vmatpush1.msra.mxu0 0.0
    %1913 = vmatprep.subr.mxu0 0.0
    %1914 = vmatpush1.msra.mxu0 0.0
    %1915 = vmatprep.subr.mxu0 0.0
    %1916 = vmatpush1.msra.mxu0 0.0
    %1917 = vmatprep.subr.mxu0 0.0
    %1918 = vmatpush1.msra.mxu0 0.0
    %1919 = vmatprep.subr.mxu0 0.0
    %1920 = vmatpush1.msra.mxu0 0.0
    %1921 = vmatprep.subr.mxu0 0.0
    %1922 = vmatpush1.msra.mxu0 0.0
    %1923 = vmatprep.subr.mxu0 0.0
    %1924 = vmatpush1.msra.mxu0 0.0
    %1925 = vmatprep.subr.mxu0 0.0
    %1926 = vmatpush1.msra.mxu0 0.0
    %1927 = vmatprep.subr.mxu0 0.0
    %1928 = vmatpush1.msra.mxu0 0.0
    %1929 = vmatprep.subr.mxu0 0.0
    %1930 = vmatpush1.msra.mxu0 0.0
    %1931 = vmatprep.subr.mxu0 0.0
    %1932 = vmatpush1.msra.mxu0 0.0
    %1933 = vmatprep.subr.mxu0 0.0
    %1934 = vmatpush1.msra.mxu0 0.0
    %1935 = vmatprep.mubr.f32.mxu0 0.0
    %1936 = vmatmul.mubr.f32.gmra.mrb[0].mxu0 %v1869
    %v1937 = vpop.f32.mrb[0].mxu0
    %v1938 = vadd.f32 0.0, %v1937
    %v1939 = vpop.f32.mrb[0].mxu0
    %1940 = vdwg.mxu0
    %v1942 = vsel %vm510, %v1938, 0
    %1944 = vmatprep.subr.mxu0 0.0
    %1945 = vmatpush1.msra.mxu0 %v337
    %1946 = vmatprep.subr.mxu0 0.0
    %1947 = vmatpush1.msra.mxu0 %v342
    %1948 = vmatprep.subr.mxu0 0.0
    %1949 = vmatpush1.msra.mxu0 %v347
    %1950 = vmatprep.subr.mxu0 0.0
    %1951 = vmatpush1.msra.mxu0 %v352
    %1952 = vmatprep.subr.mxu0 0.0
    %1953 = vmatpush1.msra.mxu0 0.0
    %1954 = vmatprep.subr.mxu0 0.0
    %1955 = vmatpush1.msra.mxu0 0.0
    %1956 = vmatprep.subr.mxu0 0.0
    %1957 = vmatpush1.msra.mxu0 0.0
    %1958 = vmatprep.subr.mxu0 0.0
    %1959 = vmatpush1.msra.mxu0 0.0
    %1960 = vmatprep.subr.mxu0 0.0
    %1961 = vmatpush1.msra.mxu0 0.0
    %1962 = vmatprep.subr.mxu0 0.0
    %1963 = vmatpush1.msra.mxu0 0.0
    %1964 = vmatprep.subr.mxu0 0.0
    %1965 = vmatpush1.msra.mxu0 0.0
    %1966 = vmatprep.subr.mxu0 0.0
    %1967 = vmatpush1.msra.mxu0 0.0
    %1968 = vmatprep.subr.mxu0 0.0
    %1969 = vmatpush1.msra.mxu0 0.0
    %1970 = vmatprep.subr.mxu0 0.0
    %1971 = vmatpush1.msra.mxu0 0.0
    %1972 = vmatprep.subr.mxu0 0.0
    %1973 = vmatpush1.msra.mxu0 0.0
    %1974 = vmatprep.subr.mxu0 0.0
    %1975 = vmatpush1.msra.mxu0 0.0
    %1976 = vmatprep.subr.mxu0 0.0
    %1977 = vmatpush1.msra.mxu0 0.0
    %1978 = vmatprep.subr.mxu0 0.0
    %1979 = vmatpush1.msra.mxu0 0.0
    %1980 = vmatprep.subr.mxu0 0.0
    %1981 = vmatpush1.msra.mxu0 0.0
    %1982 = vmatprep.subr.mxu0 0.0
    %1983 = vmatpush1.msra.mxu0 0.0
    %1984 = vmatprep.subr.mxu0 0.0
    %1985 = vmatpush1.msra.mxu0 0.0
    %1986 = vmatprep.subr.mxu0 0.0
    %1987 = vmatpush1.msra.mxu0 0.0
    %1988 = vmatprep.subr.mxu0 0.0
    %1989 = vmatpush1.msra.mxu0 0.0
    %1990 = vmatprep.subr.mxu0 0.0
    %1991 = vmatpush1.msra.mxu0 0.0
    %1992 = vmatprep.subr.mxu0 0.0
    %1993 = vmatpush1.msra.mxu0 0.0
    %1994 = vmatprep.subr.mxu0 0.0
    %1995 = vmatpush1.msra.mxu0 0.0
    %1996 = vmatprep.subr.mxu0 0.0
    %1997 = vmatpush1.msra.mxu0 0.0
    %1998 = vmatprep.subr.mxu0 0.0
    %1999 = vmatpush1.msra.mxu0 0.0
    %2000 = vmatprep.subr.mxu0 0.0
    %2001 = vmatpush1.msra.mxu0 0.0
    %2002 = vmatprep.subr.mxu0 0.0
    %2003 = vmatpush1.msra.mxu0 0.0
    %2004 = vmatprep.subr.mxu0 0.0
    %2005 = vmatpush1.msra.mxu0 0.0
    %2006 = vmatprep.subr.mxu0 0.0
    %2007 = vmatpush1.msra.mxu0 0.0
    %2008 = vmatprep.mubr.f32.mxu0 0.0
    %2009 = vmatmul.mubr.f32.gmra.mrb[0].mxu0 %v1942
    %v2010 = vpop.f32.mrb[0].mxu0
    %v2011 = vadd.f32 0.0, %v2010
    %v2012 = vpop.f32.mrb[0].mxu0
    %2013 = vdwg.mxu0
    %v2014 = vsel %vm665, %v2011, -inf
    %2015 = vmax.xlane.f32.xlu0 %v2014
    %v2016 = vpop.xlane.xlu0 %2015
    %v2017 = vsub.f32 %v2011, %v2016
    %v2018 = vmul.f32 %v2017, 1.442695
    %v2019 = vpow.pop %v2018
    %v2020 = vsel %vm665, %v2019, 0.0
    %2021 = vadd.xlane.f32.xlu0 %v2020
    %v2022 = vpop.xlane.xlu0 %2021
    %v2023 = vrcp.pop %v2022
    %v2024 = vmul.f32 %v2019, %v2023
    %v2026 = vsel %vm665, %v2024, 0
    %2028 = vmatprep.subr.mxu0 0.0
    %2029 = vmatpush1.msra.mxu0 %v496
    %2030 = vmatprep.subr.mxu0 0.0
    %2031 = vmatpush1.msra.mxu0 0.0
    %2032 = vmatprep.subr.mxu0 0.0
    %2033 = vmatpush1.msra.mxu0 0.0
    %2034 = vmatprep.subr.mxu0 0.0
    %2035 = vmatpush1.msra.mxu0 0.0
    %2036 = vmatprep.subr.mxu0 0.0
    %2037 = vmatpush1.msra.mxu0 0.0
    %2038 = vmatprep.subr.mxu0 0.0
    %2039 = vmatpush1.msra.mxu0 0.0
    %2040 = vmatprep.subr.mxu0 0.0
    %2041 = vmatpush1.msra.mxu0 0.0
    %2042 = vmatprep.subr.mxu0 0.0
    %2043 = vmatpush1.msra.mxu0 0.0
    %2044 = vmatprep.subr.mxu0 0.0
    %2045 = vmatpush1.msra.mxu0 0.0
    %2046 = vmatprep.subr.mxu0 0.0
    %2047 = vmatpush1.msra.mxu0 0.0
    %2048 = vmatprep.subr.mxu0 0.0
    %2049 = vmatpush1.msra.mxu0 0.0
    %2050 = vmatprep.subr.mxu0 0.0
    %2051 = vmatpush1.msra.mxu0 0.0
    %2052 = vmatprep.subr.mxu0 0.0
    %2053 = vmatpush1.msra.mxu0 0.0
    %2054 = vmatprep.subr.mxu0 0.0
    %2055 = vmatpush1.msra.mxu0 0.0
    %2056 = vmatprep.subr.mxu0 0.0
    %2057 = vmatpush1.msra.mxu0 0.0
    %2058 = vmatprep.subr.mxu0 0.0
    %2059 = vmatpush1.msra.mxu0 0.0
    %2060 = vmatprep.subr.mxu0 0.0
    %2061 = vmatpush1.msra.mxu0 0.0
    %2062 = vmatprep.subr.mxu0 0.0
    %2063 = vmatpush1.msra.mxu0 0.0
    %2064 = vmatprep.subr.mxu0 0.0
    %2065 = vmatpush1.msra.mxu0 0.0
    %2066 = vmatprep.subr.mxu0 0.0
    %2067 = vmatpush1.msra.mxu0 0.0
    %2068 = vmatprep.subr.mxu0 0.0
    %2069 = vmatpush1.msra.mxu0 0.0
    %2070 = vmatprep.subr.mxu0 0.0
    %2071 = vmatpush1.msra.mxu0 0.0
    %2072 = vmatprep.subr.mxu0 0.0
    %2073 = vmatpush1.msra.mxu0 0.0
    %2074 = vmatprep.subr.mxu0 0.0
    %2075 = vmatpush1.msra.mxu0 0.0
    %2076 = vmatprep.subr.mxu0 0.0
    %2077 = vmatpush1.msra.mxu0 0.0
    %2078 = vmatprep.subr.mxu0 0.0
    %2079 = vmatpush1.msra.mxu0 0.0
    %2080 = vmatprep.subr.mxu0 0.0
    %2081 = vmatpush1.msra.mxu0 0.0
    %2082 = vmatprep.subr.mxu0 0.0
    %2083 = vmatpush1.msra.mxu0 0.0
    %2084 = vmatprep.subr.mxu0 0.0
    %2085 = vmatpush1.msra.mxu0 0.0
    %2086 = vmatprep.subr.mxu0 0.0
    %2087 = vmatpush1.msra.mxu0 0.0
    %2088 = vmatprep.subr.mxu0 0.0
    %2089 = vmatpush1.msra.mxu0 0.0
    %2090 = vmatprep.subr.mxu0 0.0
    %2091 = vmatpush1.msra.mxu0 0.0
    %2092 = vmatprep.mubr.f32.mxu0 0.0
    %2093 = vmatmul.mubr.f32.gmra.mrb[0].mxu0 %v2026
    %v2094 = vpop.f32.mrb[0].mxu0
    %v2095 = vadd.f32 0.0, %v2094
    %v2096 = vpop.f32.mrb[0].mxu0
    %2097 = vdwg.mxu0
    %2098 = vrot.lane.b32.xlu0 %v1938, 96
    %v2099 = vpop.permute.xlu0 %2098
    %v2100 = vsel %vm510, %v2099, 0
    %2102 = vmatprep.subr.mxu0 0.0
    %2103 = vmatpush1.msra.mxu0 %v357
    %2104 = vmatprep.subr.mxu0 0.0
    %2105 = vmatpush1.msra.mxu0 %v362
    %2106 = vmatprep.subr.mxu0 0.0
    %2107 = vmatpush1.msra.mxu0 %v367
    %2108 = vmatprep.subr.mxu0 0.0
    %2109 = vmatpush1.msra.mxu0 %v372
    %2110 = vmatprep.subr.mxu0 0.0
    %2111 = vmatpush1.msra.mxu0 0.0
    %2112 = vmatprep.subr.mxu0 0.0
    %2113 = vmatpush1.msra.mxu0 0.0
    %2114 = vmatprep.subr.mxu0 0.0
    %2115 = vmatpush1.msra.mxu0 0.0
    %2116 = vmatprep.subr.mxu0 0.0
    %2117 = vmatpush1.msra.mxu0 0.0
    %2118 = vmatprep.subr.mxu0 0.0
    %2119 = vmatpush1.msra.mxu0 0.0
    %2120 = vmatprep.subr.mxu0 0.0
    %2121 = vmatpush1.msra.mxu0 0.0
    %2122 = vmatprep.subr.mxu0 0.0
    %2123 = vmatpush1.msra.mxu0 0.0
    %2124 = vmatprep.subr.mxu0 0.0
    %2125 = vmatpush1.msra.mxu0 0.0
    %2126 = vmatprep.subr.mxu0 0.0
    %2127 = vmatpush1.msra.mxu0 0.0
    %2128 = vmatprep.subr.mxu0 0.0
    %2129 = vmatpush1.msra.mxu0 0.0
    %2130 = vmatprep.subr.mxu0 0.0
    %2131 = vmatpush1.msra.mxu0 0.0
    %2132 = vmatprep.subr.mxu0 0.0
    %2133 = vmatpush1.msra.mxu0 0.0
    %2134 = vmatprep.subr.mxu0 0.0
    %2135 = vmatpush1.msra.mxu0 0.0
    %2136 = vmatprep.subr.mxu0 0.0
    %2137 = vmatpush1.msra.mxu0 0.0
    %2138 = vmatprep.subr.mxu0 0.0
    %2139 = vmatpush1.msra.mxu0 0.0
    %2140 = vmatprep.subr.mxu0 0.0
    %2141 = vmatpush1.msra.mxu0 0.0
    %2142 = vmatprep.subr.mxu0 0.0
    %2143 = vmatpush1.msra.mxu0 0.0
    %2144 = vmatprep.subr.mxu0 0.0
    %2145 = vmatpush1.msra.mxu0 0.0
    %2146 = vmatprep.subr.mxu0 0.0
    %2147 = vmatpush1.msra.mxu0 0.0
    %2148 = vmatprep.subr.mxu0 0.0
    %2149 = vmatpush1.msra.mxu0 0.0
    %2150 = vmatprep.subr.mxu0 0.0
    %2151 = vmatpush1.msra.mxu0 0.0
    %2152 = vmatprep.subr.mxu0 0.0
    %2153 = vmatpush1.msra.mxu0 0.0
    %2154 = vmatprep.subr.mxu0 0.0
    %2155 = vmatpush1.msra.mxu0 0.0
    %2156 = vmatprep.subr.mxu0 0.0
    %2157 = vmatpush1.msra.mxu0 0.0
    %2158 = vmatprep.subr.mxu0 0.0
    %2159 = vmatpush1.msra.mxu0 0.0
    %2160 = vmatprep.subr.mxu0 0.0
    %2161 = vmatpush1.msra.mxu0 0.0
    %2162 = vmatprep.subr.mxu0 0.0
    %2163 = vmatpush1.msra.mxu0 0.0
    %2164 = vmatprep.subr.mxu0 0.0
    %2165 = vmatpush1.msra.mxu0 0.0
    %2166 = vmatprep.mubr.f32.mxu0 0.0
    %2167 = vmatmul.mubr.f32.gmra.mrb[0].mxu0 %v2100
    %v2168 = vpop.f32.mrb[0].mxu0
    %v2169 = vadd.f32 0.0, %v2168
    %v2170 = vpop.f32.mrb[0].mxu0
    %2171 = vdwg.mxu0
    %v2172 = vsel %vm665, %v2169, -inf
    %2173 = vmax.xlane.f32.xlu0 %v2172
    %v2174 = vpop.xlane.xlu0 %2173
    %v2175 = vsub.f32 %v2169, %v2174
    %v2176 = vmul.f32 %v2175, 1.442695
    %v2177 = vpow.pop %v2176
    %v2178 = vsel %vm665, %v2177, 0.0
    %2179 = vadd.xlane.f32.xlu0 %v2178
    %v2180 = vpop.xlane.xlu0 %2179
    %v2181 = vrcp.pop %v2180
    %v2182 = vmul.f32 %v2177, %v2181
    %2184 = vrot.lane.b32.xlu0 %v496, 96
    %v2185 = vpop.permute.xlu0 %2184
    %v2188 = vsel %vm665, %v2182, 0
    %2190 = vmatprep.subr.mxu0 0.0
    %2191 = vmatpush1.msra.mxu0 %v2185
    %2192 = vmatprep.subr.mxu0 0.0
    %2193 = vmatpush1.msra.mxu0 0.0
    %2194 = vmatprep.subr.mxu0 0.0
    %2195 = vmatpush1.msra.mxu0 0.0
    %2196 = vmatprep.subr.mxu0 0.0
    %2197 = vmatpush1.msra.mxu0 0.0
    %2198 = vmatprep.subr.mxu0 0.0
    %2199 = vmatpush1.msra.mxu0 0.0
    %2200 = vmatprep.subr.mxu0 0.0
    %2201 = vmatpush1.msra.mxu0 0.0
    %2202 = vmatprep.subr.mxu0 0.0
    %2203 = vmatpush1.msra.mxu0 0.0
    %2204 = vmatprep.subr.mxu0 0.0
    %2205 = vmatpush1.msra.mxu0 0.0
    %2206 = vmatprep.subr.mxu0 0.0
    %2207 = vmatpush1.msra.mxu0 0.0
    %2208 = vmatprep.subr.mxu0 0.0
    %2209 = vmatpush1.msra.mxu0 0.0
    %2210 = vmatprep.subr.mxu0 0.0
    %2211 = vmatpush1.msra.mxu0 0.0
    %2212 = vmatprep.subr.mxu0 0.0
    %2213 = vmatpush1.msra.mxu0 0.0
    %2214 = vmatprep.subr.mxu0 0.0
    %2215 = vmatpush1.msra.mxu0 0.0
    %2216 = vmatprep.subr.mxu0 0.0
    %2217 = vmatpush1.msra.mxu0 0.0
    %2218 = vmatprep.subr.mxu0 0.0
    %2219 = vmatpush1.msra.mxu0 0.0
    %2220 = vmatprep.subr.mxu0 0.0
    %2221 = vmatpush1.msra.mxu0 0.0
    %2222 = vmatprep.subr.mxu0 0.0
    %2223 = vmatpush1.msra.mxu0 0.0
    %2224 = vmatprep.subr.mxu0 0.0
    %2225 = vmatpush1.msra.mxu0 0.0
    %2226 = vmatprep.subr.mxu0 0.0
    %2227 = vmatpush1.msra.mxu0 0.0
    %2228 = vmatprep.subr.mxu0 0.0
    %2229 = vmatpush1.msra.mxu0 0.0
    %2230 = vmatprep.subr.mxu0 0.0
    %2231 = vmatpush1.msra.mxu0 0.0
    %2232 = vmatprep.subr.mxu0 0.0
    %2233 = vmatpush1.msra.mxu0 0.0
    %2234 = vmatprep.subr.mxu0 0.0
    %2235 = vmatpush1.msra.mxu0 0.0
    %2236 = vmatprep.subr.mxu0 0.0
    %2237 = vmatpush1.msra.mxu0 0.0
    %2238 = vmatprep.subr.mxu0 0.0
    %2239 = vmatpush1.msra.mxu0 0.0
    %2240 = vmatprep.subr.mxu0 0.0
    %2241 = vmatpush1.msra.mxu0 0.0
    %2242 = vmatprep.subr.mxu0 0.0
    %2243 = vmatpush1.msra.mxu0 0.0
    %2244 = vmatprep.subr.mxu0 0.0
    %2245 = vmatpush1.msra.mxu0 0.0
    %2246 = vmatprep.subr.mxu0 0.0
    %2247 = vmatpush1.msra.mxu0 0.0
    %2248 = vmatprep.subr.mxu0 0.0
    %2249 = vmatpush1.msra.mxu0 0.0
    %2250 = vmatprep.subr.mxu0 0.0
    %2251 = vmatpush1.msra.mxu0 0.0
    %2252 = vmatprep.subr.mxu0 0.0
    %2253 = vmatpush1.msra.mxu0 0.0
    %2254 = vmatprep.mubr.f32.mxu0 0.0
    %2255 = vmatmul.mubr.f32.gmra.mrb[0].mxu0 %v2188
    %v2256 = vpop.f32.mrb[0].mxu0
    %v2257 = vadd.f32 0.0, %v2256
    %v2258 = vpop.f32.mrb[0].mxu0
    %2259 = vdwg.mxu0
    %2260 = vrot.lane.b32.xlu0 %v1938, 64
    %v2261 = vpop.permute.xlu0 %2260
    %v2262 = vsel %vm510, %v2261, 0
    %2264 = vmatprep.subr.mxu0 0.0
    %2265 = vmatpush1.msra.mxu0 %v377
    %2266 = vmatprep.subr.mxu0 0.0
    %2267 = vmatpush1.msra.mxu0 %v382
    %2268 = vmatprep.subr.mxu0 0.0
    %2269 = vmatpush1.msra.mxu0 %v387
    %2270 = vmatprep.subr.mxu0 0.0
    %2271 = vmatpush1.msra.mxu0 %v392
    %2272 = vmatprep.subr.mxu0 0.0
    %2273 = vmatpush1.msra.mxu0 0.0
    %2274 = vmatprep.subr.mxu0 0.0
    %2275 = vmatpush1.msra.mxu0 0.0
    %2276 = vmatprep.subr.mxu0 0.0
    %2277 = vmatpush1.msra.mxu0 0.0
    %2278 = vmatprep.subr.mxu0 0.0
    %2279 = vmatpush1.msra.mxu0 0.0
    %2280 = vmatprep.subr.mxu0 0.0
    %2281 = vmatpush1.msra.mxu0 0.0
    %2282 = vmatprep.subr.mxu0 0.0
    %2283 = vmatpush1.msra.mxu0 0.0
    %2284 = vmatprep.subr.mxu0 0.0
    %2285 = vmatpush1.msra.mxu0 0.0
    %2286 = vmatprep.subr.mxu0 0.0
    %2287 = vmatpush1.msra.mxu0 0.0
    %2288 = vmatprep.subr.mxu0 0.0
    %2289 = vmatpush1.msra.mxu0 0.0
    %2290 = vmatprep.subr.mxu0 0.0
    %2291 = vmatpush1.msra.mxu0 0.0
    %2292 = vmatprep.subr.mxu0 0.0
    %2293 = vmatpush1.msra.mxu0 0.0
    %2294 = vmatprep.subr.mxu0 0.0
    %2295 = vmatpush1.msra.mxu0 0.0
    %2296 = vmatprep.subr.mxu0 0.0
    %2297 = vmatpush1.msra.mxu0 0.0
    %2298 = vmatprep.subr.mxu0 0.0
    %2299 = vmatpush1.msra.mxu0 0.0
    %2300 = vmatprep.subr.mxu0 0.0
    %2301 = vmatpush1.msra.mxu0 0.0
    %2302 = vmatprep.subr.mxu0 0.0
    %2303 = vmatpush1.msra.mxu0 0.0
    %2304 = vmatprep.subr.mxu0 0.0
    %2305 = vmatpush1.msra.mxu0 0.0
    %2306 = vmatprep.subr.mxu0 0.0
    %2307 = vmatpush1.msra.mxu0 0.0
    %2308 = vmatprep.subr.mxu0 0.0
    %2309 = vmatpush1.msra.mxu0 0.0
    %2310 = vmatprep.subr.mxu0 0.0
    %2311 = vmatpush1.msra.mxu0 0.0
    %2312 = vmatprep.subr.mxu0 0.0
    %2313 = vmatpush1.msra.mxu0 0.0
    %2314 = vmatprep.subr.mxu0 0.0
    %2315 = vmatpush1.msra.mxu0 0.0
    %2316 = vmatprep.subr.mxu0 0.0
    %2317 = vmatpush1.msra.mxu0 0.0
    %2318 = vmatprep.subr.mxu0 0.0
    %2319 = vmatpush1.msra.mxu0 0.0
    %2320 = vmatprep.subr.mxu0 0.0
    %2321 = vmatpush1.msra.mxu0 0.0
    %2322 = vmatprep.subr.mxu0 0.0
    %2323 = vmatpush1.msra.mxu0 0.0
    %2324 = vmatprep.subr.mxu0 0.0
    %2325 = vmatpush1.msra.mxu0 0.0
    %2326 = vmatprep.subr.mxu0 0.0
    %2327 = vmatpush1.msra.mxu0 0.0
    %2328 = vmatprep.mubr.f32.mxu0 0.0
    %2329 = vmatmul.mubr.f32.gmra.mrb[0].mxu0 %v2262
    %v2330 = vpop.f32.mrb[0].mxu0
    %v2331 = vadd.f32 0.0, %v2330
    %v2332 = vpop.f32.mrb[0].mxu0
    %2333 = vdwg.mxu0
    %v2334 = vsel %vm665, %v2331, -inf
    %2335 = vmax.xlane.f32.xlu0 %v2334
    %v2336 = vpop.xlane.xlu0 %2335
    %v2337 = vsub.f32 %v2331, %v2336
    %v2338 = vmul.f32 %v2337, 1.442695
    %v2339 = vpow.pop %v2338
    %v2340 = vsel %vm665, %v2339, 0.0
    %2341 = vadd.xlane.f32.xlu0 %v2340
    %v2342 = vpop.xlane.xlu0 %2341
    %v2343 = vrcp.pop %v2342
    %v2344 = vmul.f32 %v2339, %v2343
    %2345 = vrot.lane.b32.xlu0 %v496, 64
    %v2346 = vpop.permute.xlu0 %2345
    %v2349 = vsel %vm665, %v2344, 0
    %2351 = vmatprep.subr.mxu0 0.0
    %2352 = vmatpush1.msra.mxu0 %v2346
    %2353 = vmatprep.subr.mxu0 0.0
    %2354 = vmatpush1.msra.mxu0 0.0
    %2355 = vmatprep.subr.mxu0 0.0
    %2356 = vmatpush1.msra.mxu0 0.0
    %2357 = vmatprep.subr.mxu0 0.0
    %2358 = vmatpush1.msra.mxu0 0.0
    %2359 = vmatprep.subr.mxu0 0.0
    %2360 = vmatpush1.msra.mxu0 0.0
    %2361 = vmatprep.subr.mxu0 0.0
    %2362 = vmatpush1.msra.mxu0 0.0
    %2363 = vmatprep.subr.mxu0 0.0
    %2364 = vmatpush1.msra.mxu0 0.0
    %2365 = vmatprep.subr.mxu0 0.0
    %2366 = vmatpush1.msra.mxu0 0.0
    %2367 = vmatprep.subr.mxu0 0.0
    %2368 = vmatpush1.msra.mxu0 0.0
    %2369 = vmatprep.subr.mxu0 0.0
    %2370 = vmatpush1.msra.mxu0 0.0
    %2371 = vmatprep.subr.mxu0 0.0
    %2372 = vmatpush1.msra.mxu0 0.0
    %2373 = vmatprep.subr.mxu0 0.0
    %2374 = vmatpush1.msra.mxu0 0.0
    %2375 = vmatprep.subr.mxu0 0.0
    %2376 = vmatpush1.msra.mxu0 0.0
    %2377 = vmatprep.subr.mxu0 0.0
    %2378 = vmatpush1.msra.mxu0 0.0
    %2379 = vmatprep.subr.mxu0 0.0
    %2380 = vmatpush1.msra.mxu0 0.0
    %2381 = vmatprep.subr.mxu0 0.0
    %2382 = vmatpush1.msra.mxu0 0.0
    %2383 = vmatprep.subr.mxu0 0.0
    %2384 = vmatpush1.msra.mxu0 0.0
    %2385 = vmatprep.subr.mxu0 0.0
    %2386 = vmatpush1.msra.mxu0 0.0
    %2387 = vmatprep.subr.mxu0 0.0
    %2388 = vmatpush1.msra.mxu0 0.0
    %2389 = vmatprep.subr.mxu0 0.0
    %2390 = vmatpush1.msra.mxu0 0.0
    %2391 = vmatprep.subr.mxu0 0.0
    %2392 = vmatpush1.msra.mxu0 0.0
    %2393 = vmatprep.subr.mxu0 0.0
    %2394 = vmatpush1.msra.mxu0 0.0
    %2395 = vmatprep.subr.mxu0 0.0
    %2396 = vmatpush1.msra.mxu0 0.0
    %2397 = vmatprep.subr.mxu0 0.0
    %2398 = vmatpush1.msra.mxu0 0.0
    %2399 = vmatprep.subr.mxu0 0.0
    %2400 = vmatpush1.msra.mxu0 0.0
    %2401 = vmatprep.subr.mxu0 0.0
    %2402 = vmatpush1.msra.mxu0 0.0
    %2403 = vmatprep.subr.mxu0 0.0
    %2404 = vmatpush1.msra.mxu0 0.0
    %2405 = vmatprep.subr.mxu0 0.0
    %2406 = vmatpush1.msra.mxu0 0.0
    %2407 = vmatprep.subr.mxu0 0.0
    %2408 = vmatpush1.msra.mxu0 0.0
    %2409 = vmatprep.subr.mxu0 0.0
    %2410 = vmatpush1.msra.mxu0 0.0
    %2411 = vmatprep.subr.mxu0 0.0
    %2412 = vmatpush1.msra.mxu0 0.0
    %2413 = vmatprep.subr.mxu0 0.0
    %2414 = vmatpush1.msra.mxu0 0.0
    %2415 = vmatprep.mubr.f32.mxu0 0.0
    %2416 = vmatmul.mubr.f32.gmra.mrb[0].mxu0 %v2349
    %v2417 = vpop.f32.mrb[0].mxu0
    %v2418 = vadd.f32 0.0, %v2417
    %v2419 = vpop.f32.mrb[0].mxu0
    %2420 = vdwg.mxu0
    %2421 = vrot.lane.b32.xlu0 %v1938, 32
    %v2422 = vpop.permute.xlu0 %2421
    %v2423 = vsel %vm510, %v2422, 0
    %2425 = vmatprep.subr.mxu0 0.0
    %2426 = vmatpush1.msra.mxu0 %v397
    %2427 = vmatprep.subr.mxu0 0.0
    %2428 = vmatpush1.msra.mxu0 %v402
    %2429 = vmatprep.subr.mxu0 0.0
    %2430 = vmatpush1.msra.mxu0 %v407
    %2431 = vmatprep.subr.mxu0 0.0
    %2432 = vmatpush1.msra.mxu0 %v412
    %2433 = vmatprep.subr.mxu0 0.0
    %2434 = vmatpush1.msra.mxu0 0.0
    %2435 = vmatprep.subr.mxu0 0.0
    %2436 = vmatpush1.msra.mxu0 0.0
    %2437 = vmatprep.subr.mxu0 0.0
    %2438 = vmatpush1.msra.mxu0 0.0
    %2439 = vmatprep.subr.mxu0 0.0
    %2440 = vmatpush1.msra.mxu0 0.0
    %2441 = vmatprep.subr.mxu0 0.0
    %2442 = vmatpush1.msra.mxu0 0.0
    %2443 = vmatprep.subr.mxu0 0.0
    %2444 = vmatpush1.msra.mxu0 0.0
    %2445 = vmatprep.subr.mxu0 0.0
    %2446 = vmatpush1.msra.mxu0 0.0
    %2447 = vmatprep.subr.mxu0 0.0
    %2448 = vmatpush1.msra.mxu0 0.0
    %2449 = vmatprep.subr.mxu0 0.0
    %2450 = vmatpush1.msra.mxu0 0.0
    %2451 = vmatprep.subr.mxu0 0.0
    %2452 = vmatpush1.msra.mxu0 0.0
    %2453 = vmatprep.subr.mxu0 0.0
    %2454 = vmatpush1.msra.mxu0 0.0
    %2455 = vmatprep.subr.mxu0 0.0
    %2456 = vmatpush1.msra.mxu0 0.0
    %2457 = vmatprep.subr.mxu0 0.0
    %2458 = vmatpush1.msra.mxu0 0.0
    %2459 = vmatprep.subr.mxu0 0.0
    %2460 = vmatpush1.msra.mxu0 0.0
    %2461 = vmatprep.subr.mxu0 0.0
    %2462 = vmatpush1.msra.mxu0 0.0
    %2463 = vmatprep.subr.mxu0 0.0
    %2464 = vmatpush1.msra.mxu0 0.0
    %2465 = vmatprep.subr.mxu0 0.0
    %2466 = vmatpush1.msra.mxu0 0.0
    %2467 = vmatprep.subr.mxu0 0.0
    %2468 = vmatpush1.msra.mxu0 0.0
    %2469 = vmatprep.subr.mxu0 0.0
    %2470 = vmatpush1.msra.mxu0 0.0
    %2471 = vmatprep.subr.mxu0 0.0
    %2472 = vmatpush1.msra.mxu0 0.0
    %2473 = vmatprep.subr.mxu0 0.0
    %2474 = vmatpush1.msra.mxu0 0.0
    %2475 = vmatprep.subr.mxu0 0.0
    %2476 = vmatpush1.msra.mxu0 0.0
    %2477 = vmatprep.subr.mxu0 0.0
    %2478 = vmatpush1.msra.mxu0 0.0
    %2479 = vmatprep.subr.mxu0 0.0
    %2480 = vmatpush1.msra.mxu0 0.0
    %2481 = vmatprep.subr.mxu0 0.0
    %2482 = vmatpush1.msra.mxu0 0.0
    %2483 = vmatprep.subr.mxu0 0.0
    %2484 = vmatpush1.msra.mxu0 0.0
    %2485 = vmatprep.subr.mxu0 0.0
    %2486 = vmatpush1.msra.mxu0 0.0
    %2487 = vmatprep.subr.mxu0 0.0
    %2488 = vmatpush1.msra.mxu0 0.0
    %2489 = vmatprep.mubr.f32.mxu0 0.0
    %2490 = vmatmul.mubr.f32.gmra.mrb[0].mxu0 %v2423
    %v2491 = vpop.f32.mrb[0].mxu0
    %v2492 = vadd.f32 0.0, %v2491
    %v2493 = vpop.f32.mrb[0].mxu0
    %2494 = vdwg.mxu0
    %v2495 = vsel %vm665, %v2492, -inf
    %2496 = vmax.xlane.f32.xlu0 %v2495
    %v2497 = vpop.xlane.xlu0 %2496
    %v2498 = vsub.f32 %v2492, %v2497
    %v2499 = vmul.f32 %v2498, 1.442695
    %v2500 = vpow.pop %v2499
    %v2501 = vsel %vm665, %v2500, 0.0
    %2502 = vadd.xlane.f32.xlu0 %v2501
    %v2503 = vpop.xlane.xlu0 %2502
    %v2504 = vrcp.pop %v2503
    %v2505 = vmul.f32 %v2500, %v2504
    %2506 = vrot.lane.b32.xlu0 %v496, 32
    %v2507 = vpop.permute.xlu0 %2506
    %v2510 = vsel %vm665, %v2505, 0
    %2512 = vmatprep.subr.mxu0 0.0
    %2513 = vmatpush1.msra.mxu0 %v2507
    %2514 = vmatprep.subr.mxu0 0.0
    %2515 = vmatpush1.msra.mxu0 0.0
    %2516 = vmatprep.subr.mxu0 0.0
    %2517 = vmatpush1.msra.mxu0 0.0
    %2518 = vmatprep.subr.mxu0 0.0
    %2519 = vmatpush1.msra.mxu0 0.0
    %2520 = vmatprep.subr.mxu0 0.0
    %2521 = vmatpush1.msra.mxu0 0.0
    %2522 = vmatprep.subr.mxu0 0.0
    %2523 = vmatpush1.msra.mxu0 0.0
    %2524 = vmatprep.subr.mxu0 0.0
    %2525 = vmatpush1.msra.mxu0 0.0
    %2526 = vmatprep.subr.mxu0 0.0
    %2527 = vmatpush1.msra.mxu0 0.0
    %2528 = vmatprep.subr.mxu0 0.0
    %2529 = vmatpush1.msra.mxu0 0.0
    %2530 = vmatprep.subr.mxu0 0.0
    %2531 = vmatpush1.msra.mxu0 0.0
    %2532 = vmatprep.subr.mxu0 0.0
    %2533 = vmatpush1.msra.mxu0 0.0
    %2534 = vmatprep.subr.mxu0 0.0
    %2535 = vmatpush1.msra.mxu0 0.0
    %2536 = vmatprep.subr.mxu0 0.0
    %2537 = vmatpush1.msra.mxu0 0.0
    %2538 = vmatprep.subr.mxu0 0.0
    %2539 = vmatpush1.msra.mxu0 0.0
    %2540 = vmatprep.subr.mxu0 0.0
    %2541 = vmatpush1.msra.mxu0 0.0
    %2542 = vmatprep.subr.mxu0 0.0
    %2543 = vmatpush1.msra.mxu0 0.0
    %2544 = vmatprep.subr.mxu0 0.0
    %2545 = vmatpush1.msra.mxu0 0.0
    %2546 = vmatprep.subr.mxu0 0.0
    %2547 = vmatpush1.msra.mxu0 0.0
    %2548 = vmatprep.subr.mxu0 0.0
    %2549 = vmatpush1.msra.mxu0 0.0
    %2550 = vmatprep.subr.mxu0 0.0
    %2551 = vmatpush1.msra.mxu0 0.0
    %2552 = vmatprep.subr.mxu0 0.0
    %2553 = vmatpush1.msra.mxu0 0.0
    %2554 = vmatprep.subr.mxu0 0.0
    %2555 = vmatpush1.msra.mxu0 0.0
    %2556 = vmatprep.subr.mxu0 0.0
    %2557 = vmatpush1.msra.mxu0 0.0
    %2558 = vmatprep.subr.mxu0 0.0
    %2559 = vmatpush1.msra.mxu0 0.0
    %2560 = vmatprep.subr.mxu0 0.0
    %2561 = vmatpush1.msra.mxu0 0.0
    %2562 = vmatprep.subr.mxu0 0.0
    %2563 = vmatpush1.msra.mxu0 0.0
    %2564 = vmatprep.subr.mxu0 0.0
    %2565 = vmatpush1.msra.mxu0 0.0
    %2566 = vmatprep.subr.mxu0 0.0
    %2567 = vmatpush1.msra.mxu0 0.0
    %2568 = vmatprep.subr.mxu0 0.0
    %2569 = vmatpush1.msra.mxu0 0.0
    %2570 = vmatprep.subr.mxu0 0.0
    %2571 = vmatpush1.msra.mxu0 0.0
    %2572 = vmatprep.subr.mxu0 0.0
    %2573 = vmatpush1.msra.mxu0 0.0
    %2574 = vmatprep.subr.mxu0 0.0
    %2575 = vmatpush1.msra.mxu0 0.0
    %2576 = vmatprep.mubr.f32.mxu0 0.0
    %2577 = vmatmul.mubr.f32.gmra.mrb[0].mxu0 %v2510
    %v2578 = vpop.f32.mrb[0].mxu0
    %v2579 = vadd.f32 0.0, %v2578
    %v2580 = vpop.f32.mrb[0].mxu0
    %2581 = vdwg.mxu0
    %2583 = vrot.lane.b32.xlu0 %v2257, 32
    %v2584 = vpop.permute.xlu0 %2583
    %2587 = vrot.lane.b32.xlu0 %v2418, 64
    %v2588 = vpop.permute.xlu0 %2587
    %2591 = vrot.lane.b32.xlu0 %v2579, 96
    %v2592 = vpop.permute.xlu0 %2591
    %v2594 = vsel %vm510, %v2095, %v2584
    %v2595 = vsel %vm512, %v2594, %v2588
    %v2596 = vsel %vm514, %v2595, %v2592
    %v2597 = vadd.f32 %v2596, %v1863
    %2598 = vmatprep.subr.mxu0 0.0
    %2599 = vmatpush1.msra.mxu0 %v42
    %2600 = vmatprep.subr.mxu0 0.0
    %2601 = vmatpush1.msra.mxu0 %v43
    %2602 = vmatprep.subr.mxu0 0.0
    %2603 = vmatpush1.msra.mxu0 %v44
    %2604 = vmatprep.subr.mxu0 0.0
    %2605 = vmatpush1.msra.mxu0 %v45
    %2606 = vmatprep.subr.mxu0 0.0
    %2607 = vmatpush1.msra.mxu0 %v46
    %2608 = vmatprep.subr.mxu0 0.0
    %2609 = vmatpush1.msra.mxu0 %v47
    %2610 = vmatprep.subr.mxu0 0.0
    %2611 = vmatpush1.msra.mxu0 %v48
    %2612 = vmatprep.subr.mxu0 0.0
    %2613 = vmatpush1.msra.mxu0 %v49
    %2614 = vmatprep.subr.mxu0 0.0
    %2615 = vmatpush1.msra.mxu0 %v50
    %2616 = vmatprep.subr.mxu0 0.0
    %2617 = vmatpush1.msra.mxu0 %v51
    %2618 = vmatprep.subr.mxu0 0.0
    %2619 = vmatpush1.msra.mxu0 %v52
    %2620 = vmatprep.subr.mxu0 0.0
    %2621 = vmatpush1.msra.mxu0 %v53
    %2622 = vmatprep.subr.mxu0 0.0
    %2623 = vmatpush1.msra.mxu0 %v54
    %2624 = vmatprep.subr.mxu0 0.0
    %2625 = vmatpush1.msra.mxu0 %v55
    %2626 = vmatprep.subr.mxu0 0.0
    %2627 = vmatpush1.msra.mxu0 %v56
    %2628 = vmatprep.subr.mxu0 0.0
    %2629 = vmatpush1.msra.mxu0 %v57
    %2630 = vmatprep.subr.mxu0 0.0
    %2631 = vmatpush1.msra.mxu0 0.0
    %2632 = vmatprep.subr.mxu0 0.0
    %2633 = vmatpush1.msra.mxu0 0.0
    %2634 = vmatprep.subr.mxu0 0.0
    %2635 = vmatpush1.msra.mxu0 0.0
    %2636 = vmatprep.subr.mxu0 0.0
    %2637 = vmatpush1.msra.mxu0 0.0
    %2638 = vmatprep.subr.mxu0 0.0
    %2639 = vmatpush1.msra.mxu0 0.0
    %2640 = vmatprep.subr.mxu0 0.0
    %2641 = vmatpush1.msra.mxu0 0.0
    %2642 = vmatprep.subr.mxu0 0.0
    %2643 = vmatpush1.msra.mxu0 0.0
    %2644 = vmatprep.subr.mxu0 0.0
    %2645 = vmatpush1.msra.mxu0 0.0
    %2646 = vmatprep.subr.mxu0 0.0
    %2647 = vmatpush1.msra.mxu0 0.0
    %2648 = vmatprep.subr.mxu0 0.0
    %2649 = vmatpush1.msra.mxu0 0.0
    %2650 = vmatprep.subr.mxu0 0.0
    %2651 = vmatpush1.msra.mxu0 0.0
    %2652 = vmatprep.subr.mxu0 0.0
    %2653 = vmatpush1.msra.mxu0 0.0
    %2654 = vmatprep.subr.mxu0 0.0
    %2655 = vmatpush1.msra.mxu0 0.0
    %2656 = vmatprep.subr.mxu0 0.0
    %2657 = vmatpush1.msra.mxu0 0.0
    %2658 = vmatprep.subr.mxu0 0.0
    %2659 = vmatpush1.msra.mxu0 0.0
    %2660 = vmatprep.subr.mxu0 0.0
    %2661 = vmatpush1.msra.mxu0 0.0
    %2662 = vmatprep.mubr.f32.mxu0 0.0
    %2663 = vmatmul.mubr.f32.gmra.mrb[0].mxu0 %v2597
    %v2664 = vpop.f32.mrb[0].mxu0
    %v2665 = vadd.f32 0.0, %v2664
    %v2666 = vpop.f32.mrb[0].mxu0
    %2667 = vdwg.mxu0
    %v2668 = vsub.f32 %v2597, %v2665
    %v2669 = vmul.f32 %v2668, %v2668
    %2670 = vmatprep.subr.mxu0 0.0
    %2671 = vmatpush1.msra.mxu0 %v42
    %2672 = vmatprep.subr.mxu0 0.0
    %2673 = vmatpush1.msra.mxu0 %v43
    %2674 = vmatprep.subr.mxu0 0.0
    %2675 = vmatpush1.msra.mxu0 %v44
    %2676 = vmatprep.subr.mxu0 0.0
    %2677 = vmatpush1.msra.mxu0 %v45
    %2678 = vmatprep.subr.mxu0 0.0
    %2679 = vmatpush1.msra.mxu0 %v46
    %2680 = vmatprep.subr.mxu0 0.0
    %2681 = vmatpush1.msra.mxu0 %v47
    %2682 = vmatprep.subr.mxu0 0.0
    %2683 = vmatpush1.msra.mxu0 %v48
    %2684 = vmatprep.subr.mxu0 0.0
    %2685 = vmatpush1.msra.mxu0 %v49
    %2686 = vmatprep.subr.mxu0 0.0
    %2687 = vmatpush1.msra.mxu0 %v50
    %2688 = vmatprep.subr.mxu0 0.0
    %2689 = vmatpush1.msra.mxu0 %v51
    %2690 = vmatprep.subr.mxu0 0.0
    %2691 = vmatpush1.msra.mxu0 %v52
    %2692 = vmatprep.subr.mxu0 0.0
    %2693 = vmatpush1.msra.mxu0 %v53
    %2694 = vmatprep.subr.mxu0 0.0
    %2695 = vmatpush1.msra.mxu0 %v54
    %2696 = vmatprep.subr.mxu0 0.0
    %2697 = vmatpush1.msra.mxu0 %v55
    %2698 = vmatprep.subr.mxu0 0.0
    %2699 = vmatpush1.msra.mxu0 %v56
    %2700 = vmatprep.subr.mxu0 0.0
    %2701 = vmatpush1.msra.mxu0 %v57
    %2702 = vmatprep.subr.mxu0 0.0
    %2703 = vmatpush1.msra.mxu0 0.0
    %2704 = vmatprep.subr.mxu0 0.0
    %2705 = vmatpush1.msra.mxu0 0.0
    %2706 = vmatprep.subr.mxu0 0.0
    %2707 = vmatpush1.msra.mxu0 0.0
    %2708 = vmatprep.subr.mxu0 0.0
    %2709 = vmatpush1.msra.mxu0 0.0
    %2710 = vmatprep.subr.mxu0 0.0
    %2711 = vmatpush1.msra.mxu0 0.0
    %2712 = vmatprep.subr.mxu0 0.0
    %2713 = vmatpush1.msra.mxu0 0.0
    %2714 = vmatprep.subr.mxu0 0.0
    %2715 = vmatpush1.msra.mxu0 0.0
    %2716 = vmatprep.subr.mxu0 0.0
    %2717 = vmatpush1.msra.mxu0 0.0
    %2718 = vmatprep.subr.mxu0 0.0
    %2719 = vmatpush1.msra.mxu0 0.0
    %2720 = vmatprep.subr.mxu0 0.0
    %2721 = vmatpush1.msra.mxu0 0.0
    %2722 = vmatprep.subr.mxu0 0.0
    %2723 = vmatpush1.msra.mxu0 0.0
    %2724 = vmatprep.subr.mxu0 0.0
    %2725 = vmatpush1.msra.mxu0 0.0
    %2726 = vmatprep.subr.mxu0 0.0
    %2727 = vmatpush1.msra.mxu0 0.0
    %2728 = vmatprep.subr.mxu0 0.0
    %2729 = vmatpush1.msra.mxu0 0.0
    %2730 = vmatprep.subr.mxu0 0.0
    %2731 = vmatpush1.msra.mxu0 0.0
    %2732 = vmatprep.subr.mxu0 0.0
    %2733 = vmatpush1.msra.mxu0 0.0
    %2734 = vmatprep.mubr.f32.mxu0 0.0
    %2735 = vmatmul.mubr.f32.gmra.mrb[0].mxu0 %v2669
    %v2736 = vpop.f32.mrb[0].mxu0
    %v2737 = vadd.f32 1e-05, %v2736
    %v2738 = vpop.f32.mrb[0].mxu0
    %2739 = vdwg.mxu0
    %v2740 = vrsqrt.pop %v2737
    %v2741 = vmul.f32 %v2737, %v2740
    %vm2742 = vcmp.eq.f32.partialorder %v2737, inf
    %v2743 = vsel %vm2742, %v2737, %v2741
    %vm2744 = vcmp.eq.f32.partialorder %v2737, 0.0
    %v2745 = vand.u32 %v2737, 2147483648
    %v2746 = vsel %vm2744, %v2745, %v2743
    %v2747 = vrcp.pop %v2746
    %v2748 = vmul.f32 %v2668, %v2747
    %v2749 = vlaneseq
    %v2750 = vshrl.u32 %v2749, 7
    %v2751 = vsub.s32 0, %v2750
    %v2752 = vrot.slane %v1850, %v2751
    %v2753 = vmul.f32 %v2748, %v2752
    %v2754 = vlaneseq
    %v2755 = vshrl.u32 %v2754, 7
    %v2756 = vsub.s32 1, %v2755
    %v2757 = vrot.slane %v1850, %v2756
    %v2758 = vadd.f32 %v2753, %v2757
    %s2759 = scalar_lea.vmem [#allocation2], 512
    %v2760 = vld [vmem:[%s2759] sm:$0xff]
    %v2761 = vld [vmem:[%s2759 + $0x8] sm:$0xff]
    %v2762 = vld [vmem:[%s2759 + $0x10] sm:$0xff]
    %v2763 = vld [vmem:[%s2759 + $0x18] sm:$0xff]
    %v2764 = vld [vmem:[%s2759 + $0x20] sm:$0xff]
    %v2765 = vld [vmem:[%s2759 + $0x28] sm:$0xff]
    %v2766 = vld [vmem:[%s2759 + $0x30] sm:$0xff]
    %v2767 = vld [vmem:[%s2759 + $0x38] sm:$0xff]
    %v2768 = vld [vmem:[%s2759 + $0x40] sm:$0xff]
    %v2769 = vld [vmem:[%s2759 + $0x48] sm:$0xff]
    %v2770 = vld [vmem:[%s2759 + $0x50] sm:$0xff]
    %v2771 = vld [vmem:[%s2759 + $0x58] sm:$0xff]
    %v2772 = vld [vmem:[%s2759 + $0x60] sm:$0xff]
    %v2773 = vld [vmem:[%s2759 + $0x68] sm:$0xff]
    %v2774 = vld [vmem:[%s2759 + $0x70] sm:$0xff]
    %v2775 = vld [vmem:[%s2759 + $0x78] sm:$0xff]
    %v2776 = vlaneseq
    %v2777 = vshrl.u32 %v2776, 7
    %v2778 = vsub.s32 4, %v2777
    %v2779 = vrot.slane %v1850, %v2778
    %2780 = vmatprep.subr.mxu0 0.0
    %2781 = vmatpush1.msra.mxu0 %v2760
    %2782 = vmatprep.subr.mxu0 0.0
    %2783 = vmatpush1.msra.mxu0 %v2761
    %2784 = vmatprep.subr.mxu0 0.0
    %2785 = vmatpush1.msra.mxu0 %v2762
    %2786 = vmatprep.subr.mxu0 0.0
    %2787 = vmatpush1.msra.mxu0 %v2763
    %2788 = vmatprep.subr.mxu0 0.0
    %2789 = vmatpush1.msra.mxu0 %v2764
    %2790 = vmatprep.subr.mxu0 0.0
    %2791 = vmatpush1.msra.mxu0 %v2765
    %2792 = vmatprep.subr.mxu0 0.0
    %2793 = vmatpush1.msra.mxu0 %v2766
    %2794 = vmatprep.subr.mxu0 0.0
    %2795 = vmatpush1.msra.mxu0 %v2767
    %2796 = vmatprep.subr.mxu0 0.0
    %2797 = vmatpush1.msra.mxu0 %v2768
    %2798 = vmatprep.subr.mxu0 0.0
    %2799 = vmatpush1.msra.mxu0 %v2769
    %2800 = vmatprep.subr.mxu0 0.0
    %2801 = vmatpush1.msra.mxu0 %v2770
    %2802 = vmatprep.subr.mxu0 0.0
    %2803 = vmatpush1.msra.mxu0 %v2771
    %2804 = vmatprep.subr.mxu0 0.0
    %2805 = vmatpush1.msra.mxu0 %v2772
    %2806 = vmatprep.subr.mxu0 0.0
    %2807 = vmatpush1.msra.mxu0 %v2773
    %2808 = vmatprep.subr.mxu0 0.0
    %2809 = vmatpush1.msra.mxu0 %v2774
    %2810 = vmatprep.subr.mxu0 0.0
    %2811 = vmatpush1.msra.mxu0 %v2775
    %2812 = vmatprep.subr.mxu0 0.0
    %2813 = vmatpush1.msra.mxu0 0.0
    %2814 = vmatprep.subr.mxu0 0.0
    %2815 = vmatpush1.msra.mxu0 0.0
    %2816 = vmatprep.subr.mxu0 0.0
    %2817 = vmatpush1.msra.mxu0 0.0
    %2818 = vmatprep.subr.mxu0 0.0
    %2819 = vmatpush1.msra.mxu0 0.0
    %2820 = vmatprep.subr.mxu0 0.0
    %2821 = vmatpush1.msra.mxu0 0.0
    %2822 = vmatprep.subr.mxu0 0.0
    %2823 = vmatpush1.msra.mxu0 0.0
    %2824 = vmatprep.subr.mxu0 0.0
    %2825 = vmatpush1.msra.mxu0 0.0
    %2826 = vmatprep.subr.mxu0 0.0
    %2827 = vmatpush1.msra.mxu0 0.0
    %2828 = vmatprep.subr.mxu0 0.0
    %2829 = vmatpush1.msra.mxu0 0.0
    %2830 = vmatprep.subr.mxu0 0.0
    %2831 = vmatpush1.msra.mxu0 0.0
    %2832 = vmatprep.subr.mxu0 0.0
    %2833 = vmatpush1.msra.mxu0 0.0
    %2834 = vmatprep.subr.mxu0 0.0
    %2835 = vmatpush1.msra.mxu0 0.0
    %2836 = vmatprep.subr.mxu0 0.0
    %2837 = vmatpush1.msra.mxu0 0.0
    %2838 = vmatprep.subr.mxu0 0.0
    %2839 = vmatpush1.msra.mxu0 0.0
    %2840 = vmatprep.subr.mxu0 0.0
    %2841 = vmatpush1.msra.mxu0 0.0
    %2842 = vmatprep.subr.mxu0 0.0
    %2843 = vmatpush1.msra.mxu0 0.0
    %2844 = vmatprep.mubr.f32.mxu0 0.0
    %2845 = vmatmul.mubr.f32.gmra.mrb[0].mxu0 %v2758
    %v2846 = vpop.f32.mrb[0].mxu0
    %v2847 = vadd.f32 %v2779, %v2846
    %v2848 = vpop.f32.mrb[0].mxu0
    %2849 = vdwg.mxu0
    %v2850 = vmax.f32 %v2847, 0.0
    %s2851 = scalar_lea.vmem [#allocation2], 640
    %v2852 = vld [vmem:[%s2851] sm:$0xff]
    %v2853 = vld [vmem:[%s2851 + $0x8] sm:$0xff]
    %v2854 = vld [vmem:[%s2851 + $0x10] sm:$0xff]
    %v2855 = vld [vmem:[%s2851 + $0x18] sm:$0xff]
    %v2856 = vld [vmem:[%s2851 + $0x20] sm:$0xff]
    %v2857 = vld [vmem:[%s2851 + $0x28] sm:$0xff]
    %v2858 = vld [vmem:[%s2851 + $0x30] sm:$0xff]
    %v2859 = vld [vmem:[%s2851 + $0x38] sm:$0xff]
    %v2860 = vld [vmem:[%s2851 + $0x40] sm:$0xff]
    %v2861 = vld [vmem:[%s2851 + $0x48] sm:$0xff]
    %v2862 = vld [vmem:[%s2851 + $0x50] sm:$0xff]
    %v2863 = vld [vmem:[%s2851 + $0x58] sm:$0xff]
    %v2864 = vld [vmem:[%s2851 + $0x60] sm:$0xff]
    %v2865 = vld [vmem:[%s2851 + $0x68] sm:$0xff]
    %v2866 = vld [vmem:[%s2851 + $0x70] sm:$0xff]
    %v2867 = vld [vmem:[%s2851 + $0x78] sm:$0xff]
    %v2868 = vlaneseq
    %v2869 = vshrl.u32 %v2868, 7
    %v2870 = vsub.s32 5, %v2869
    %v2871 = vrot.slane %v1850, %v2870
    %2872 = vmatprep.subr.mxu0 0.0
    %2873 = vmatpush1.msra.mxu0 %v2852
    %2874 = vmatprep.subr.mxu0 0.0
    %2875 = vmatpush1.msra.mxu0 %v2853
    %2876 = vmatprep.subr.mxu0 0.0
    %2877 = vmatpush1.msra.mxu0 %v2854
    %2878 = vmatprep.subr.mxu0 0.0
    %2879 = vmatpush1.msra.mxu0 %v2855
    %2880 = vmatprep.subr.mxu0 0.0
    %2881 = vmatpush1.msra.mxu0 %v2856
    %2882 = vmatprep.subr.mxu0 0.0
    %2883 = vmatpush1.msra.mxu0 %v2857
    %2884 = vmatprep.subr.mxu0 0.0
    %2885 = vmatpush1.msra.mxu0 %v2858
    %2886 = vmatprep.subr.mxu0 0.0
    %2887 = vmatpush1.msra.mxu0 %v2859
    %2888 = vmatprep.subr.mxu0 0.0
    %2889 = vmatpush1.msra.mxu0 %v2860
    %2890 = vmatprep.subr.mxu0 0.0
    %2891 = vmatpush1.msra.mxu0 %v2861
    %2892 = vmatprep.subr.mxu0 0.0
    %2893 = vmatpush1.msra.mxu0 %v2862
    %2894 = vmatprep.subr.mxu0 0.0
    %2895 = vmatpush1.msra.mxu0 %v2863
    %2896 = vmatprep.subr.mxu0 0.0
    %2897 = vmatpush1.msra.mxu0 %v2864
    %2898 = vmatprep.subr.mxu0 0.0
    %2899 = vmatpush1.msra.mxu0 %v2865
    %2900 = vmatprep.subr.mxu0 0.0
    %2901 = vmatpush1.msra.mxu0 %v2866
    %2902 = vmatprep.subr.mxu0 0.0
    %2903 = vmatpush1.msra.mxu0 %v2867
    %2904 = vmatprep.subr.mxu0 0.0
    %2905 = vmatpush1.msra.mxu0 0.0
    %2906 = vmatprep.subr.mxu0 0.0
    %2907 = vmatpush1.msra.mxu0 0.0
    %2908 = vmatprep.subr.mxu0 0.0
    %2909 = vmatpush1.msra.mxu0 0.0
    %2910 = vmatprep.subr.mxu0 0.0
    %2911 = vmatpush1.msra.mxu0 0.0
    %2912 = vmatprep.subr.mxu0 0.0
    %2913 = vmatpush1.msra.mxu0 0.0
    %2914 = vmatprep.subr.mxu0 0.0
    %2915 = vmatpush1.msra.mxu0 0.0
    %2916 = vmatprep.subr.mxu0 0.0
    %2917 = vmatpush1.msra.mxu0 0.0
    %2918 = vmatprep.subr.mxu0 0.0
    %2919 = vmatpush1.msra.mxu0 0.0
    %2920 = vmatprep.subr.mxu0 0.0
    %2921 = vmatpush1.msra.mxu0 0.0
    %2922 = vmatprep.subr.mxu0 0.0
    %2923 = vmatpush1.msra.mxu0 0.0
    %2924 = vmatprep.subr.mxu0 0.0
    %2925 = vmatpush1.msra.mxu0 0.0
    %2926 = vmatprep.subr.mxu0 0.0
    %2927 = vmatpush1.msra.mxu0 0.0
    %2928 = vmatprep.subr.mxu0 0.0
    %2929 = vmatpush1.msra.mxu0 0.0
    %2930 = vmatprep.subr.mxu0 0.0
    %2931 = vmatpush1.msra.mxu0 0.0
    %2932 = vmatprep.subr.mxu0 0.0
    %2933 = vmatpush1.msra.mxu0 0.0
    %2934 = vmatprep.subr.mxu0 0.0
    %2935 = vmatpush1.msra.mxu0 0.0
    %2936 = vmatprep.mubr.f32.mxu0 0.0
    %2937 = vmatmul.mubr.f32.gmra.mrb[0].mxu0 %v2850
    %v2938 = vpop.f32.mrb[0].mxu0
    %v2939 = vadd.f32 %v2871, %v2938
    %v2940 = vpop.f32.mrb[0].mxu0
    %2941 = vdwg.mxu0
    %v2942 = vadd.f32 %v2939, %v2758
    %2943 = vmatprep.subr.mxu0 0.0
    %2944 = vmatpush1.msra.mxu0 %v42
    %2945 = vmatprep.subr.mxu0 0.0
    %2946 = vmatpush1.msra.mxu0 %v43
    %2947 = vmatprep.subr.mxu0 0.0
    %2948 = vmatpush1.msra.mxu0 %v44
    %2949 = vmatprep.subr.mxu0 0.0
    %2950 = vmatpush1.msra.mxu0 %v45
    %2951 = vmatprep.subr.mxu0 0.0
    %2952 = vmatpush1.msra.mxu0 %v46
    %2953 = vmatprep.subr.mxu0 0.0
    %2954 = vmatpush1.msra.mxu0 %v47
    %2955 = vmatprep.subr.mxu0 0.0
    %2956 = vmatpush1.msra.mxu0 %v48
    %2957 = vmatprep.subr.mxu0 0.0
    %2958 = vmatpush1.msra.mxu0 %v49
    %2959 = vmatprep.subr.mxu0 0.0
    %2960 = vmatpush1.msra.mxu0 %v50
    %2961 = vmatprep.subr.mxu0 0.0
    %2962 = vmatpush1.msra.mxu0 %v51
    %2963 = vmatprep.subr.mxu0 0.0
    %2964 = vmatpush1.msra.mxu0 %v52
    %2965 = vmatprep.subr.mxu0 0.0
    %2966 = vmatpush1.msra.mxu0 %v53
    %2967 = vmatprep.subr.mxu0 0.0
    %2968 = vmatpush1.msra.mxu0 %v54
    %2969 = vmatprep.subr.mxu0 0.0
    %2970 = vmatpush1.msra.mxu0 %v55
    %2971 = vmatprep.subr.mxu0 0.0
    %2972 = vmatpush1.msra.mxu0 %v56
    %2973 = vmatprep.subr.mxu0 0.0
    %2974 = vmatpush1.msra.mxu0 %v57
    %2975 = vmatprep.subr.mxu0 0.0
    %2976 = vmatpush1.msra.mxu0 0.0
    %2977 = vmatprep.subr.mxu0 0.0
    %2978 = vmatpush1.msra.mxu0 0.0
    %2979 = vmatprep.subr.mxu0 0.0
    %2980 = vmatpush1.msra.mxu0 0.0
    %2981 = vmatprep.subr.mxu0 0.0
    %2982 = vmatpush1.msra.mxu0 0.0
    %2983 = vmatprep.subr.mxu0 0.0
    %2984 = vmatpush1.msra.mxu0 0.0
    %2985 = vmatprep.subr.mxu0 0.0
    %2986 = vmatpush1.msra.mxu0 0.0
    %2987 = vmatprep.subr.mxu0 0.0
    %2988 = vmatpush1.msra.mxu0 0.0
    %2989 = vmatprep.subr.mxu0 0.0
    %2990 = vmatpush1.msra.mxu0 0.0
    %2991 = vmatprep.subr.mxu0 0.0
    %2992 = vmatpush1.msra.mxu0 0.0
    %2993 = vmatprep.subr.mxu0 0.0
    %2994 = vmatpush1.msra.mxu0 0.0
    %2995 = vmatprep.subr.mxu0 0.0
    %2996 = vmatpush1.msra.mxu0 0.0
    %2997 = vmatprep.subr.mxu0 0.0
    %2998 = vmatpush1.msra.mxu0 0.0
    %2999 = vmatprep.subr.mxu0 0.0
    %3000 = vmatpush1.msra.mxu0 0.0
    %3001 = vmatprep.subr.mxu0 0.0
    %3002 = vmatpush1.msra.mxu0 0.0
    %3003 = vmatprep.subr.mxu0 0.0
    %3004 = vmatpush1.msra.mxu0 0.0
    %3005 = vmatprep.subr.mxu0 0.0
    %3006 = vmatpush1.msra.mxu0 0.0
    %3007 = vmatprep.mubr.f32.mxu0 0.0
    %3008 = vmatmul.mubr.f32.gmra.mrb[0].mxu0 %v2942
    %v3009 = vpop.f32.mrb[0].mxu0
    %v3010 = vadd.f32 0.0, %v3009
    %v3011 = vpop.f32.mrb[0].mxu0
    %3012 = vdwg.mxu0
    %v3013 = vsub.f32 %v2942, %v3010
    %v3014 = vmul.f32 %v3013, %v3013
    %3015 = vmatprep.subr.mxu0 0.0
    %3016 = vmatpush1.msra.mxu0 %v42
    %3017 = vmatprep.subr.mxu0 0.0
    %3018 = vmatpush1.msra.mxu0 %v43
    %3019 = vmatprep.subr.mxu0 0.0
    %3020 = vmatpush1.msra.mxu0 %v44
    %3021 = vmatprep.subr.mxu0 0.0
    %3022 = vmatpush1.msra.mxu0 %v45
    %3023 = vmatprep.subr.mxu0 0.0
    %3024 = vmatpush1.msra.mxu0 %v46
    %3025 = vmatprep.subr.mxu0 0.0
    %3026 = vmatpush1.msra.mxu0 %v47
    %3027 = vmatprep.subr.mxu0 0.0
    %3028 = vmatpush1.msra.mxu0 %v48
    %3029 = vmatprep.subr.mxu0 0.0
    %3030 = vmatpush1.msra.mxu0 %v49
    %3031 = vmatprep.subr.mxu0 0.0
    %3032 = vmatpush1.msra.mxu0 %v50
    %3033 = vmatprep.subr.mxu0 0.0
    %3034 = vmatpush1.msra.mxu0 %v51
    %3035 = vmatprep.subr.mxu0 0.0
    %3036 = vmatpush1.msra.mxu0 %v52
    %3037 = vmatprep.subr.mxu0 0.0
    %3038 = vmatpush1.msra.mxu0 %v53
    %3039 = vmatprep.subr.mxu0 0.0
    %3040 = vmatpush1.msra.mxu0 %v54
    %3041 = vmatprep.subr.mxu0 0.0
    %3042 = vmatpush1.msra.mxu0 %v55
    %3043 = vmatprep.subr.mxu0 0.0
    %3044 = vmatpush1.msra.mxu0 %v56
    %3045 = vmatprep.subr.mxu0 0.0
    %3046 = vmatpush1.msra.mxu0 %v57
    %3047 = vmatprep.subr.mxu0 0.0
    %3048 = vmatpush1.msra.mxu0 0.0
    %3049 = vmatprep.subr.mxu0 0.0
    %3050 = vmatpush1.msra.mxu0 0.0
    %3051 = vmatprep.subr.mxu0 0.0
    %3052 = vmatpush1.msra.mxu0 0.0
    %3053 = vmatprep.subr.mxu0 0.0
    %3054 = vmatpush1.msra.mxu0 0.0
    %3055 = vmatprep.subr.mxu0 0.0
    %3056 = vmatpush1.msra.mxu0 0.0
    %3057 = vmatprep.subr.mxu0 0.0
    %3058 = vmatpush1.msra.mxu0 0.0
    %3059 = vmatprep.subr.mxu0 0.0
    %3060 = vmatpush1.msra.mxu0 0.0
    %3061 = vmatprep.subr.mxu0 0.0
    %3062 = vmatpush1.msra.mxu0 0.0
    %3063 = vmatprep.subr.mxu0 0.0
    %3064 = vmatpush1.msra.mxu0 0.0
    %3065 = vmatprep.subr.mxu0 0.0
    %3066 = vmatpush1.msra.mxu0 0.0
    %3067 = vmatprep.subr.mxu0 0.0
    %3068 = vmatpush1.msra.mxu0 0.0
    %3069 = vmatprep.subr.mxu0 0.0
    %3070 = vmatpush1.msra.mxu0 0.0
    %3071 = vmatprep.subr.mxu0 0.0
    %3072 = vmatpush1.msra.mxu0 0.0
    %3073 = vmatprep.subr.mxu0 0.0
    %3074 = vmatpush1.msra.mxu0 0.0
    %3075 = vmatprep.subr.mxu0 0.0
    %3076 = vmatpush1.msra.mxu0 0.0
    %3077 = vmatprep.subr.mxu0 0.0
    %3078 = vmatpush1.msra.mxu0 0.0
    %3079 = vmatprep.mubr.f32.mxu0 0.0
    %3080 = vmatmul.mubr.f32.gmra.mrb[0].mxu0 %v3014
    %v3081 = vpop.f32.mrb[0].mxu0
    %v3082 = vadd.f32 1e-05, %v3081
    %v3083 = vpop.f32.mrb[0].mxu0
    %3084 = vdwg.mxu0
    %v3085 = vrsqrt.pop %v3082
    %v3086 = vmul.f32 %v3082, %v3085
    %vm3087 = vcmp.eq.f32.partialorder %v3082, inf
    %v3088 = vsel %vm3087, %v3082, %v3086
    %vm3089 = vcmp.eq.f32.partialorder %v3082, 0.0
    %v3090 = vand.u32 %v3082, 2147483648
    %v3091 = vsel %vm3089, %v3090, %v3088
    %v3092 = vrcp.pop %v3091
    %v3093 = vmul.f32 %v3013, %v3092
    %v3094 = vlaneseq
    %v3095 = vshrl.u32 %v3094, 7
    %v3096 = vsub.s32 2, %v3095
    %v3097 = vrot.slane %v1850, %v3096
    %v3098 = vmul.f32 %v3093, %v3097
    %v3099 = vlaneseq
    %v3100 = vshrl.u32 %v3099, 7
    %v3101 = vsub.s32 3, %v3100
    %v3102 = vrot.slane %v1850, %v3101
    %v3103 = vadd.f32 %v3098, %v3102
    %v3104 = vadd.f32 %v3103, %v1863
    %s3105 = scalar_lea.vmem [#allocation2], 768
    %v3106 = vld [vmem:[%s3105] sm:$0xff]
    %v3107 = vld [vmem:[%s3105 + $0x8] sm:$0xff]
    %v3108 = vld [vmem:[%s3105 + $0x10] sm:$0xff]
    %v3109 = vld [vmem:[%s3105 + $0x18] sm:$0xff]
    %v3110 = vld [vmem:[%s3105 + $0x20] sm:$0xff]
    %v3111 = vld [vmem:[%s3105 + $0x28] sm:$0xff]
    %v3112 = vld [vmem:[%s3105 + $0x30] sm:$0xff]
    %v3113 = vld [vmem:[%s3105 + $0x38] sm:$0xff]
    %v3114 = vld [vmem:[%s3105 + $0x40] sm:$0xff]
    %v3115 = vld [vmem:[%s3105 + $0x48] sm:$0xff]
    %v3116 = vld [vmem:[%s3105 + $0x50] sm:$0xff]
    %v3117 = vld [vmem:[%s3105 + $0x58] sm:$0xff]
    %v3118 = vld [vmem:[%s3105 + $0x60] sm:$0xff]
    %v3119 = vld [vmem:[%s3105 + $0x68] sm:$0xff]
    %v3120 = vld [vmem:[%s3105 + $0x70] sm:$0xff]
    %v3121 = vld [vmem:[%s3105 + $0x78] sm:$0xff]
    %3122 = vmatprep.subr.mxu0 0.0
    %3123 = vmatpush1.msra.mxu0 %v3106
    %3124 = vmatprep.subr.mxu0 0.0
    %3125 = vmatpush1.msra.mxu0 %v3107
    %3126 = vmatprep.subr.mxu0 0.0
    %3127 = vmatpush1.msra.mxu0 %v3108
    %3128 = vmatprep.subr.mxu0 0.0
    %3129 = vmatpush1.msra.mxu0 %v3109
    %3130 = vmatprep.subr.mxu0 0.0
    %3131 = vmatpush1.msra.mxu0 %v3110
    %3132 = vmatprep.subr.mxu0 0.0
    %3133 = vmatpush1.msra.mxu0 %v3111
    %3134 = vmatprep.subr.mxu0 0.0
    %3135 = vmatpush1.msra.mxu0 %v3112
    %3136 = vmatprep.subr.mxu0 0.0
    %3137 = vmatpush1.msra.mxu0 %v3113
    %3138 = vmatprep.subr.mxu0 0.0
    %3139 = vmatpush1.msra.mxu0 %v3114
    %3140 = vmatprep.subr.mxu0 0.0
    %3141 = vmatpush1.msra.mxu0 %v3115
    %3142 = vmatprep.subr.mxu0 0.0
    %3143 = vmatpush1.msra.mxu0 %v3116
    %3144 = vmatprep.subr.mxu0 0.0
    %3145 = vmatpush1.msra.mxu0 %v3117
    %3146 = vmatprep.subr.mxu0 0.0
    %3147 = vmatpush1.msra.mxu0 %v3118
    %3148 = vmatprep.subr.mxu0 0.0
    %3149 = vmatpush1.msra.mxu0 %v3119
    %3150 = vmatprep.subr.mxu0 0.0
    %3151 = vmatpush1.msra.mxu0 %v3120
    %3152 = vmatprep.subr.mxu0 0.0
    %3153 = vmatpush1.msra.mxu0 %v3121
    %3154 = vmatprep.subr.mxu0 0.0
    %3155 = vmatpush1.msra.mxu0 0.0
    %3156 = vmatprep.subr.mxu0 0.0
    %3157 = vmatpush1.msra.mxu0 0.0
    %3158 = vmatprep.subr.mxu0 0.0
    %3159 = vmatpush1.msra.mxu0 0.0
    %3160 = vmatprep.subr.mxu0 0.0
    %3161 = vmatpush1.msra.mxu0 0.0
    %3162 = vmatprep.subr.mxu0 0.0
    %3163 = vmatpush1.msra.mxu0 0.0
    %3164 = vmatprep.subr.mxu0 0.0
    %3165 = vmatpush1.msra.mxu0 0.0
    %3166 = vmatprep.subr.mxu0 0.0
    %3167 = vmatpush1.msra.mxu0 0.0
    %3168 = vmatprep.subr.mxu0 0.0
    %3169 = vmatpush1.msra.mxu0 0.0
    %3170 = vmatprep.subr.mxu0 0.0
    %3171 = vmatpush1.msra.mxu0 0.0
    %3172 = vmatprep.subr.mxu0 0.0
    %3173 = vmatpush1.msra.mxu0 0.0
    %3174 = vmatprep.subr.mxu0 0.0
    %3175 = vmatpush1.msra.mxu0 0.0
    %3176 = vmatprep.subr.mxu0 0.0
    %3177 = vmatpush1.msra.mxu0 0.0
    %3178 = vmatprep.subr.mxu0 0.0
    %3179 = vmatpush1.msra.mxu0 0.0
    %3180 = vmatprep.subr.mxu0 0.0
    %3181 = vmatpush1.msra.mxu0 0.0
    %3182 = vmatprep.subr.mxu0 0.0
    %3183 = vmatpush1.msra.mxu0 0.0
    %3184 = vmatprep.subr.mxu0 0.0
    %3185 = vmatpush1.msra.mxu0 0.0
    %3186 = vmatprep.mubr.f32.mxu0 0.0
    %3187 = vmatmul.mubr.f32.gmra.mrb[0].mxu0 %v3104
    %v3188 = vpop.f32.mrb[0].mxu0
    %v3189 = vadd.f32 0.0, %v3188
    %v3190 = vpop.f32.mrb[0].mxu0
    %3191 = vdwg.mxu0
    %v3192 = vlaneseq
    %v3193 = vshrl.u32 %v3192, 7
    %v3194 = vsub.s32 6, %v3193
    %v3195 = vrot.slane %v1850, %v3194
    %v3196 = vadd.f32 %v3189, %v3195
    %s3197 = scalar_lea.vmem %s2, 64
    %v3198 = vld [vmem:[%s3197] sm:$0xff]
    %v3199 = vld [vmem:[%s3197 + $0x8] sm:$0xff]
    %v3200 = vld [vmem:[%s3197 + $0x10] sm:$0xff]
    %v3201 = vld [vmem:[%s3197 + $0x18] sm:$0xff]
    %v3203 = vsel %vm510, %v3196, 0
    %3205 = vmatprep.subr.mxu0 0.0
    %3206 = vmatpush1.msra.mxu0 %v3198
    %3207 = vmatprep.subr.mxu0 0.0
    %3208 = vmatpush1.msra.mxu0 %v3199
    %3209 = vmatprep.subr.mxu0 0.0
    %3210 = vmatpush1.msra.mxu0 %v3200
    %3211 = vmatprep.subr.mxu0 0.0
    %3212 = vmatpush1.msra.mxu0 %v3201
    %3213 = vmatprep.subr.mxu0 0.0
    %3214 = vmatpush1.msra.mxu0 0.0
    %3215 = vmatprep.subr.mxu0 0.0
    %3216 = vmatpush1.msra.mxu0 0.0
    %3217 = vmatprep.subr.mxu0 0.0
    %3218 = vmatpush1.msra.mxu0 0.0
    %3219 = vmatprep.subr.mxu0 0.0
    %3220 = vmatpush1.msra.mxu0 0.0
    %3221 = vmatprep.subr.mxu0 0.0
    %3222 = vmatpush1.msra.mxu0 0.0
    %3223 = vmatprep.subr.mxu0 0.0
    %3224 = vmatpush1.msra.mxu0 0.0
    %3225 = vmatprep.subr.mxu0 0.0
    %3226 = vmatpush1.msra.mxu0 0.0
    %3227 = vmatprep.subr.mxu0 0.0
    %3228 = vmatpush1.msra.mxu0 0.0
    %3229 = vmatprep.subr.mxu0 0.0
    %3230 = vmatpush1.msra.mxu0 0.0
    %3231 = vmatprep.subr.mxu0 0.0
    %3232 = vmatpush1.msra.mxu0 0.0
    %3233 = vmatprep.subr.mxu0 0.0
    %3234 = vmatpush1.msra.mxu0 0.0
    %3235 = vmatprep.subr.mxu0 0.0
    %3236 = vmatpush1.msra.mxu0 0.0
    %3237 = vmatprep.subr.mxu0 0.0
    %3238 = vmatpush1.msra.mxu0 0.0
    %3239 = vmatprep.subr.mxu0 0.0
    %3240 = vmatpush1.msra.mxu0 0.0
    %3241 = vmatprep.subr.mxu0 0.0
    %3242 = vmatpush1.msra.mxu0 0.0
    %3243 = vmatprep.subr.mxu0 0.0
    %3244 = vmatpush1.msra.mxu0 0.0
    %3245 = vmatprep.subr.mxu0 0.0
    %3246 = vmatpush1.msra.mxu0 0.0
    %3247 = vmatprep.subr.mxu0 0.0
    %3248 = vmatpush1.msra.mxu0 0.0
    %3249 = vmatprep.subr.mxu0 0.0
    %3250 = vmatpush1.msra.mxu0 0.0
    %3251 = vmatprep.subr.mxu0 0.0
    %3252 = vmatpush1.msra.mxu0 0.0
    %3253 = vmatprep.subr.mxu0 0.0
    %3254 = vmatpush1.msra.mxu0 0.0
    %3255 = vmatprep.subr.mxu0 0.0
    %3256 = vmatpush1.msra.mxu0 0.0
    %3257 = vmatprep.subr.mxu0 0.0
    %3258 = vmatpush1.msra.mxu0 0.0
    %3259 = vmatprep.subr.mxu0 0.0
    %3260 = vmatpush1.msra.mxu0 0.0
    %3261 = vmatprep.subr.mxu0 0.0
    %3262 = vmatpush1.msra.mxu0 0.0
    %3263 = vmatprep.subr.mxu0 0.0
    %3264 = vmatpush1.msra.mxu0 0.0
    %3265 = vmatprep.subr.mxu0 0.0
    %3266 = vmatpush1.msra.mxu0 0.0
    %3267 = vmatprep.subr.mxu0 0.0
    %3268 = vmatpush1.msra.mxu0 0.0
    %3269 = vmatprep.mubr.f32.mxu0 0.0
    %3270 = vmatmul.mubr.f32.gmra.mrb[0].mxu0 %v3203
    %v3271 = vpop.f32.mrb[0].mxu0
    %v3272 = vadd.f32 0.0, %v3271
    %v3273 = vpop.f32.mrb[0].mxu0
    %3274 = vdwg.mxu0
    %3275 = vst [vmem:[#allocation5] sm:$0xff] %v3272
    // Predicated region
    $region34: #{forward_pallas.1} parent=1 // pred_check
      _
    $region35: #{forward_pallas.1} parent=1 // pred_check_branch
      %3277 = sbr.rel (0) target = $region37
    $region36: #{forward_pallas.1} parent=1 // pred_region
      %s3279 = ssub.s32 128, 128
      %3280 = vsyncadd [#allocation4], %s3279
      %s3282 = sshll.u32 [#allocation5], 4
      %s3283 = int_to_ptr.vmem [resolvable:$true] %s3282
      %3285 = dma.vmem_to_hbm [thread:$0]  %s3283, 128, %s7, [#allocation4]
    $region37: #{forward_pallas.1} parent=1 // pred_fallthru
      _
    // Predicated region
    $region38: #{forward_pallas.1} parent=1 // pred_check
      _
    $region39: #{forward_pallas.1} parent=1 // pred_check_branch
      %3287 = sbr.rel (0) target = $region41
    $region40: #{forward_pallas.1} parent=1 // pred_region
      %3288 = dma.done [#allocation4], 128
    $region41: #{forward_pallas.1} parent=1 // pred_fallthru
      _
    %3289 = vsyncpa [#allocation3], 1
    %3290 = vsyncpa [#allocation4], 1

</llo_original>
